<compile_context>
chip_gen: v7x
topology: tpu7x:2x2x1
jax: 0.10.0
libtpu: 0.0.40
codegen_flags: <defaults>
</compile_context>

<pallas_src>
import jax
import jax.numpy as jnp
import numpy as np
from jax import lax
from jax.experimental import pallas as pl
from jax.experimental.pallas import tpu as pltpu

_LANE = 128


def _round_up(n, m):
    return ((n + m - 1) // m) * m


def _pick_batch_tile(batch, seq_len):
    """Batch tile: multiple of 8, <=128, and L*TB bounded (~4096 rows) so all
    per-tile activations plus double-buffered inputs stay inside scoped VMEM."""
    tb = min(128, _round_up(batch, 8))
    cap = max(8, (4096 // max(seq_len, 1)) // 8 * 8)
    return max(8, min(tb, cap))


# ----------------------------- kernel helpers -----------------------------

def _conv3_relu(x, w_ref, b_ref, tb):
    """x: (L_cur*TB, Cin) length-major (row = l*TB + s); w_ref: (3, Cin, Cout);
    b_ref: (1, Cout).  Returns relu(Conv1d(k=3, stride=1, pad=1)) in the same layout."""
    m, cin = x.shape
    zpad = jnp.zeros((tb, cin), jnp.float32)
    # Shift by one length-position == shift by TB rows; the zero block gives the
    # conv's zero padding at l == 0 / l == L-1 for free (all slices 8-row aligned).
    x_prev = jnp.concatenate([zpad, x[:m - tb, :]], axis=0)   # x[l-1]
    x_next = jnp.concatenate([x[tb:, :], zpad], axis=0)       # x[l+1]

    def tap(xs, wk):
        if cin == 1:                                          # (M,1)*(1,Cout) broadcast on VPU
            return xs * wk
        return jnp.dot(xs, wk, preferred_element_type=jnp.float32)

    y = (tap(x_prev, w_ref[0]) + tap(x, w_ref[1]) + tap(x_next, w_ref[2])
         + b_ref[...])
    return jnp.maximum(y, 0.0)


def _maxpool_rows(y, tb, l_out, out_ref):
    """MaxPool1d(2,2): output block l = max(input blocks 2l, 2l+1); row-block store."""
    for l in range(l_out):
        a = y[(2 * l) * tb:(2 * l + 1) * tb, :]
        b = y[(2 * l + 1) * tb:(2 * l + 2) * tb, :]
        out_ref[l * tb:(l + 1) * tb, :] = jnp.maximum(a, b)


def _maxpool_to_features(y, tb, l_out, out_ref):
    """Same pooling, but block l lands at lanes [l*C, (l+1)*C) of out_ref, producing
    the flattened (TB, fd*C) dense1 input directly (no in-kernel reshape)."""
    c = y.shape[1]
    for l in range(l_out):
        a = y[(2 * l) * tb:(2 * l + 1) * tb, :]
        b = y[(2 * l + 1) * tb:(2 * l + 2) * tb, :]
        out_ref[:, l * c:(l + 1) * c] = jnp.maximum(a, b)


def _classifier_kernel(x_ref, w1_ref, b1_ref, w2_ref, b2_ref, w3_ref, b3_ref,
                       wd1_ref, bd1_ref, wd2_ref, bd2_ref, out_ref,
                       p1_ref, p2_ref, feat_ref):
    tb = out_ref.shape[0]
    x = x_ref[0]                                         # (L*TB, 1), length-major
    L = x.shape[0] // tb

    y = _conv3_relu(x, w1_ref, b1_ref, tb)               # (L*TB, 16)
    _maxpool_rows(y, tb, L // 2, p1_ref)                 # (L/2*TB, 16)

    y = _conv3_relu(p1_ref[...], w2_ref, b2_ref, tb)     # (L/2*TB, 32)
    _maxpool_rows(y, tb, L // 4, p2_ref)                 # (L/4*TB, 32)

    y = _conv3_relu(p2_ref[...], w3_ref, b3_ref, tb)     # (L/4*TB, 64)
    _maxpool_to_features(y, tb, L // 8, feat_ref)        # (TB, (L/8)*64)

    # dense1: one (TB, fd*64) x (fd*64, 128) MXU matmul; wd1 is pre-permuted so
    # the (l, c) lane order of feat_ref matches PyTorch's channel-major flatten.
    d1 = (jnp.dot(feat_ref[...], wd1_ref[...], preferred_element_type=jnp.float32)
          + bd1_ref[...])
    d1 = jnp.maximum(d1, 0.0)
    # TODO(synk): Dropout(p=0.5) is eval-mode identity (no stochastic masking).
    out = (jnp.dot(d1, wd2_ref[...], preferred_element_type=jnp.float32)
           + bd2_ref[...])
    out_ref[...] = out                                   # (TB, 128) lane-dense store


# ------------------------------- host wrapper ------------------------------

def sound_classifier_forward(x_ncl, kernel_params):
    """x_ncl: (B, 1, L) float32 (PyTorch NCW).  Returns (B, output_size) float32."""
    B, cin, L = x_ncl.shape
    if cin != 1:
        raise ValueError("expected a single input channel")
    if L % 8 != 0:
        raise ValueError("sequence_length must be divisible by 8 (three stride-2 pools)")

    out_size = int(kernel_params["out_size"])
    n_pad = kernel_params["wd2"].shape[1]                # lane-padded head width (128)
    fd = L // 8

    TB = _pick_batch_tile(B, L)
    B_pad = _round_up(B, TB)
    G = B_pad // TB

    # Host-side layout prep: (B,1,L) -> (G, L*TB, 1) with per-tile row = l*TB + s.
    x = x_ncl[:, 0, :]
    x = jnp.pad(x, ((0, B_pad - B), (0, 0)))
    x = x.reshape(G, TB, L).transpose(0, 2, 1).reshape(G, L * TB, 1)

    weight_names = ("w1", "b1", "w2", "b2", "w3", "b3", "wd1", "bd1", "wd2", "bd2")
    weights = [kernel_params[k] for k in weight_names]

    def _const_spec(arr):
        zeros = (0,) * arr.ndim
        return pl.BlockSpec(arr.shape, lambda g, _z=zeros: _z)   # resident across steps

    in_specs = ([pl.BlockSpec((1, L * TB, 1), lambda g: (g, 0, 0))]
                + [_const_spec(w) for w in weights])
    out_spec = pl.BlockSpec((TB, n_pad), lambda g: (g, 0))

    out = pl.pallas_call(
        _classifier_kernel,
        out_shape=jax.ShapeDtypeStruct((B_pad, n_pad), jnp.float32),
        grid=(G,),
        in_specs=in_specs,
        out_specs=out_spec,
        scratch_shapes=[
            pltpu.VMEM(((L // 2) * TB, 16), jnp.float32),   # pooled conv1
            pltpu.VMEM(((L // 4) * TB, 32), jnp.float32),   # pooled conv2
            pltpu.VMEM((TB, fd * 64), jnp.float32),         # flattened dense1 input
        ],
        compiler_params=pltpu.CompilerParams(dimension_semantics=("parallel",)),
    )(x, *weights)
    return out[:B, :out_size]


# --------------------------- params & reference ----------------------------

def init_params(key, output_size, sequence_length):
    """Deterministic synthetic parameters in both PyTorch and kernel layouts."""
    fd = sequence_length // 8
    n_pad = _round_up(max(output_size, 1), _LANE)
    ks = jax.random.split(key, 10)

    def rnd(k, shape, scale=0.1):
        return (scale * jax.random.normal(k, shape)).astype(jnp.float32)

    # PyTorch-convention shapes.
    w1_t = rnd(ks[0], (16, 1, 3));          b1 = rnd(ks[1], (16,))
    w2_t = rnd(ks[2], (32, 16, 3));         b2 = rnd(ks[3], (32,))
    w3_t = rnd(ks[4], (64, 32, 3));         b3 = rnd(ks[5], (64,))
    wd1_t = rnd(ks[6], (128, 64 * fd));     bd1 = rnd(ks[7], (128,))
    wd2_t = rnd(ks[8], (output_size, 128)); bd2 = rnd(ks[9], (output_size,))

    torch_params = dict(w1_t=w1_t, b1=b1, w2_t=w2_t, b2=b2, w3_t=w3_t, b3=b3,
                        wd1_t=wd1_t, bd1=bd1, wd2_t=wd2_t, bd2=bd2)

    # torch flatten index = c * fd + l  ->  kernel lane index = l * 64 + c.
    wd1_k = jnp.transpose(wd1_t.reshape(128, 64, fd), (2, 1, 0)).reshape(fd * 64, 128)
    wd2_k = jnp.zeros((128, n_pad), jnp.float32).at[:, :output_size].set(wd2_t.T)
    bd2_k = jnp.zeros((1, n_pad), jnp.float32).at[0, :output_size].set(bd2)

    kernel_params = dict(
        w1=jnp.transpose(w1_t, (2, 1, 0)),                 # (3, 1, 16)
        b1=b1.reshape(1, -1),
        w2=jnp.transpose(w2_t, (2, 1, 0)),                 # (3, 16, 32)
        b2=b2.reshape(1, -1),
        w3=jnp.transpose(w3_t, (2, 1, 0)),                 # (3, 32, 64)
        b3=b3.reshape(1, -1),
        wd1=wd1_k,                                         # (fd*64, 128)
        bd1=bd1.reshape(1, -1),
        wd2=wd2_k,                                         # (128, 128) lane-padded
        bd2=bd2_k,                                         # (1, 128) lane-padded
        out_size=output_size,
    )
    return torch_params, kernel_params


def torch_reference(x_ncl, p):
    """Pure-JAX re-implementation of the PyTorch forward (eval mode), NCW layout."""
    def conv1d(x, w, b):  # x: (B, Cin, L), w: (Cout, Cin, 3)
        y = lax.conv_general_dilated(x, w, window_strides=(1,), padding=((1, 1),),
                                     dimension_numbers=("NCH", "OIH", "NCH"))
        return y + b[None, :, None]

    def pool(x):  # MaxPool1d(2, 2)
        B, C, L = x.shape
        return x.reshape(B, C, L // 2, 2).max(axis=-1)

    h = pool(jax.nn.relu(conv1d(x_ncl, p["w1_t"], p["b1"])))
    h = pool(jax.nn.relu(conv1d(h, p["w2_t"], p["b2"])))
    h = pool(jax.nn.relu(conv1d(h, p["w3_t"], p["b3"])))
    h = h.reshape(h.shape[0], -1)                          # channel-major flatten
    h = jax.nn.relu(h @ p["wd1_t"].T + p["bd1"])
    return h @ p["wd2_t"].T + p["bd2"]


if __name__ == "__main__":
    B, L, output_size = 2, 64, 10
    key = jax.random.PRNGKey(0)
    kx, kp = jax.random.split(key)

    x_ncl = jax.random.normal(kx, (B, 1, L), dtype=jnp.float32)   # PyTorch NCW input
    torch_p, kern_p = init_params(kp, output_size, L)

    out = jax.block_until_ready(sound_classifier_forward(x_ncl, kern_p))
    ref = jax.block_until_ready(torch_reference(x_ncl, torch_p))

    assert out.shape == (B, output_size)
    np.testing.assert_allclose(np.asarray(out), np.asarray(ref), rtol=1e-3, atol=1e-3)
    print("KERNEL_OK")
</pallas_src>

<mosaic_0001>
module attributes {stable_mosaic.version = 11 : i64} {
  func.func @_classifier_kernel(%arg0: i32, %arg1: memref<1x512x1xf32, #tpu.memory_space<vmem>>, %arg2: memref<3x1x16xf32, #tpu.memory_space<vmem>>, %arg3: memref<1x16xf32, #tpu.memory_space<vmem>>, %arg4: memref<3x16x32xf32, #tpu.memory_space<vmem>>, %arg5: memref<1x32xf32, #tpu.memory_space<vmem>>, %arg6: memref<3x32x64xf32, #tpu.memory_space<vmem>>, %arg7: memref<1x64xf32, #tpu.memory_space<vmem>>, %arg8: memref<512x128xf32, #tpu.memory_space<vmem>>, %arg9: memref<1x128xf32, #tpu.memory_space<vmem>>, %arg10: memref<128x128xf32, #tpu.memory_space<vmem>>, %arg11: memref<1x128xf32, #tpu.memory_space<vmem>>, %arg12: memref<8x128xf32, #tpu.memory_space<vmem>>, %arg13: memref<256x16xf32, #tpu.memory_space<vmem>>, %arg14: memref<128x32xf32, #tpu.memory_space<vmem>>, %arg15: memref<8x512xf32, #tpu.memory_space<vmem>>) attributes {dimension_semantics = [#tpu.dimension_semantics<parallel>], iteration_bounds = array<i64: 1>, scalar_prefetch = 0 : i64, scratch_operands = 3 : i64, tpu.core_type = #tpu.core_type<tc>, window_params = [{transform_indices = @transform_0, window_bounds = array<i64: 1, 512, 1>}, {pipeline_mode = #tpu.pipeline_mode<synchronous>, transform_indices = @transform_1, window_bounds = array<i64: 3, 1, 16>}, {pipeline_mode = #tpu.pipeline_mode<synchronous>, transform_indices = @transform_2, window_bounds = array<i64: 1, 16>}, {pipeline_mode = #tpu.pipeline_mode<synchronous>, transform_indices = @transform_3, window_bounds = array<i64: 3, 16, 32>}, {pipeline_mode = #tpu.pipeline_mode<synchronous>, transform_indices = @transform_4, window_bounds = array<i64: 1, 32>}, {pipeline_mode = #tpu.pipeline_mode<synchronous>, transform_indices = @transform_5, window_bounds = array<i64: 3, 32, 64>}, {pipeline_mode = #tpu.pipeline_mode<synchronous>, transform_indices = @transform_6, window_bounds = array<i64: 1, 64>}, {pipeline_mode = #tpu.pipeline_mode<synchronous>, transform_indices = @transform_7, window_bounds = array<i64: 512, 128>}, {pipeline_mode = #tpu.pipeline_mode<synchronous>, transform_indices = @transform_8, window_bounds = array<i64: 1, 128>}, {pipeline_mode = #tpu.pipeline_mode<synchronous>, transform_indices = @transform_9, window_bounds = array<i64: 128, 128>}, {pipeline_mode = #tpu.pipeline_mode<synchronous>, transform_indices = @transform_10, window_bounds = array<i64: 1, 128>}, {transform_indices = @transform_11, window_bounds = array<i64: 8, 128>}]} {
    %c0 = arith.constant 0 : index
    %c0_0 = arith.constant 0 : index
    %c0_1 = arith.constant 0 : index
    %0 = vector.load %arg1[%c0, %c0_0, %c0_1] : memref<1x512x1xf32, #tpu.memory_space<vmem>>, vector<1x512x1xf32>
    %1 = vector.shape_cast %0 : vector<1x512x1xf32> to vector<512x1xf32>
    %cst = arith.constant 0.000000e+00 : f32
    %2 = vector.broadcast %cst : f32 to vector<8x1xf32>
    %3 = vector.extract_strided_slice %1 {offsets = [0, 0], sizes = [504, 1], strides = [1, 1]} : vector<512x1xf32> to vector<504x1xf32>
    %4 = tpu.concatenate %2, %3 in 0 : vector<8x1xf32>, vector<504x1xf32> -> vector<512x1xf32>
    %5 = vector.extract_strided_slice %1 {offsets = [8, 0], sizes = [504, 1], strides = [1, 1]} : vector<512x1xf32> to vector<504x1xf32>
    %6 = tpu.concatenate %5, %2 in 0 : vector<504x1xf32>, vector<8x1xf32> -> vector<512x1xf32>
    %c0_2 = arith.constant 0 : index
    %c0_3 = arith.constant 0 : index
    %c0_4 = arith.constant 0 : index
    %7 = vector.load %arg2[%c0_2, %c0_3, %c0_4] : memref<3x1x16xf32, #tpu.memory_space<vmem>>, vector<1x1x16xf32>
    %8 = vector.shape_cast %7 : vector<1x1x16xf32> to vector<1x16xf32>
    %9 = vector.broadcast %4 : vector<512x1xf32> to vector<512x16xf32>
    %10 = vector.broadcast %8 : vector<1x16xf32> to vector<512x16xf32>
    %11 = arith.mulf %9, %10 : vector<512x16xf32>
    %c1 = arith.constant 1 : index
    %c0_5 = arith.constant 0 : index
    %c0_6 = arith.constant 0 : index
    %12 = vector.load %arg2[%c1, %c0_5, %c0_6] : memref<3x1x16xf32, #tpu.memory_space<vmem>>, vector<1x1x16xf32>
    %13 = vector.shape_cast %12 : vector<1x1x16xf32> to vector<1x16xf32>
    %14 = vector.broadcast %1 : vector<512x1xf32> to vector<512x16xf32>
    %15 = vector.broadcast %13 : vector<1x16xf32> to vector<512x16xf32>
    %16 = arith.mulf %14, %15 : vector<512x16xf32>
    %17 = arith.addf %11, %16 : vector<512x16xf32>
    %c2 = arith.constant 2 : index
    %c0_7 = arith.constant 0 : index
    %c0_8 = arith.constant 0 : index
    %18 = vector.load %arg2[%c2, %c0_7, %c0_8] : memref<3x1x16xf32, #tpu.memory_space<vmem>>, vector<1x1x16xf32>
    %19 = vector.shape_cast %18 : vector<1x1x16xf32> to vector<1x16xf32>
    %20 = vector.broadcast %6 : vector<512x1xf32> to vector<512x16xf32>
    %21 = vector.broadcast %19 : vector<1x16xf32> to vector<512x16xf32>
    %22 = arith.mulf %20, %21 : vector<512x16xf32>
    %23 = arith.addf %17, %22 : vector<512x16xf32>
    %c0_9 = arith.constant 0 : index
    %c0_10 = arith.constant 0 : index
    %24 = vector.load %arg3[%c0_9, %c0_10] : memref<1x16xf32, #tpu.memory_space<vmem>>, vector<1x16xf32>
    %25 = vector.broadcast %24 : vector<1x16xf32> to vector<512x16xf32>
    %26 = arith.addf %23, %25 : vector<512x16xf32>
    %cst_11 = arith.constant 0.000000e+00 : f32
    %27 = vector.broadcast %cst_11 : f32 to vector<512x16xf32>
    %28 = arith.maximumf %26, %27 : vector<512x16xf32>
    %29 = vector.extract_strided_slice %28 {offsets = [0, 0], sizes = [8, 16], strides = [1, 1]} : vector<512x16xf32> to vector<8x16xf32>
    %30 = vector.extract_strided_slice %28 {offsets = [8, 0], sizes = [8, 16], strides = [1, 1]} : vector<512x16xf32> to vector<8x16xf32>
    %31 = arith.maximumf %29, %30 : vector<8x16xf32>
    %c0_12 = arith.constant 0 : index
    %c0_13 = arith.constant 0 : index
    %32 = vector.load %arg13[%c0_12, %c0_13] : memref<256x16xf32, #tpu.memory_space<vmem>>, vector<8x16xf32>
    tpu.vector_store %arg13[%c0_12, %c0_13], %31 {strides = array<i32>} : memref<256x16xf32, #tpu.memory_space<vmem>>, vector<8x16xf32>,
    %33 = vector.extract_strided_slice %28 {offsets = [16, 0], sizes = [8, 16], strides = [1, 1]} : vector<512x16xf32> to vector<8x16xf32>
    %34 = vector.extract_strided_slice %28 {offsets = [24, 0], sizes = [8, 16], strides = [1, 1]} : vector<512x16xf32> to vector<8x16xf32>
    %35 = arith.maximumf %33, %34 : vector<8x16xf32>
    %c8 = arith.constant 8 : index
    %c0_14 = arith.constant 0 : index
    %36 = vector.load %arg13[%c8, %c0_14] : memref<256x16xf32, #tpu.memory_space<vmem>>, vector<8x16xf32>
    tpu.vector_store %arg13[%c8, %c0_14], %35 {strides = array<i32>} : memref<256x16xf32, #tpu.memory_space<vmem>>, vector<8x16xf32>,
    %37 = vector.extract_strided_slice %28 {offsets = [32, 0], sizes = [8, 16], strides = [1, 1]} : vector<512x16xf32> to vector<8x16xf32>
    %38 = vector.extract_strided_slice %28 {offsets = [40, 0], sizes = [8, 16], strides = [1, 1]} : vector<512x16xf32> to vector<8x16xf32>
    %39 = arith.maximumf %37, %38 : vector<8x16xf32>
    %c16 = arith.constant 16 : index
    %c0_15 = arith.constant 0 : index
    %40 = vector.load %arg13[%c16, %c0_15] : memref<256x16xf32, #tpu.memory_space<vmem>>, vector<8x16xf32>
    tpu.vector_store %arg13[%c16, %c0_15], %39 {strides = array<i32>} : memref<256x16xf32, #tpu.memory_space<vmem>>, vector<8x16xf32>,
    %41 = vector.extract_strided_slice %28 {offsets = [48, 0], sizes = [8, 16], strides = [1, 1]} : vector<512x16xf32> to vector<8x16xf32>
    %42 = vector.extract_strided_slice %28 {offsets = [56, 0], sizes = [8, 16], strides = [1, 1]} : vector<512x16xf32> to vector<8x16xf32>
    %43 = arith.maximumf %41, %42 : vector<8x16xf32>
    %c24 = arith.constant 24 : index
    %c0_16 = arith.constant 0 : index
    %44 = vector.load %arg13[%c24, %c0_16] : memref<256x16xf32, #tpu.memory_space<vmem>>, vector<8x16xf32>
    tpu.vector_store %arg13[%c24, %c0_16], %43 {strides = array<i32>} : memref<256x16xf32, #tpu.memory_space<vmem>>, vector<8x16xf32>,
    %45 = vector.extract_strided_slice %28 {offsets = [64, 0], sizes = [8, 16], strides = [1, 1]} : vector<512x16xf32> to vector<8x16xf32>
    %46 = vector.extract_strided_slice %28 {offsets = [72, 0], sizes = [8, 16], strides = [1, 1]} : vector<512x16xf32> to vector<8x16xf32>
    %47 = arith.maximumf %45, %46 : vector<8x16xf32>
    %c32 = arith.constant 32 : index
    %c0_17 = arith.constant 0 : index
    %48 = vector.load %arg13[%c32, %c0_17] : memref<256x16xf32, #tpu.memory_space<vmem>>, vector<8x16xf32>
    tpu.vector_store %arg13[%c32, %c0_17], %47 {strides = array<i32>} : memref<256x16xf32, #tpu.memory_space<vmem>>, vector<8x16xf32>,
    %49 = vector.extract_strided_slice %28 {offsets = [80, 0], sizes = [8, 16], strides = [1, 1]} : vector<512x16xf32> to vector<8x16xf32>
    %50 = vector.extract_strided_slice %28 {offsets = [88, 0], sizes = [8, 16], strides = [1, 1]} : vector<512x16xf32> to vector<8x16xf32>
    %51 = arith.maximumf %49, %50 : vector<8x16xf32>
    %c40 = arith.constant 40 : index
    %c0_18 = arith.constant 0 : index
    %52 = vector.load %arg13[%c40, %c0_18] : memref<256x16xf32, #tpu.memory_space<vmem>>, vector<8x16xf32>
    tpu.vector_store %arg13[%c40, %c0_18], %51 {strides = array<i32>} : memref<256x16xf32, #tpu.memory_space<vmem>>, vector<8x16xf32>,
    %53 = vector.extract_strided_slice %28 {offsets = [96, 0], sizes = [8, 16], strides = [1, 1]} : vector<512x16xf32> to vector<8x16xf32>
    %54 = vector.extract_strided_slice %28 {offsets = [104, 0], sizes = [8, 16], strides = [1, 1]} : vector<512x16xf32> to vector<8x16xf32>
    %55 = arith.maximumf %53, %54 : vector<8x16xf32>
    %c48 = arith.constant 48 : index
    %c0_19 = arith.constant 0 : index
    %56 = vector.load %arg13[%c48, %c0_19] : memref<256x16xf32, #tpu.memory_space<vmem>>, vector<8x16xf32>
    tpu.vector_store %arg13[%c48, %c0_19], %55 {strides = array<i32>} : memref<256x16xf32, #tpu.memory_space<vmem>>, vector<8x16xf32>,
    %57 = vector.extract_strided_slice %28 {offsets = [112, 0], sizes = [8, 16], strides = [1, 1]} : vector<512x16xf32> to vector<8x16xf32>
    %58 = vector.extract_strided_slice %28 {offsets = [120, 0], sizes = [8, 16], strides = [1, 1]} : vector<512x16xf32> to vector<8x16xf32>
    %59 = arith.maximumf %57, %58 : vector<8x16xf32>
    %c56 = arith.constant 56 : index
    %c0_20 = arith.constant 0 : index
    %60 = vector.load %arg13[%c56, %c0_20] : memref<256x16xf32, #tpu.memory_space<vmem>>, vector<8x16xf32>
    tpu.vector_store %arg13[%c56, %c0_20], %59 {strides = array<i32>} : memref<256x16xf32, #tpu.memory_space<vmem>>, vector<8x16xf32>,
    %61 = vector.extract_strided_slice %28 {offsets = [128, 0], sizes = [8, 16], strides = [1, 1]} : vector<512x16xf32> to vector<8x16xf32>
    %62 = vector.extract_strided_slice %28 {offsets = [136, 0], sizes = [8, 16], strides = [1, 1]} : vector<512x16xf32> to vector<8x16xf32>
    %63 = arith.maximumf %61, %62 : vector<8x16xf32>
    %c64 = arith.constant 64 : index
    %c0_21 = arith.constant 0 : index
    %64 = vector.load %arg13[%c64, %c0_21] : memref<256x16xf32, #tpu.memory_space<vmem>>, vector<8x16xf32>
    tpu.vector_store %arg13[%c64, %c0_21], %63 {strides = array<i32>} : memref<256x16xf32, #tpu.memory_space<vmem>>, vector<8x16xf32>,
    %65 = vector.extract_strided_slice %28 {offsets = [144, 0], sizes = [8, 16], strides = [1, 1]} : vector<512x16xf32> to vector<8x16xf32>
    %66 = vector.extract_strided_slice %28 {offsets = [152, 0], sizes = [8, 16], strides = [1, 1]} : vector<512x16xf32> to vector<8x16xf32>
    %67 = arith.maximumf %65, %66 : vector<8x16xf32>
    %c72 = arith.constant 72 : index
    %c0_22 = arith.constant 0 : index
    %68 = vector.load %arg13[%c72, %c0_22] : memref<256x16xf32, #tpu.memory_space<vmem>>, vector<8x16xf32>
    tpu.vector_store %arg13[%c72, %c0_22], %67 {strides = array<i32>} : memref<256x16xf32, #tpu.memory_space<vmem>>, vector<8x16xf32>,
    %69 = vector.extract_strided_slice %28 {offsets = [160, 0], sizes = [8, 16], strides = [1, 1]} : vector<512x16xf32> to vector<8x16xf32>
    %70 = vector.extract_strided_slice %28 {offsets = [168, 0], sizes = [8, 16], strides = [1, 1]} : vector<512x16xf32> to vector<8x16xf32>
    %71 = arith.maximumf %69, %70 : vector<8x16xf32>
    %c80 = arith.constant 80 : index
    %c0_23 = arith.constant 0 : index
    %72 = vector.load %arg13[%c80, %c0_23] : memref<256x16xf32, #tpu.memory_space<vmem>>, vector<8x16xf32>
    tpu.vector_store %arg13[%c80, %c0_23], %71 {strides = array<i32>} : memref<256x16xf32, #tpu.memory_space<vmem>>, vector<8x16xf32>,
    %73 = vector.extract_strided_slice %28 {offsets = [176, 0], sizes = [8, 16], strides = [1, 1]} : vector<512x16xf32> to vector<8x16xf32>
    %74 = vector.extract_strided_slice %28 {offsets = [184, 0], sizes = [8, 16], strides = [1, 1]} : vector<512x16xf32> to vector<8x16xf32>
    %75 = arith.maximumf %73, %74 : vector<8x16xf32>
    %c88 = arith.constant 88 : index
    %c0_24 = arith.constant 0 : index
    %76 = vector.load %arg13[%c88, %c0_24] : memref<256x16xf32, #tpu.memory_space<vmem>>, vector<8x16xf32>
    tpu.vector_store %arg13[%c88, %c0_24], %75 {strides = array<i32>} : memref<256x16xf32, #tpu.memory_space<vmem>>, vector<8x16xf32>,
    %77 = vector.extract_strided_slice %28 {offsets = [192, 0], sizes = [8, 16], strides = [1, 1]} : vector<512x16xf32> to vector<8x16xf32>
    %78 = vector.extract_strided_slice %28 {offsets = [200, 0], sizes = [8, 16], strides = [1, 1]} : vector<512x16xf32> to vector<8x16xf32>
    %79 = arith.maximumf %77, %78 : vector<8x16xf32>
    %c96 = arith.constant 96 : index
    %c0_25 = arith.constant 0 : index
    %80 = vector.load %arg13[%c96, %c0_25] : memref<256x16xf32, #tpu.memory_space<vmem>>, vector<8x16xf32>
    tpu.vector_store %arg13[%c96, %c0_25], %79 {strides = array<i32>} : memref<256x16xf32, #tpu.memory_space<vmem>>, vector<8x16xf32>,
    %81 = vector.extract_strided_slice %28 {offsets = [208, 0], sizes = [8, 16], strides = [1, 1]} : vector<512x16xf32> to vector<8x16xf32>
    %82 = vector.extract_strided_slice %28 {offsets = [216, 0], sizes = [8, 16], strides = [1, 1]} : vector<512x16xf32> to vector<8x16xf32>
    %83 = arith.maximumf %81, %82 : vector<8x16xf32>
    %c104 = arith.constant 104 : index
    %c0_26 = arith.constant 0 : index
    %84 = vector.load %arg13[%c104, %c0_26] : memref<256x16xf32, #tpu.memory_space<vmem>>, vector<8x16xf32>
    tpu.vector_store %arg13[%c104, %c0_26], %83 {strides = array<i32>} : memref<256x16xf32, #tpu.memory_space<vmem>>, vector<8x16xf32>,
    %85 = vector.extract_strided_slice %28 {offsets = [224, 0], sizes = [8, 16], strides = [1, 1]} : vector<512x16xf32> to vector<8x16xf32>
    %86 = vector.extract_strided_slice %28 {offsets = [232, 0], sizes = [8, 16], strides = [1, 1]} : vector<512x16xf32> to vector<8x16xf32>
    %87 = arith.maximumf %85, %86 : vector<8x16xf32>
    %c112 = arith.constant 112 : index
    %c0_27 = arith.constant 0 : index
    %88 = vector.load %arg13[%c112, %c0_27] : memref<256x16xf32, #tpu.memory_space<vmem>>, vector<8x16xf32>
    tpu.vector_store %arg13[%c112, %c0_27], %87 {strides = array<i32>} : memref<256x16xf32, #tpu.memory_space<vmem>>, vector<8x16xf32>,
    %89 = vector.extract_strided_slice %28 {offsets = [240, 0], sizes = [8, 16], strides = [1, 1]} : vector<512x16xf32> to vector<8x16xf32>
    %90 = vector.extract_strided_slice %28 {offsets = [248, 0], sizes = [8, 16], strides = [1, 1]} : vector<512x16xf32> to vector<8x16xf32>
    %91 = arith.maximumf %89, %90 : vector<8x16xf32>
    %c120 = arith.constant 120 : index
    %c0_28 = arith.constant 0 : index
    %92 = vector.load %arg13[%c120, %c0_28] : memref<256x16xf32, #tpu.memory_space<vmem>>, vector<8x16xf32>
    tpu.vector_store %arg13[%c120, %c0_28], %91 {strides = array<i32>} : memref<256x16xf32, #tpu.memory_space<vmem>>, vector<8x16xf32>,
    %93 = vector.extract_strided_slice %28 {offsets = [256, 0], sizes = [8, 16], strides = [1, 1]} : vector<512x16xf32> to vector<8x16xf32>
    %94 = vector.extract_strided_slice %28 {offsets = [264, 0], sizes = [8, 16], strides = [1, 1]} : vector<512x16xf32> to vector<8x16xf32>
    %95 = arith.maximumf %93, %94 : vector<8x16xf32>
    %c128 = arith.constant 128 : index
    %c0_29 = arith.constant 0 : index
    %96 = vector.load %arg13[%c128, %c0_29] : memref<256x16xf32, #tpu.memory_space<vmem>>, vector<8x16xf32>
    tpu.vector_store %arg13[%c128, %c0_29], %95 {strides = array<i32>} : memref<256x16xf32, #tpu.memory_space<vmem>>, vector<8x16xf32>,
    %97 = vector.extract_strided_slice %28 {offsets = [272, 0], sizes = [8, 16], strides = [1, 1]} : vector<512x16xf32> to vector<8x16xf32>
    %98 = vector.extract_strided_slice %28 {offsets = [280, 0], sizes = [8, 16], strides = [1, 1]} : vector<512x16xf32> to vector<8x16xf32>
    %99 = arith.maximumf %97, %98 : vector<8x16xf32>
    %c136 = arith.constant 136 : index
    %c0_30 = arith.constant 0 : index
    %100 = vector.load %arg13[%c136, %c0_30] : memref<256x16xf32, #tpu.memory_space<vmem>>, vector<8x16xf32>
    tpu.vector_store %arg13[%c136, %c0_30], %99 {strides = array<i32>} : memref<256x16xf32, #tpu.memory_space<vmem>>, vector<8x16xf32>,
    %101 = vector.extract_strided_slice %28 {offsets = [288, 0], sizes = [8, 16], strides = [1, 1]} : vector<512x16xf32> to vector<8x16xf32>
    %102 = vector.extract_strided_slice %28 {offsets = [296, 0], sizes = [8, 16], strides = [1, 1]} : vector<512x16xf32> to vector<8x16xf32>
    %103 = arith.maximumf %101, %102 : vector<8x16xf32>
    %c144 = arith.constant 144 : index
    %c0_31 = arith.constant 0 : index
    %104 = vector.load %arg13[%c144, %c0_31] : memref<256x16xf32, #tpu.memory_space<vmem>>, vector<8x16xf32>
    tpu.vector_store %arg13[%c144, %c0_31], %103 {strides = array<i32>} : memref<256x16xf32, #tpu.memory_space<vmem>>, vector<8x16xf32>,
    %105 = vector.extract_strided_slice %28 {offsets = [304, 0], sizes = [8, 16], strides = [1, 1]} : vector<512x16xf32> to vector<8x16xf32>
    %106 = vector.extract_strided_slice %28 {offsets = [312, 0], sizes = [8, 16], strides = [1, 1]} : vector<512x16xf32> to vector<8x16xf32>
    %107 = arith.maximumf %105, %106 : vector<8x16xf32>
    %c152 = arith.constant 152 : index
    %c0_32 = arith.constant 0 : index
    %108 = vector.load %arg13[%c152, %c0_32] : memref<256x16xf32, #tpu.memory_space<vmem>>, vector<8x16xf32>
    tpu.vector_store %arg13[%c152, %c0_32], %107 {strides = array<i32>} : memref<256x16xf32, #tpu.memory_space<vmem>>, vector<8x16xf32>,
    %109 = vector.extract_strided_slice %28 {offsets = [320, 0], sizes = [8, 16], strides = [1, 1]} : vector<512x16xf32> to vector<8x16xf32>
    %110 = vector.extract_strided_slice %28 {offsets = [328, 0], sizes = [8, 16], strides = [1, 1]} : vector<512x16xf32> to vector<8x16xf32>
    %111 = arith.maximumf %109, %110 : vector<8x16xf32>
    %c160 = arith.constant 160 : index
    %c0_33 = arith.constant 0 : index
    %112 = vector.load %arg13[%c160, %c0_33] : memref<256x16xf32, #tpu.memory_space<vmem>>, vector<8x16xf32>
    tpu.vector_store %arg13[%c160, %c0_33], %111 {strides = array<i32>} : memref<256x16xf32, #tpu.memory_space<vmem>>, vector<8x16xf32>,
    %113 = vector.extract_strided_slice %28 {offsets = [336, 0], sizes = [8, 16], strides = [1, 1]} : vector<512x16xf32> to vector<8x16xf32>
    %114 = vector.extract_strided_slice %28 {offsets = [344, 0], sizes = [8, 16], strides = [1, 1]} : vector<512x16xf32> to vector<8x16xf32>
    %115 = arith.maximumf %113, %114 : vector<8x16xf32>
    %c168 = arith.constant 168 : index
    %c0_34 = arith.constant 0 : index
    %116 = vector.load %arg13[%c168, %c0_34] : memref<256x16xf32, #tpu.memory_space<vmem>>, vector<8x16xf32>
    tpu.vector_store %arg13[%c168, %c0_34], %115 {strides = array<i32>} : memref<256x16xf32, #tpu.memory_space<vmem>>, vector<8x16xf32>,
    %117 = vector.extract_strided_slice %28 {offsets = [352, 0], sizes = [8, 16], strides = [1, 1]} : vector<512x16xf32> to vector<8x16xf32>
    %118 = vector.extract_strided_slice %28 {offsets = [360, 0], sizes = [8, 16], strides = [1, 1]} : vector<512x16xf32> to vector<8x16xf32>
    %119 = arith.maximumf %117, %118 : vector<8x16xf32>
    %c176 = arith.constant 176 : index
    %c0_35 = arith.constant 0 : index
    %120 = vector.load %arg13[%c176, %c0_35] : memref<256x16xf32, #tpu.memory_space<vmem>>, vector<8x16xf32>
    tpu.vector_store %arg13[%c176, %c0_35], %119 {strides = array<i32>} : memref<256x16xf32, #tpu.memory_space<vmem>>, vector<8x16xf32>,
    %121 = vector.extract_strided_slice %28 {offsets = [368, 0], sizes = [8, 16], strides = [1, 1]} : vector<512x16xf32> to vector<8x16xf32>
    %122 = vector.extract_strided_slice %28 {offsets = [376, 0], sizes = [8, 16], strides = [1, 1]} : vector<512x16xf32> to vector<8x16xf32>
    %123 = arith.maximumf %121, %122 : vector<8x16xf32>
    %c184 = arith.constant 184 : index
    %c0_36 = arith.constant 0 : index
    %124 = vector.load %arg13[%c184, %c0_36] : memref<256x16xf32, #tpu.memory_space<vmem>>, vector<8x16xf32>
    tpu.vector_store %arg13[%c184, %c0_36], %123 {strides = array<i32>} : memref<256x16xf32, #tpu.memory_space<vmem>>, vector<8x16xf32>,
    %125 = vector.extract_strided_slice %28 {offsets = [384, 0], sizes = [8, 16], strides = [1, 1]} : vector<512x16xf32> to vector<8x16xf32>
    %126 = vector.extract_strided_slice %28 {offsets = [392, 0], sizes = [8, 16], strides = [1, 1]} : vector<512x16xf32> to vector<8x16xf32>
    %127 = arith.maximumf %125, %126 : vector<8x16xf32>
    %c192 = arith.constant 192 : index
    %c0_37 = arith.constant 0 : index
    %128 = vector.load %arg13[%c192, %c0_37] : memref<256x16xf32, #tpu.memory_space<vmem>>, vector<8x16xf32>
    tpu.vector_store %arg13[%c192, %c0_37], %127 {strides = array<i32>} : memref<256x16xf32, #tpu.memory_space<vmem>>, vector<8x16xf32>,
    %129 = vector.extract_strided_slice %28 {offsets = [400, 0], sizes = [8, 16], strides = [1, 1]} : vector<512x16xf32> to vector<8x16xf32>
    %130 = vector.extract_strided_slice %28 {offsets = [408, 0], sizes = [8, 16], strides = [1, 1]} : vector<512x16xf32> to vector<8x16xf32>
    %131 = arith.maximumf %129, %130 : vector<8x16xf32>
    %c200 = arith.constant 200 : index
    %c0_38 = arith.constant 0 : index
    %132 = vector.load %arg13[%c200, %c0_38] : memref<256x16xf32, #tpu.memory_space<vmem>>, vector<8x16xf32>
    tpu.vector_store %arg13[%c200, %c0_38], %131 {strides = array<i32>} : memref<256x16xf32, #tpu.memory_space<vmem>>, vector<8x16xf32>,
    %133 = vector.extract_strided_slice %28 {offsets = [416, 0], sizes = [8, 16], strides = [1, 1]} : vector<512x16xf32> to vector<8x16xf32>
    %134 = vector.extract_strided_slice %28 {offsets = [424, 0], sizes = [8, 16], strides = [1, 1]} : vector<512x16xf32> to vector<8x16xf32>
    %135 = arith.maximumf %133, %134 : vector<8x16xf32>
    %c208 = arith.constant 208 : index
    %c0_39 = arith.constant 0 : index
    %136 = vector.load %arg13[%c208, %c0_39] : memref<256x16xf32, #tpu.memory_space<vmem>>, vector<8x16xf32>
    tpu.vector_store %arg13[%c208, %c0_39], %135 {strides = array<i32>} : memref<256x16xf32, #tpu.memory_space<vmem>>, vector<8x16xf32>,
    %137 = vector.extract_strided_slice %28 {offsets = [432, 0], sizes = [8, 16], strides = [1, 1]} : vector<512x16xf32> to vector<8x16xf32>
    %138 = vector.extract_strided_slice %28 {offsets = [440, 0], sizes = [8, 16], strides = [1, 1]} : vector<512x16xf32> to vector<8x16xf32>
    %139 = arith.maximumf %137, %138 : vector<8x16xf32>
    %c216 = arith.constant 216 : index
    %c0_40 = arith.constant 0 : index
    %140 = vector.load %arg13[%c216, %c0_40] : memref<256x16xf32, #tpu.memory_space<vmem>>, vector<8x16xf32>
    tpu.vector_store %arg13[%c216, %c0_40], %139 {strides = array<i32>} : memref<256x16xf32, #tpu.memory_space<vmem>>, vector<8x16xf32>,
    %141 = vector.extract_strided_slice %28 {offsets = [448, 0], sizes = [8, 16], strides = [1, 1]} : vector<512x16xf32> to vector<8x16xf32>
    %142 = vector.extract_strided_slice %28 {offsets = [456, 0], sizes = [8, 16], strides = [1, 1]} : vector<512x16xf32> to vector<8x16xf32>
    %143 = arith.maximumf %141, %142 : vector<8x16xf32>
    %c224 = arith.constant 224 : index
    %c0_41 = arith.constant 0 : index
    %144 = vector.load %arg13[%c224, %c0_41] : memref<256x16xf32, #tpu.memory_space<vmem>>, vector<8x16xf32>
    tpu.vector_store %arg13[%c224, %c0_41], %143 {strides = array<i32>} : memref<256x16xf32, #tpu.memory_space<vmem>>, vector<8x16xf32>,
    %145 = vector.extract_strided_slice %28 {offsets = [464, 0], sizes = [8, 16], strides = [1, 1]} : vector<512x16xf32> to vector<8x16xf32>
    %146 = vector.extract_strided_slice %28 {offsets = [472, 0], sizes = [8, 16], strides = [1, 1]} : vector<512x16xf32> to vector<8x16xf32>
    %147 = arith.maximumf %145, %146 : vector<8x16xf32>
    %c232 = arith.constant 232 : index
    %c0_42 = arith.constant 0 : index
    %148 = vector.load %arg13[%c232, %c0_42] : memref<256x16xf32, #tpu.memory_space<vmem>>, vector<8x16xf32>
    tpu.vector_store %arg13[%c232, %c0_42], %147 {strides = array<i32>} : memref<256x16xf32, #tpu.memory_space<vmem>>, vector<8x16xf32>,
    %149 = vector.extract_strided_slice %28 {offsets = [480, 0], sizes = [8, 16], strides = [1, 1]} : vector<512x16xf32> to vector<8x16xf32>
    %150 = vector.extract_strided_slice %28 {offsets = [488, 0], sizes = [8, 16], strides = [1, 1]} : vector<512x16xf32> to vector<8x16xf32>
    %151 = arith.maximumf %149, %150 : vector<8x16xf32>
    %c240 = arith.constant 240 : index
    %c0_43 = arith.constant 0 : index
    %152 = vector.load %arg13[%c240, %c0_43] : memref<256x16xf32, #tpu.memory_space<vmem>>, vector<8x16xf32>
    tpu.vector_store %arg13[%c240, %c0_43], %151 {strides = array<i32>} : memref<256x16xf32, #tpu.memory_space<vmem>>, vector<8x16xf32>,
    %153 = vector.extract_strided_slice %28 {offsets = [496, 0], sizes = [8, 16], strides = [1, 1]} : vector<512x16xf32> to vector<8x16xf32>
    %154 = vector.extract_strided_slice %28 {offsets = [504, 0], sizes = [8, 16], strides = [1, 1]} : vector<512x16xf32> to vector<8x16xf32>
    %155 = arith.maximumf %153, %154 : vector<8x16xf32>
    %c248 = arith.constant 248 : index
    %c0_44 = arith.constant 0 : index
    %156 = vector.load %arg13[%c248, %c0_44] : memref<256x16xf32, #tpu.memory_space<vmem>>, vector<8x16xf32>
    tpu.vector_store %arg13[%c248, %c0_44], %155 {strides = array<i32>} : memref<256x16xf32, #tpu.memory_space<vmem>>, vector<8x16xf32>,
    %c0_45 = arith.constant 0 : index
    %c0_46 = arith.constant 0 : index
    %157 = vector.load %arg13[%c0_45, %c0_46] : memref<256x16xf32, #tpu.memory_space<vmem>>, vector<256x16xf32>
    %cst_47 = arith.constant 0.000000e+00 : f32
    %158 = vector.broadcast %cst_47 : f32 to vector<8x16xf32>
    %159 = vector.extract_strided_slice %157 {offsets = [0, 0], sizes = [248, 16], strides = [1, 1]} : vector<256x16xf32> to vector<248x16xf32>
    %160 = tpu.concatenate %158, %159 in 0 : vector<8x16xf32>, vector<248x16xf32> -> vector<256x16xf32>
    %161 = vector.extract_strided_slice %157 {offsets = [8, 0], sizes = [248, 16], strides = [1, 1]} : vector<256x16xf32> to vector<248x16xf32>
    %162 = tpu.concatenate %161, %158 in 0 : vector<248x16xf32>, vector<8x16xf32> -> vector<256x16xf32>
    %c0_48 = arith.constant 0 : index
    %c0_49 = arith.constant 0 : index
    %c0_50 = arith.constant 0 : index
    %163 = vector.load %arg4[%c0_48, %c0_49, %c0_50] : memref<3x16x32xf32, #tpu.memory_space<vmem>>, vector<1x16x32xf32>
    %164 = vector.shape_cast %163 : vector<1x16x32xf32> to vector<16x32xf32>
    %cst_51 = arith.constant dense<0.000000e+00> : vector<256x32xf32>
    %165 = tpu.matmul %160, %164, %cst_51 {dimension_numbers = #tpu.dot_dimension_numbers<[1], [0], [0], [1], [0, 0, 1, 1], [], []>} : vector<256x16xf32>, vector<16x32xf32>, vector<256x32xf32> -> vector<256x32xf32>
    %c1_52 = arith.constant 1 : index
    %c0_53 = arith.constant 0 : index
    %c0_54 = arith.constant 0 : index
    %166 = vector.load %arg4[%c1_52, %c0_53, %c0_54] : memref<3x16x32xf32, #tpu.memory_space<vmem>>, vector<1x16x32xf32>
    %167 = vector.shape_cast %166 : vector<1x16x32xf32> to vector<16x32xf32>
    %cst_55 = arith.constant dense<0.000000e+00> : vector<256x32xf32>
    %168 = tpu.matmul %157, %167, %cst_55 {dimension_numbers = #tpu.dot_dimension_numbers<[1], [0], [0], [1], [0, 0, 1, 1], [], []>} : vector<256x16xf32>, vector<16x32xf32>, vector<256x32xf32> -> vector<256x32xf32>
    %169 = arith.addf %165, %168 : vector<256x32xf32>
    %c2_56 = arith.constant 2 : index
    %c0_57 = arith.constant 0 : index
    %c0_58 = arith.constant 0 : index
    %170 = vector.load %arg4[%c2_56, %c0_57, %c0_58] : memref<3x16x32xf32, #tpu.memory_space<vmem>>, vector<1x16x32xf32>
    %171 = vector.shape_cast %170 : vector<1x16x32xf32> to vector<16x32xf32>
    %cst_59 = arith.constant dense<0.000000e+00> : vector<256x32xf32>
    %172 = tpu.matmul %162, %171, %cst_59 {dimension_numbers = #tpu.dot_dimension_numbers<[1], [0], [0], [1], [0, 0, 1, 1], [], []>} : vector<256x16xf32>, vector<16x32xf32>, vector<256x32xf32> -> vector<256x32xf32>
    %173 = arith.addf %169, %172 : vector<256x32xf32>
    %c0_60 = arith.constant 0 : index
    %c0_61 = arith.constant 0 : index
    %174 = vector.load %arg5[%c0_60, %c0_61] : memref<1x32xf32, #tpu.memory_space<vmem>>, vector<1x32xf32>
    %175 = vector.broadcast %174 : vector<1x32xf32> to vector<256x32xf32>
    %176 = arith.addf %173, %175 : vector<256x32xf32>
    %cst_62 = arith.constant 0.000000e+00 : f32
    %177 = vector.broadcast %cst_62 : f32 to vector<256x32xf32>
    %178 = arith.maximumf %176, %177 : vector<256x32xf32>
    %179 = vector.extract_strided_slice %178 {offsets = [0, 0], sizes = [8, 32], strides = [1, 1]} : vector<256x32xf32> to vector<8x32xf32>
    %180 = vector.extract_strided_slice %178 {offsets = [8, 0], sizes = [8, 32], strides = [1, 1]} : vector<256x32xf32> to vector<8x32xf32>
    %181 = arith.maximumf %179, %180 : vector<8x32xf32>
    %c0_63 = arith.constant 0 : index
    %c0_64 = arith.constant 0 : index
    %182 = vector.load %arg14[%c0_63, %c0_64] : memref<128x32xf32, #tpu.memory_space<vmem>>, vector<8x32xf32>
    tpu.vector_store %arg14[%c0_63, %c0_64], %181 {strides = array<i32>} : memref<128x32xf32, #tpu.memory_space<vmem>>, vector<8x32xf32>,
    %183 = vector.extract_strided_slice %178 {offsets = [16, 0], sizes = [8, 32], strides = [1, 1]} : vector<256x32xf32> to vector<8x32xf32>
    %184 = vector.extract_strided_slice %178 {offsets = [24, 0], sizes = [8, 32], strides = [1, 1]} : vector<256x32xf32> to vector<8x32xf32>
    %185 = arith.maximumf %183, %184 : vector<8x32xf32>
    %c8_65 = arith.constant 8 : index
    %c0_66 = arith.constant 0 : index
    %186 = vector.load %arg14[%c8_65, %c0_66] : memref<128x32xf32, #tpu.memory_space<vmem>>, vector<8x32xf32>
    tpu.vector_store %arg14[%c8_65, %c0_66], %185 {strides = array<i32>} : memref<128x32xf32, #tpu.memory_space<vmem>>, vector<8x32xf32>,
    %187 = vector.extract_strided_slice %178 {offsets = [32, 0], sizes = [8, 32], strides = [1, 1]} : vector<256x32xf32> to vector<8x32xf32>
    %188 = vector.extract_strided_slice %178 {offsets = [40, 0], sizes = [8, 32], strides = [1, 1]} : vector<256x32xf32> to vector<8x32xf32>
    %189 = arith.maximumf %187, %188 : vector<8x32xf32>
    %c16_67 = arith.constant 16 : index
    %c0_68 = arith.constant 0 : index
    %190 = vector.load %arg14[%c16_67, %c0_68] : memref<128x32xf32, #tpu.memory_space<vmem>>, vector<8x32xf32>
    tpu.vector_store %arg14[%c16_67, %c0_68], %189 {strides = array<i32>} : memref<128x32xf32, #tpu.memory_space<vmem>>, vector<8x32xf32>,
    %191 = vector.extract_strided_slice %178 {offsets = [48, 0], sizes = [8, 32], strides = [1, 1]} : vector<256x32xf32> to vector<8x32xf32>
    %192 = vector.extract_strided_slice %178 {offsets = [56, 0], sizes = [8, 32], strides = [1, 1]} : vector<256x32xf32> to vector<8x32xf32>
    %193 = arith.maximumf %191, %192 : vector<8x32xf32>
    %c24_69 = arith.constant 24 : index
    %c0_70 = arith.constant 0 : index
    %194 = vector.load %arg14[%c24_69, %c0_70] : memref<128x32xf32, #tpu.memory_space<vmem>>, vector<8x32xf32>
    tpu.vector_store %arg14[%c24_69, %c0_70], %193 {strides = array<i32>} : memref<128x32xf32, #tpu.memory_space<vmem>>, vector<8x32xf32>,
    %195 = vector.extract_strided_slice %178 {offsets = [64, 0], sizes = [8, 32], strides = [1, 1]} : vector<256x32xf32> to vector<8x32xf32>
    %196 = vector.extract_strided_slice %178 {offsets = [72, 0], sizes = [8, 32], strides = [1, 1]} : vector<256x32xf32> to vector<8x32xf32>
    %197 = arith.maximumf %195, %196 : vector<8x32xf32>
    %c32_71 = arith.constant 32 : index
    %c0_72 = arith.constant 0 : index
    %198 = vector.load %arg14[%c32_71, %c0_72] : memref<128x32xf32, #tpu.memory_space<vmem>>, vector<8x32xf32>
    tpu.vector_store %arg14[%c32_71, %c0_72], %197 {strides = array<i32>} : memref<128x32xf32, #tpu.memory_space<vmem>>, vector<8x32xf32>,
    %199 = vector.extract_strided_slice %178 {offsets = [80, 0], sizes = [8, 32], strides = [1, 1]} : vector<256x32xf32> to vector<8x32xf32>
    %200 = vector.extract_strided_slice %178 {offsets = [88, 0], sizes = [8, 32], strides = [1, 1]} : vector<256x32xf32> to vector<8x32xf32>
    %201 = arith.maximumf %199, %200 : vector<8x32xf32>
    %c40_73 = arith.constant 40 : index
    %c0_74 = arith.constant 0 : index
    %202 = vector.load %arg14[%c40_73, %c0_74] : memref<128x32xf32, #tpu.memory_space<vmem>>, vector<8x32xf32>
    tpu.vector_store %arg14[%c40_73, %c0_74], %201 {strides = array<i32>} : memref<128x32xf32, #tpu.memory_space<vmem>>, vector<8x32xf32>,
    %203 = vector.extract_strided_slice %178 {offsets = [96, 0], sizes = [8, 32], strides = [1, 1]} : vector<256x32xf32> to vector<8x32xf32>
    %204 = vector.extract_strided_slice %178 {offsets = [104, 0], sizes = [8, 32], strides = [1, 1]} : vector<256x32xf32> to vector<8x32xf32>
    %205 = arith.maximumf %203, %204 : vector<8x32xf32>
    %c48_75 = arith.constant 48 : index
    %c0_76 = arith.constant 0 : index
    %206 = vector.load %arg14[%c48_75, %c0_76] : memref<128x32xf32, #tpu.memory_space<vmem>>, vector<8x32xf32>
    tpu.vector_store %arg14[%c48_75, %c0_76], %205 {strides = array<i32>} : memref<128x32xf32, #tpu.memory_space<vmem>>, vector<8x32xf32>,
    %207 = vector.extract_strided_slice %178 {offsets = [112, 0], sizes = [8, 32], strides = [1, 1]} : vector<256x32xf32> to vector<8x32xf32>
    %208 = vector.extract_strided_slice %178 {offsets = [120, 0], sizes = [8, 32], strides = [1, 1]} : vector<256x32xf32> to vector<8x32xf32>
    %209 = arith.maximumf %207, %208 : vector<8x32xf32>
    %c56_77 = arith.constant 56 : index
    %c0_78 = arith.constant 0 : index
    %210 = vector.load %arg14[%c56_77, %c0_78] : memref<128x32xf32, #tpu.memory_space<vmem>>, vector<8x32xf32>
    tpu.vector_store %arg14[%c56_77, %c0_78], %209 {strides = array<i32>} : memref<128x32xf32, #tpu.memory_space<vmem>>, vector<8x32xf32>,
    %211 = vector.extract_strided_slice %178 {offsets = [128, 0], sizes = [8, 32], strides = [1, 1]} : vector<256x32xf32> to vector<8x32xf32>
    %212 = vector.extract_strided_slice %178 {offsets = [136, 0], sizes = [8, 32], strides = [1, 1]} : vector<256x32xf32> to vector<8x32xf32>
    %213 = arith.maximumf %211, %212 : vector<8x32xf32>
    %c64_79 = arith.constant 64 : index
    %c0_80 = arith.constant 0 : index
    %214 = vector.load %arg14[%c64_79, %c0_80] : memref<128x32xf32, #tpu.memory_space<vmem>>, vector<8x32xf32>
    tpu.vector_store %arg14[%c64_79, %c0_80], %213 {strides = array<i32>} : memref<128x32xf32, #tpu.memory_space<vmem>>, vector<8x32xf32>,
    %215 = vector.extract_strided_slice %178 {offsets = [144, 0], sizes = [8, 32], strides = [1, 1]} : vector<256x32xf32> to vector<8x32xf32>
    %216 = vector.extract_strided_slice %178 {offsets = [152, 0], sizes = [8, 32], strides = [1, 1]} : vector<256x32xf32> to vector<8x32xf32>
    %217 = arith.maximumf %215, %216 : vector<8x32xf32>
    %c72_81 = arith.constant 72 : index
    %c0_82 = arith.constant 0 : index
    %218 = vector.load %arg14[%c72_81, %c0_82] : memref<128x32xf32, #tpu.memory_space<vmem>>, vector<8x32xf32>
    tpu.vector_store %arg14[%c72_81, %c0_82], %217 {strides = array<i32>} : memref<128x32xf32, #tpu.memory_space<vmem>>, vector<8x32xf32>,
    %219 = vector.extract_strided_slice %178 {offsets = [160, 0], sizes = [8, 32], strides = [1, 1]} : vector<256x32xf32> to vector<8x32xf32>
    %220 = vector.extract_strided_slice %178 {offsets = [168, 0], sizes = [8, 32], strides = [1, 1]} : vector<256x32xf32> to vector<8x32xf32>
    %221 = arith.maximumf %219, %220 : vector<8x32xf32>
    %c80_83 = arith.constant 80 : index
    %c0_84 = arith.constant 0 : index
    %222 = vector.load %arg14[%c80_83, %c0_84] : memref<128x32xf32, #tpu.memory_space<vmem>>, vector<8x32xf32>
    tpu.vector_store %arg14[%c80_83, %c0_84], %221 {strides = array<i32>} : memref<128x32xf32, #tpu.memory_space<vmem>>, vector<8x32xf32>,
    %223 = vector.extract_strided_slice %178 {offsets = [176, 0], sizes = [8, 32], strides = [1, 1]} : vector<256x32xf32> to vector<8x32xf32>
    %224 = vector.extract_strided_slice %178 {offsets = [184, 0], sizes = [8, 32], strides = [1, 1]} : vector<256x32xf32> to vector<8x32xf32>
    %225 = arith.maximumf %223, %224 : vector<8x32xf32>
    %c88_85 = arith.constant 88 : index
    %c0_86 = arith.constant 0 : index
    %226 = vector.load %arg14[%c88_85, %c0_86] : memref<128x32xf32, #tpu.memory_space<vmem>>, vector<8x32xf32>
    tpu.vector_store %arg14[%c88_85, %c0_86], %225 {strides = array<i32>} : memref<128x32xf32, #tpu.memory_space<vmem>>, vector<8x32xf32>,
    %227 = vector.extract_strided_slice %178 {offsets = [192, 0], sizes = [8, 32], strides = [1, 1]} : vector<256x32xf32> to vector<8x32xf32>
    %228 = vector.extract_strided_slice %178 {offsets = [200, 0], sizes = [8, 32], strides = [1, 1]} : vector<256x32xf32> to vector<8x32xf32>
    %229 = arith.maximumf %227, %228 : vector<8x32xf32>
    %c96_87 = arith.constant 96 : index
    %c0_88 = arith.constant 0 : index
    %230 = vector.load %arg14[%c96_87, %c0_88] : memref<128x32xf32, #tpu.memory_space<vmem>>, vector<8x32xf32>
    tpu.vector_store %arg14[%c96_87, %c0_88], %229 {strides = array<i32>} : memref<128x32xf32, #tpu.memory_space<vmem>>, vector<8x32xf32>,
    %231 = vector.extract_strided_slice %178 {offsets = [208, 0], sizes = [8, 32], strides = [1, 1]} : vector<256x32xf32> to vector<8x32xf32>
    %232 = vector.extract_strided_slice %178 {offsets = [216, 0], sizes = [8, 32], strides = [1, 1]} : vector<256x32xf32> to vector<8x32xf32>
    %233 = arith.maximumf %231, %232 : vector<8x32xf32>
    %c104_89 = arith.constant 104 : index
    %c0_90 = arith.constant 0 : index
    %234 = vector.load %arg14[%c104_89, %c0_90] : memref<128x32xf32, #tpu.memory_space<vmem>>, vector<8x32xf32>
    tpu.vector_store %arg14[%c104_89, %c0_90], %233 {strides = array<i32>} : memref<128x32xf32, #tpu.memory_space<vmem>>, vector<8x32xf32>,
    %235 = vector.extract_strided_slice %178 {offsets = [224, 0], sizes = [8, 32], strides = [1, 1]} : vector<256x32xf32> to vector<8x32xf32>
    %236 = vector.extract_strided_slice %178 {offsets = [232, 0], sizes = [8, 32], strides = [1, 1]} : vector<256x32xf32> to vector<8x32xf32>
    %237 = arith.maximumf %235, %236 : vector<8x32xf32>
    %c112_91 = arith.constant 112 : index
    %c0_92 = arith.constant 0 : index
    %238 = vector.load %arg14[%c112_91, %c0_92] : memref<128x32xf32, #tpu.memory_space<vmem>>, vector<8x32xf32>
    tpu.vector_store %arg14[%c112_91, %c0_92], %237 {strides = array<i32>} : memref<128x32xf32, #tpu.memory_space<vmem>>, vector<8x32xf32>,
    %239 = vector.extract_strided_slice %178 {offsets = [240, 0], sizes = [8, 32], strides = [1, 1]} : vector<256x32xf32> to vector<8x32xf32>
    %240 = vector.extract_strided_slice %178 {offsets = [248, 0], sizes = [8, 32], strides = [1, 1]} : vector<256x32xf32> to vector<8x32xf32>
    %241 = arith.maximumf %239, %240 : vector<8x32xf32>
    %c120_93 = arith.constant 120 : index
    %c0_94 = arith.constant 0 : index
    %242 = vector.load %arg14[%c120_93, %c0_94] : memref<128x32xf32, #tpu.memory_space<vmem>>, vector<8x32xf32>
    tpu.vector_store %arg14[%c120_93, %c0_94], %241 {strides = array<i32>} : memref<128x32xf32, #tpu.memory_space<vmem>>, vector<8x32xf32>,
    %c0_95 = arith.constant 0 : index
    %c0_96 = arith.constant 0 : index
    %243 = vector.load %arg14[%c0_95, %c0_96] : memref<128x32xf32, #tpu.memory_space<vmem>>, vector<128x32xf32>
    %cst_97 = arith.constant 0.000000e+00 : f32
    %244 = vector.broadcast %cst_97 : f32 to vector<8x32xf32>
    %245 = vector.extract_strided_slice %243 {offsets = [0, 0], sizes = [120, 32], strides = [1, 1]} : vector<128x32xf32> to vector<120x32xf32>
    %246 = tpu.concatenate %244, %245 in 0 : vector<8x32xf32>, vector<120x32xf32> -> vector<128x32xf32>
    %247 = vector.extract_strided_slice %243 {offsets = [8, 0], sizes = [120, 32], strides = [1, 1]} : vector<128x32xf32> to vector<120x32xf32>
    %248 = tpu.concatenate %247, %244 in 0 : vector<120x32xf32>, vector<8x32xf32> -> vector<128x32xf32>
    %c0_98 = arith.constant 0 : index
    %c0_99 = arith.constant 0 : index
    %c0_100 = arith.constant 0 : index
    %249 = vector.load %arg6[%c0_98, %c0_99, %c0_100] : memref<3x32x64xf32, #tpu.memory_space<vmem>>, vector<1x32x64xf32>
    %250 = vector.shape_cast %249 : vector<1x32x64xf32> to vector<32x64xf32>
    %cst_101 = arith.constant dense<0.000000e+00> : vector<128x64xf32>
    %251 = tpu.matmul %246, %250, %cst_101 {dimension_numbers = #tpu.dot_dimension_numbers<[1], [0], [0], [1], [0, 0, 1, 1], [], []>} : vector<128x32xf32>, vector<32x64xf32>, vector<128x64xf32> -> vector<128x64xf32>
    %c1_102 = arith.constant 1 : index
    %c0_103 = arith.constant 0 : index
    %c0_104 = arith.constant 0 : index
    %252 = vector.load %arg6[%c1_102, %c0_103, %c0_104] : memref<3x32x64xf32, #tpu.memory_space<vmem>>, vector<1x32x64xf32>
    %253 = vector.shape_cast %252 : vector<1x32x64xf32> to vector<32x64xf32>
    %cst_105 = arith.constant dense<0.000000e+00> : vector<128x64xf32>
    %254 = tpu.matmul %243, %253, %cst_105 {dimension_numbers = #tpu.dot_dimension_numbers<[1], [0], [0], [1], [0, 0, 1, 1], [], []>} : vector<128x32xf32>, vector<32x64xf32>, vector<128x64xf32> -> vector<128x64xf32>
    %255 = arith.addf %251, %254 : vector<128x64xf32>
    %c2_106 = arith.constant 2 : index
    %c0_107 = arith.constant 0 : index
    %c0_108 = arith.constant 0 : index
    %256 = vector.load %arg6[%c2_106, %c0_107, %c0_108] : memref<3x32x64xf32, #tpu.memory_space<vmem>>, vector<1x32x64xf32>
    %257 = vector.shape_cast %256 : vector<1x32x64xf32> to vector<32x64xf32>
    %cst_109 = arith.constant dense<0.000000e+00> : vector<128x64xf32>
    %258 = tpu.matmul %248, %257, %cst_109 {dimension_numbers = #tpu.dot_dimension_numbers<[1], [0], [0], [1], [0, 0, 1, 1], [], []>} : vector<128x32xf32>, vector<32x64xf32>, vector<128x64xf32> -> vector<128x64xf32>
    %259 = arith.addf %255, %258 : vector<128x64xf32>
    %c0_110 = arith.constant 0 : index
    %c0_111 = arith.constant 0 : index
    %260 = vector.load %arg7[%c0_110, %c0_111] : memref<1x64xf32, #tpu.memory_space<vmem>>, vector<1x64xf32>
    %261 = vector.broadcast %260 : vector<1x64xf32> to vector<128x64xf32>
    %262 = arith.addf %259, %261 : vector<128x64xf32>
    %cst_112 = arith.constant 0.000000e+00 : f32
    %263 = vector.broadcast %cst_112 : f32 to vector<128x64xf32>
    %264 = arith.maximumf %262, %263 : vector<128x64xf32>
    %265 = vector.extract_strided_slice %264 {offsets = [0, 0], sizes = [8, 64], strides = [1, 1]} : vector<128x64xf32> to vector<8x64xf32>
    %266 = vector.extract_strided_slice %264 {offsets = [8, 0], sizes = [8, 64], strides = [1, 1]} : vector<128x64xf32> to vector<8x64xf32>
    %267 = arith.maximumf %265, %266 : vector<8x64xf32>
    %c0_113 = arith.constant 0 : index
    %c0_114 = arith.constant 0 : index
    %268 = vector.load %arg15[%c0_113, %c0_114] : memref<8x512xf32, #tpu.memory_space<vmem>>, vector<8x64xf32>
    tpu.vector_store %arg15[%c0_113, %c0_114], %267 {strides = array<i32>} : memref<8x512xf32, #tpu.memory_space<vmem>>, vector<8x64xf32>,
    %269 = vector.extract_strided_slice %264 {offsets = [16, 0], sizes = [8, 64], strides = [1, 1]} : vector<128x64xf32> to vector<8x64xf32>
    %270 = vector.extract_strided_slice %264 {offsets = [24, 0], sizes = [8, 64], strides = [1, 1]} : vector<128x64xf32> to vector<8x64xf32>
    %271 = arith.maximumf %269, %270 : vector<8x64xf32>
    %c0_115 = arith.constant 0 : index
    %c64_116 = arith.constant 64 : index
    %272 = vector.load %arg15[%c0_115, %c64_116] : memref<8x512xf32, #tpu.memory_space<vmem>>, vector<8x64xf32>
    tpu.vector_store %arg15[%c0_115, %c64_116], %271 {strides = array<i32>} : memref<8x512xf32, #tpu.memory_space<vmem>>, vector<8x64xf32>,
    %273 = vector.extract_strided_slice %264 {offsets = [32, 0], sizes = [8, 64], strides = [1, 1]} : vector<128x64xf32> to vector<8x64xf32>
    %274 = vector.extract_strided_slice %264 {offsets = [40, 0], sizes = [8, 64], strides = [1, 1]} : vector<128x64xf32> to vector<8x64xf32>
    %275 = arith.maximumf %273, %274 : vector<8x64xf32>
    %c0_117 = arith.constant 0 : index
    %c128_118 = arith.constant 128 : index
    %276 = vector.load %arg15[%c0_117, %c128_118] : memref<8x512xf32, #tpu.memory_space<vmem>>, vector<8x64xf32>
    tpu.vector_store %arg15[%c0_117, %c128_118], %275 {strides = array<i32>} : memref<8x512xf32, #tpu.memory_space<vmem>>, vector<8x64xf32>,
    %277 = vector.extract_strided_slice %264 {offsets = [48, 0], sizes = [8, 64], strides = [1, 1]} : vector<128x64xf32> to vector<8x64xf32>
    %278 = vector.extract_strided_slice %264 {offsets = [56, 0], sizes = [8, 64], strides = [1, 1]} : vector<128x64xf32> to vector<8x64xf32>
    %279 = arith.maximumf %277, %278 : vector<8x64xf32>
    %c0_119 = arith.constant 0 : index
    %c192_120 = arith.constant 192 : index
    %280 = vector.load %arg15[%c0_119, %c192_120] : memref<8x512xf32, #tpu.memory_space<vmem>>, vector<8x64xf32>
    tpu.vector_store %arg15[%c0_119, %c192_120], %279 {strides = array<i32>} : memref<8x512xf32, #tpu.memory_space<vmem>>, vector<8x64xf32>,
    %281 = vector.extract_strided_slice %264 {offsets = [64, 0], sizes = [8, 64], strides = [1, 1]} : vector<128x64xf32> to vector<8x64xf32>
    %282 = vector.extract_strided_slice %264 {offsets = [72, 0], sizes = [8, 64], strides = [1, 1]} : vector<128x64xf32> to vector<8x64xf32>
    %283 = arith.maximumf %281, %282 : vector<8x64xf32>
    %c0_121 = arith.constant 0 : index
    %c256 = arith.constant 256 : index
    %284 = vector.load %arg15[%c0_121, %c256] : memref<8x512xf32, #tpu.memory_space<vmem>>, vector<8x64xf32>
    tpu.vector_store %arg15[%c0_121, %c256], %283 {strides = array<i32>} : memref<8x512xf32, #tpu.memory_space<vmem>>, vector<8x64xf32>,
    %285 = vector.extract_strided_slice %264 {offsets = [80, 0], sizes = [8, 64], strides = [1, 1]} : vector<128x64xf32> to vector<8x64xf32>
    %286 = vector.extract_strided_slice %264 {offsets = [88, 0], sizes = [8, 64], strides = [1, 1]} : vector<128x64xf32> to vector<8x64xf32>
    %287 = arith.maximumf %285, %286 : vector<8x64xf32>
    %c0_122 = arith.constant 0 : index
    %c320 = arith.constant 320 : index
    %288 = vector.load %arg15[%c0_122, %c320] : memref<8x512xf32, #tpu.memory_space<vmem>>, vector<8x64xf32>
    tpu.vector_store %arg15[%c0_122, %c320], %287 {strides = array<i32>} : memref<8x512xf32, #tpu.memory_space<vmem>>, vector<8x64xf32>,
    %289 = vector.extract_strided_slice %264 {offsets = [96, 0], sizes = [8, 64], strides = [1, 1]} : vector<128x64xf32> to vector<8x64xf32>
    %290 = vector.extract_strided_slice %264 {offsets = [104, 0], sizes = [8, 64], strides = [1, 1]} : vector<128x64xf32> to vector<8x64xf32>
    %291 = arith.maximumf %289, %290 : vector<8x64xf32>
    %c0_123 = arith.constant 0 : index
    %c384 = arith.constant 384 : index
    %292 = vector.load %arg15[%c0_123, %c384] : memref<8x512xf32, #tpu.memory_space<vmem>>, vector<8x64xf32>
    tpu.vector_store %arg15[%c0_123, %c384], %291 {strides = array<i32>} : memref<8x512xf32, #tpu.memory_space<vmem>>, vector<8x64xf32>,
    %293 = vector.extract_strided_slice %264 {offsets = [112, 0], sizes = [8, 64], strides = [1, 1]} : vector<128x64xf32> to vector<8x64xf32>
    %294 = vector.extract_strided_slice %264 {offsets = [120, 0], sizes = [8, 64], strides = [1, 1]} : vector<128x64xf32> to vector<8x64xf32>
    %295 = arith.maximumf %293, %294 : vector<8x64xf32>
    %c0_124 = arith.constant 0 : index
    %c448 = arith.constant 448 : index
    %296 = vector.load %arg15[%c0_124, %c448] : memref<8x512xf32, #tpu.memory_space<vmem>>, vector<8x64xf32>
    tpu.vector_store %arg15[%c0_124, %c448], %295 {strides = array<i32>} : memref<8x512xf32, #tpu.memory_space<vmem>>, vector<8x64xf32>,
    %c0_125 = arith.constant 0 : index
    %c0_126 = arith.constant 0 : index
    %297 = vector.load %arg15[%c0_125, %c0_126] : memref<8x512xf32, #tpu.memory_space<vmem>>, vector<8x512xf32>
    %c0_127 = arith.constant 0 : index
    %c0_128 = arith.constant 0 : index
    %298 = vector.load %arg8[%c0_127, %c0_128] : memref<512x128xf32, #tpu.memory_space<vmem>>, vector<512x128xf32>
    %cst_129 = arith.constant dense<0.000000e+00> : vector<8x128xf32>
    %299 = tpu.matmul %297, %298, %cst_129 {dimension_numbers = #tpu.dot_dimension_numbers<[1], [0], [0], [1], [0, 0, 1, 1], [], []>} : vector<8x512xf32>, vector<512x128xf32>, vector<8x128xf32> -> vector<8x128xf32>
    %c0_130 = arith.constant 0 : index
    %c0_131 = arith.constant 0 : index
    %300 = vector.load %arg9[%c0_130, %c0_131] : memref<1x128xf32, #tpu.memory_space<vmem>>, vector<1x128xf32>
    %301 = vector.broadcast %300 : vector<1x128xf32> to vector<8x128xf32>
    %302 = arith.addf %299, %301 : vector<8x128xf32>
    %cst_132 = arith.constant 0.000000e+00 : f32
    %303 = vector.broadcast %cst_132 : f32 to vector<8x128xf32>
    %304 = arith.maximumf %302, %303 : vector<8x128xf32>
    %c0_133 = arith.constant 0 : index
    %c0_134 = arith.constant 0 : index
    %305 = vector.load %arg10[%c0_133, %c0_134] : memref<128x128xf32, #tpu.memory_space<vmem>>, vector<128x128xf32>
    %cst_135 = arith.constant dense<0.000000e+00> : vector<8x128xf32>
    %306 = tpu.matmul %304, %305, %cst_135 {dimension_numbers = #tpu.dot_dimension_numbers<[1], [0], [0], [1], [0, 0, 1, 1], [], []>} : vector<8x128xf32>, vector<128x128xf32>, vector<8x128xf32> -> vector<8x128xf32>
    %c0_136 = arith.constant 0 : index
    %c0_137 = arith.constant 0 : index
    %307 = vector.load %arg11[%c0_136, %c0_137] : memref<1x128xf32, #tpu.memory_space<vmem>>, vector<1x128xf32>
    %308 = vector.broadcast %307 : vector<1x128xf32> to vector<8x128xf32>
    %309 = arith.addf %306, %308 : vector<8x128xf32>
    %c0_138 = arith.constant 0 : index
    %c0_139 = arith.constant 0 : index
    %310 = vector.load %arg12[%c0_138, %c0_139] : memref<8x128xf32, #tpu.memory_space<vmem>>, vector<8x128xf32>
    tpu.vector_store %arg12[%c0_138, %c0_139], %309 {strides = array<i32>} : memref<8x128xf32, #tpu.memory_space<vmem>>, vector<8x128xf32>,
    return
  }
  func.func @transform_0(%arg0: i32) -> (i32, i32, i32) {
    %c0_i32 = arith.constant 0 : i32
    %c0_i32_0 = arith.constant 0 : i32
    %c0_i32_1 = arith.constant 0 : i32
    return %arg0, %c0_i32, %c0_i32_0 : i32, i32, i32
  }
  func.func @transform_1(%arg0: i32) -> (i32, i32, i32) {
    %c0_i32 = arith.constant 0 : i32
    %c0_i32_0 = arith.constant 0 : i32
    %c0_i32_1 = arith.constant 0 : i32
    %c0_i32_2 = arith.constant 0 : i32
    return %c0_i32, %c0_i32_0, %c0_i32_1 : i32, i32, i32
  }
  func.func @transform_2(%arg0: i32) -> (i32, i32) {
    %c0_i32 = arith.constant 0 : i32
    %c0_i32_0 = arith.constant 0 : i32
    %c0_i32_1 = arith.constant 0 : i32
    return %c0_i32, %c0_i32_0 : i32, i32
  }
  func.func @transform_3(%arg0: i32) -> (i32, i32, i32) {
    %c0_i32 = arith.constant 0 : i32
    %c0_i32_0 = arith.constant 0 : i32
    %c0_i32_1 = arith.constant 0 : i32
    %c0_i32_2 = arith.constant 0 : i32
    return %c0_i32, %c0_i32_0, %c0_i32_1 : i32, i32, i32
  }
  func.func @transform_4(%arg0: i32) -> (i32, i32) {
    %c0_i32 = arith.constant 0 : i32
    %c0_i32_0 = arith.constant 0 : i32
    %c0_i32_1 = arith.constant 0 : i32
    return %c0_i32, %c0_i32_0 : i32, i32
  }
  func.func @transform_5(%arg0: i32) -> (i32, i32, i32) {
    %c0_i32 = arith.constant 0 : i32
    %c0_i32_0 = arith.constant 0 : i32
    %c0_i32_1 = arith.constant 0 : i32
    %c0_i32_2 = arith.constant 0 : i32
    return %c0_i32, %c0_i32_0, %c0_i32_1 : i32, i32, i32
  }
  func.func @transform_6(%arg0: i32) -> (i32, i32) {
    %c0_i32 = arith.constant 0 : i32
    %c0_i32_0 = arith.constant 0 : i32
    %c0_i32_1 = arith.constant 0 : i32
    return %c0_i32, %c0_i32_0 : i32, i32
  }
  func.func @transform_7(%arg0: i32) -> (i32, i32) {
    %c0_i32 = arith.constant 0 : i32
    %c0_i32_0 = arith.constant 0 : i32
    %c0_i32_1 = arith.constant 0 : i32
    return %c0_i32, %c0_i32_0 : i32, i32
  }
  func.func @transform_8(%arg0: i32) -> (i32, i32) {
    %c0_i32 = arith.constant 0 : i32
    %c0_i32_0 = arith.constant 0 : i32
    %c0_i32_1 = arith.constant 0 : i32
    return %c0_i32, %c0_i32_0 : i32, i32
  }
  func.func @transform_9(%arg0: i32) -> (i32, i32) {
    %c0_i32 = arith.constant 0 : i32
    %c0_i32_0 = arith.constant 0 : i32
    %c0_i32_1 = arith.constant 0 : i32
    return %c0_i32, %c0_i32_0 : i32, i32
  }
  func.func @transform_10(%arg0: i32) -> (i32, i32) {
    %c0_i32 = arith.constant 0 : i32
    %c0_i32_0 = arith.constant 0 : i32
    %c0_i32_1 = arith.constant 0 : i32
    return %c0_i32, %c0_i32_0 : i32, i32
  }
  func.func @transform_11(%arg0: i32) -> (i32, i32) {
    %c0_i32 = arith.constant 0 : i32
    %c0_i32_0 = arith.constant 0 : i32
    return %arg0, %c0_i32 : i32, i32
  }
}

</mosaic_0001>

<llo_original>
// kernel: tpu_custom_call.1
$region0: #{tpu_custom_call.1}
  #allocation0 [shape = 'u32[]', space=smem, size = 0x4, offset = 0x4, fixed_abs, tag = 'smem constant byte address 0x4 - core index']
  #allocation1 [shape = 'u32[144,128]{1,0:T(1,128)}', space=vmem, size = 0x12000, scoped, tag = 'internal scratch']
  #allocation2 [shape = 'f32[256,16]{1,0:T(8,128)}', space=vmem, size = 0x20000, scoped, tag = 'scratch operand']
  #allocation3 [shape = 'f32[128,32]{1,0:T(8,128)}', space=vmem, size = 0x10000, scoped, tag = 'scratch operand']
  #allocation4 [shape = 'f32[8,512]{1,0:T(8,128)}', space=vmem, size = 0x4000, scoped, tag = 'scratch operand']
  %s0 = inlined_call_operand.vmem [shape: f32[1,512,1], index: 0, kind: input, shape index: {}]
  %s1 = inlined_call_operand.vmem [shape: f32[3,1,16], index: 1, kind: input, shape index: {}]
  %s2 = inlined_call_operand.vmem [shape: f32[1,16], index: 2, kind: input, shape index: {}]
  %s3 = inlined_call_operand.hbm [shape: f32[3,16,32], index: 3, kind: input, shape index: {}]
  %s4 = inlined_call_operand.vmem [shape: f32[1,32], index: 4, kind: input, shape index: {}]
  %s5 = inlined_call_operand.hbm [shape: f32[3,32,64], index: 5, kind: input, shape index: {}]
  %s6 = inlined_call_operand.vmem [shape: f32[1,64], index: 6, kind: input, shape index: {}]
  %s7 = inlined_call_operand.vmem [shape: f32[512,128], index: 7, kind: input, shape index: {}]
  %s8 = inlined_call_operand.vmem [shape: f32[1,128], index: 8, kind: input, shape index: {}]
  %s9 = inlined_call_operand.hbm [shape: f32[128,128], index: 9, kind: input, shape index: {}]
  %s10 = inlined_call_operand.vmem [shape: f32[1,128], index: 10, kind: input, shape index: {}]
  %s11 = inlined_call_operand.hbm [shape: f32[8,128], index: 11, kind: output, shape index: {}]
  %s12 = sld [smem:[#allocation0]]
  $region66: #{tpu_custom_call.1} parent=0
    _
  %s14 = ssub.s32 1, %s12
  %s15 = scalar_select 0, %s14, %s12
  $region1: #{tpu_custom_call.1} parent=0
    #allocation5 [shape = 'u8[24576]{0}', space=vmem, size = 0x6000, scoped, tag = 'input window, operand 3, single buffered']
    #allocation6 [shape = 's32[1]{0}', space=sflag, size = 0x4, scoped, tag = 'scoped memory for tpu_custom_call.1']
    #allocation7 [shape = 's32[1]{0}', space=sflag, size = 0x4, scoped, tag = 'scoped memory for tpu_custom_call.1']
    #allocation8 [shape = 'u8[49152]{0}', space=vmem, size = 0xc000, scoped, tag = 'input window, operand 5, single buffered']
    #allocation9 [shape = 's32[1]{0}', space=sflag, size = 0x4, scoped, tag = 'scoped memory for tpu_custom_call.1']
    #allocation10 [shape = 'u8[65536]{0}', space=vmem, size = 0x10000, scoped, tag = 'input window, operand 9, single buffered']
    #allocation11 [shape = 'u8[4096]{0}', space=vmem, size = 0x1000, scoped, tag = 'output window, operand 0, single buffered']
    %16 = vsyncpa [#allocation6], 0
    %17 = vsyncpa [#allocation9], 0
    %18 = vsyncpa [#allocation7], 0
    // Predicated region
    $region2: #{tpu_custom_call.1} parent=1 // pred_check
      _
    $region3: #{tpu_custom_call.1} parent=1 // pred_check_branch
      %20 = sbr.rel (0) target = $region5
    $region4: #{tpu_custom_call.1} parent=1 // pred_region
      _
    $region5: #{tpu_custom_call.1} parent=1 // pred_fallthru
      _
    // Predicated region
    $region6: #{tpu_custom_call.1} parent=1 // pred_check
      _
    $region7: #{tpu_custom_call.1} parent=1 // pred_check_branch
      %22 = sbr.rel (0) target = $region9
    $region8: #{tpu_custom_call.1} parent=1 // pred_region
      _
    $region9: #{tpu_custom_call.1} parent=1 // pred_fallthru
      _
    // Predicated region
    $region10: #{tpu_custom_call.1} parent=1 // pred_check
      _
    $region11: #{tpu_custom_call.1} parent=1 // pred_check_branch
      %24 = sbr.rel (0) target = $region13
    $region12: #{tpu_custom_call.1} parent=1 // pred_region
      _
    $region13: #{tpu_custom_call.1} parent=1 // pred_fallthru
      _
    // Predicated region
    $region14: #{tpu_custom_call.1} parent=1 // pred_check
      _
    $region15: #{tpu_custom_call.1} parent=1 // pred_check_branch
      %26 = sbr.rel (0) target = $region17
    $region16: #{tpu_custom_call.1} parent=1 // pred_region
      %s28 = ssub.s32 768, 768
      %29 = vsyncadd [#allocation6], %s28
      %s30 = sshll.u32 [#allocation5], 4
      %s31 = int_to_ptr.vmem [resolvable:$true] %s30
      %36 = dma.hbm_to_vmem [thread:$0]  %s3, 768, %s31, [#allocation6], 128, 128, 8
    $region17: #{tpu_custom_call.1} parent=1 // pred_fallthru
      _
    // Predicated region
    $region18: #{tpu_custom_call.1} parent=1 // pred_check
      _
    $region19: #{tpu_custom_call.1} parent=1 // pred_check_branch
      %38 = sbr.rel (0) target = $region21
    $region20: #{tpu_custom_call.1} parent=1 // pred_region
      _
    $region21: #{tpu_custom_call.1} parent=1 // pred_fallthru
      _
    // Predicated region
    $region22: #{tpu_custom_call.1} parent=1 // pred_check
      _
    $region23: #{tpu_custom_call.1} parent=1 // pred_check_branch
      %40 = sbr.rel (0) target = $region25
    $region24: #{tpu_custom_call.1} parent=1 // pred_region
      %s42 = ssub.s32 1536, 1536
      %43 = vsyncadd [#allocation9], %s42
      %s44 = sshll.u32 [#allocation8], 4
      %s45 = int_to_ptr.vmem [resolvable:$true] %s44
      %50 = dma.hbm_to_vmem [thread:$0]  %s5, 1536, %s45, [#allocation9], 128, 128, 8
    $region25: #{tpu_custom_call.1} parent=1 // pred_fallthru
      _
    // Predicated region
    $region26: #{tpu_custom_call.1} parent=1 // pred_check
      _
    $region27: #{tpu_custom_call.1} parent=1 // pred_check_branch
      %52 = sbr.rel (0) target = $region29
    $region28: #{tpu_custom_call.1} parent=1 // pred_region
      _
    $region29: #{tpu_custom_call.1} parent=1 // pred_fallthru
      _
    // Predicated region
    $region30: #{tpu_custom_call.1} parent=1 // pred_check
      _
    $region31: #{tpu_custom_call.1} parent=1 // pred_check_branch
      %54 = sbr.rel (0) target = $region33
    $region32: #{tpu_custom_call.1} parent=1 // pred_region
      _
    $region33: #{tpu_custom_call.1} parent=1 // pred_fallthru
      _
    // Predicated region
    $region34: #{tpu_custom_call.1} parent=1 // pred_check
      _
    $region35: #{tpu_custom_call.1} parent=1 // pred_check_branch
      %56 = sbr.rel (0) target = $region37
    $region36: #{tpu_custom_call.1} parent=1 // pred_region
      _
    $region37: #{tpu_custom_call.1} parent=1 // pred_fallthru
      _
    // Predicated region
    $region38: #{tpu_custom_call.1} parent=1 // pred_check
      _
    $region39: #{tpu_custom_call.1} parent=1 // pred_check_branch
      %58 = sbr.rel (0) target = $region41
    $region40: #{tpu_custom_call.1} parent=1 // pred_region
      %s60 = ssub.s32 2048, 2048
      %61 = vsyncadd [#allocation9], %s60
      %s62 = sshll.u32 [#allocation10], 4
      %s63 = int_to_ptr.vmem [resolvable:$true] %s62
      %68 = dma.hbm_to_vmem [thread:$0]  %s9, 2048, %s63, [#allocation9], 128, 128, 8
    $region41: #{tpu_custom_call.1} parent=1 // pred_fallthru
      _
    // Predicated region
    $region42: #{tpu_custom_call.1} parent=1 // pred_check
      _
    $region43: #{tpu_custom_call.1} parent=1 // pred_check_branch
      %70 = sbr.rel (0) target = $region45
    $region44: #{tpu_custom_call.1} parent=1 // pred_region
      _
    $region45: #{tpu_custom_call.1} parent=1 // pred_fallthru
      _
    // Predicated region
    $region46: #{tpu_custom_call.1} parent=1 // pred_check
      _
    $region47: #{tpu_custom_call.1} parent=1 // pred_check_branch
      %72 = sbr.rel (0) target = $region49
    $region48: #{tpu_custom_call.1} parent=1 // pred_region
      %73 = dma.done [#allocation6], 768
    $region49: #{tpu_custom_call.1} parent=1 // pred_fallthru
      _
    // Predicated region
    $region50: #{tpu_custom_call.1} parent=1 // pred_check
      _
    $region51: #{tpu_custom_call.1} parent=1 // pred_check_branch
      %75 = sbr.rel (0) target = $region53
    $region52: #{tpu_custom_call.1} parent=1 // pred_region
      %76 = dma.done [#allocation9], 1536
    $region53: #{tpu_custom_call.1} parent=1 // pred_fallthru
      _
    // Predicated region
    $region54: #{tpu_custom_call.1} parent=1 // pred_check
      _
    $region55: #{tpu_custom_call.1} parent=1 // pred_check_branch
      %78 = sbr.rel (0) target = $region57
    $region56: #{tpu_custom_call.1} parent=1 // pred_region
      %79 = dma.done [#allocation9], 2048
    $region57: #{tpu_custom_call.1} parent=1 // pred_fallthru
      _
    %v80 = vld [vmem:[%s0] sm:$0xff]
    %v81 = vld [vmem:[%s0 + $0x8] sm:$0xff]
    %v82 = vld [vmem:[%s0 + $0x10] sm:$0xff]
    %v83 = vld [vmem:[%s0 + $0x18] sm:$0xff]
    %v84 = vld [vmem:[%s0 + $0x20] sm:$0xff]
    %v85 = vld [vmem:[%s0 + $0x28] sm:$0xff]
    %v86 = vld [vmem:[%s0 + $0x30] sm:$0xff]
    %v87 = vld [vmem:[%s0 + $0x38] sm:$0xff]
    %v88 = vld [vmem:[%s0 + $0x40] sm:$0xff]
    %v89 = vld [vmem:[%s0 + $0x48] sm:$0xff]
    %v90 = vld [vmem:[%s0 + $0x50] sm:$0xff]
    %v91 = vld [vmem:[%s0 + $0x58] sm:$0xff]
    %v92 = vld [vmem:[%s0 + $0x60] sm:$0xff]
    %v93 = vld [vmem:[%s0 + $0x68] sm:$0xff]
    %v94 = vld [vmem:[%s0 + $0x70] sm:$0xff]
    %v95 = vld [vmem:[%s0 + $0x78] sm:$0xff]
    %v96 = vld [vmem:[%s0 + $0x80] sm:$0xff]
    %v97 = vld [vmem:[%s0 + $0x88] sm:$0xff]
    %v98 = vld [vmem:[%s0 + $0x90] sm:$0xff]
    %v99 = vld [vmem:[%s0 + $0x98] sm:$0xff]
    %v100 = vld [vmem:[%s0 + $0xa0] sm:$0xff]
    %v101 = vld [vmem:[%s0 + $0xa8] sm:$0xff]
    %v102 = vld [vmem:[%s0 + $0xb0] sm:$0xff]
    %v103 = vld [vmem:[%s0 + $0xb8] sm:$0xff]
    %v104 = vld [vmem:[%s0 + $0xc0] sm:$0xff]
    %v105 = vld [vmem:[%s0 + $0xc8] sm:$0xff]
    %v106 = vld [vmem:[%s0 + $0xd0] sm:$0xff]
    %v107 = vld [vmem:[%s0 + $0xd8] sm:$0xff]
    %v108 = vld [vmem:[%s0 + $0xe0] sm:$0xff]
    %v109 = vld [vmem:[%s0 + $0xe8] sm:$0xff]
    %v110 = vld [vmem:[%s0 + $0xf0] sm:$0xff]
    %v111 = vld [vmem:[%s0 + $0xf8] sm:$0xff]
    %v112 = vld [vmem:[%s0 + $0x100] sm:$0xff]
    %v113 = vld [vmem:[%s0 + $0x108] sm:$0xff]
    %v114 = vld [vmem:[%s0 + $0x110] sm:$0xff]
    %v115 = vld [vmem:[%s0 + $0x118] sm:$0xff]
    %v116 = vld [vmem:[%s0 + $0x120] sm:$0xff]
    %v117 = vld [vmem:[%s0 + $0x128] sm:$0xff]
    %v118 = vld [vmem:[%s0 + $0x130] sm:$0xff]
    %v119 = vld [vmem:[%s0 + $0x138] sm:$0xff]
    %v120 = vld [vmem:[%s0 + $0x140] sm:$0xff]
    %v121 = vld [vmem:[%s0 + $0x148] sm:$0xff]
    %v122 = vld [vmem:[%s0 + $0x150] sm:$0xff]
    %v123 = vld [vmem:[%s0 + $0x158] sm:$0xff]
    %v124 = vld [vmem:[%s0 + $0x160] sm:$0xff]
    %v125 = vld [vmem:[%s0 + $0x168] sm:$0xff]
    %v126 = vld [vmem:[%s0 + $0x170] sm:$0xff]
    %v127 = vld [vmem:[%s0 + $0x178] sm:$0xff]
    %v128 = vld [vmem:[%s0 + $0x180] sm:$0xff]
    %v129 = vld [vmem:[%s0 + $0x188] sm:$0xff]
    %v130 = vld [vmem:[%s0 + $0x190] sm:$0xff]
    %v131 = vld [vmem:[%s0 + $0x198] sm:$0xff]
    %v132 = vld [vmem:[%s0 + $0x1a0] sm:$0xff]
    %v133 = vld [vmem:[%s0 + $0x1a8] sm:$0xff]
    %v134 = vld [vmem:[%s0 + $0x1b0] sm:$0xff]
    %v135 = vld [vmem:[%s0 + $0x1b8] sm:$0xff]
    %v136 = vld [vmem:[%s0 + $0x1c0] sm:$0xff]
    %v137 = vld [vmem:[%s0 + $0x1c8] sm:$0xff]
    %v138 = vld [vmem:[%s0 + $0x1d0] sm:$0xff]
    %v139 = vld [vmem:[%s0 + $0x1d8] sm:$0xff]
    %v140 = vld [vmem:[%s0 + $0x1e0] sm:$0xff]
    %v141 = vld [vmem:[%s0 + $0x1e8] sm:$0xff]
    %v142 = vld [vmem:[%s0 + $0x1f0] sm:$0xff]
    %v143 = vld [vmem:[%s0 + $0x1f8] sm:$0xff]
    %v144 = vld [vmem:[%s1] sm:$0x1]
    %146 = vset.pattern.permute.xlu0 0
    %147 = vperm.xlu0 %146, 0.0
    %v148 = vpop.permute.xlu0 %147
    %151 = vset.pattern.permute.xlu0 0
    %152 = vperm.xlu0 %151, %v80
    %v153 = vpop.permute.xlu0 %152
    %156 = vset.pattern.permute.xlu0 0
    %157 = vperm.xlu0 %156, %v81
    %v158 = vpop.permute.xlu0 %157
    %161 = vset.pattern.permute.xlu0 0
    %162 = vperm.xlu0 %161, %v82
    %v163 = vpop.permute.xlu0 %162
    %166 = vset.pattern.permute.xlu0 0
    %167 = vperm.xlu0 %166, %v83
    %v168 = vpop.permute.xlu0 %167
    %171 = vset.pattern.permute.xlu0 0
    %172 = vperm.xlu0 %171, %v84
    %v173 = vpop.permute.xlu0 %172
    %176 = vset.pattern.permute.xlu0 0
    %177 = vperm.xlu0 %176, %v85
    %v178 = vpop.permute.xlu0 %177
    %181 = vset.pattern.permute.xlu0 0
    %182 = vperm.xlu0 %181, %v86
    %v183 = vpop.permute.xlu0 %182
    %186 = vset.pattern.permute.xlu0 0
    %187 = vperm.xlu0 %186, %v87
    %v188 = vpop.permute.xlu0 %187
    %191 = vset.pattern.permute.xlu0 0
    %192 = vperm.xlu0 %191, %v88
    %v193 = vpop.permute.xlu0 %192
    %196 = vset.pattern.permute.xlu0 0
    %197 = vperm.xlu0 %196, %v89
    %v198 = vpop.permute.xlu0 %197
    %201 = vset.pattern.permute.xlu0 0
    %202 = vperm.xlu0 %201, %v90
    %v203 = vpop.permute.xlu0 %202
    %206 = vset.pattern.permute.xlu0 0
    %207 = vperm.xlu0 %206, %v91
    %v208 = vpop.permute.xlu0 %207
    %211 = vset.pattern.permute.xlu0 0
    %212 = vperm.xlu0 %211, %v92
    %v213 = vpop.permute.xlu0 %212
    %216 = vset.pattern.permute.xlu0 0
    %217 = vperm.xlu0 %216, %v93
    %v218 = vpop.permute.xlu0 %217
    %221 = vset.pattern.permute.xlu0 0
    %222 = vperm.xlu0 %221, %v94
    %v223 = vpop.permute.xlu0 %222
    %226 = vset.pattern.permute.xlu0 0
    %227 = vperm.xlu0 %226, %v95
    %v228 = vpop.permute.xlu0 %227
    %231 = vset.pattern.permute.xlu0 0
    %232 = vperm.xlu0 %231, %v96
    %v233 = vpop.permute.xlu0 %232
    %236 = vset.pattern.permute.xlu0 0
    %237 = vperm.xlu0 %236, %v97
    %v238 = vpop.permute.xlu0 %237
    %241 = vset.pattern.permute.xlu0 0
    %242 = vperm.xlu0 %241, %v98
    %v243 = vpop.permute.xlu0 %242
    %246 = vset.pattern.permute.xlu0 0
    %247 = vperm.xlu0 %246, %v99
    %v248 = vpop.permute.xlu0 %247
    %251 = vset.pattern.permute.xlu0 0
    %252 = vperm.xlu0 %251, %v100
    %v253 = vpop.permute.xlu0 %252
    %256 = vset.pattern.permute.xlu0 0
    %257 = vperm.xlu0 %256, %v101
    %v258 = vpop.permute.xlu0 %257
    %261 = vset.pattern.permute.xlu0 0
    %262 = vperm.xlu0 %261, %v102
    %v263 = vpop.permute.xlu0 %262
    %266 = vset.pattern.permute.xlu0 0
    %267 = vperm.xlu0 %266, %v103
    %v268 = vpop.permute.xlu0 %267
    %271 = vset.pattern.permute.xlu0 0
    %272 = vperm.xlu0 %271, %v104
    %v273 = vpop.permute.xlu0 %272
    %276 = vset.pattern.permute.xlu0 0
    %277 = vperm.xlu0 %276, %v105
    %v278 = vpop.permute.xlu0 %277
    %281 = vset.pattern.permute.xlu0 0
    %282 = vperm.xlu0 %281, %v106
    %v283 = vpop.permute.xlu0 %282
    %286 = vset.pattern.permute.xlu0 0
    %287 = vperm.xlu0 %286, %v107
    %v288 = vpop.permute.xlu0 %287
    %291 = vset.pattern.permute.xlu0 0
    %292 = vperm.xlu0 %291, %v108
    %v293 = vpop.permute.xlu0 %292
    %296 = vset.pattern.permute.xlu0 0
    %297 = vperm.xlu0 %296, %v109
    %v298 = vpop.permute.xlu0 %297
    %301 = vset.pattern.permute.xlu0 0
    %302 = vperm.xlu0 %301, %v110
    %v303 = vpop.permute.xlu0 %302
    %306 = vset.pattern.permute.xlu0 0
    %307 = vperm.xlu0 %306, %v111
    %v308 = vpop.permute.xlu0 %307
    %311 = vset.pattern.permute.xlu0 0
    %312 = vperm.xlu0 %311, %v112
    %v313 = vpop.permute.xlu0 %312
    %316 = vset.pattern.permute.xlu0 0
    %317 = vperm.xlu0 %316, %v113
    %v318 = vpop.permute.xlu0 %317
    %321 = vset.pattern.permute.xlu0 0
    %322 = vperm.xlu0 %321, %v114
    %v323 = vpop.permute.xlu0 %322
    %326 = vset.pattern.permute.xlu0 0
    %327 = vperm.xlu0 %326, %v115
    %v328 = vpop.permute.xlu0 %327
    %331 = vset.pattern.permute.xlu0 0
    %332 = vperm.xlu0 %331, %v116
    %v333 = vpop.permute.xlu0 %332
    %336 = vset.pattern.permute.xlu0 0
    %337 = vperm.xlu0 %336, %v117
    %v338 = vpop.permute.xlu0 %337
    %341 = vset.pattern.permute.xlu0 0
    %342 = vperm.xlu0 %341, %v118
    %v343 = vpop.permute.xlu0 %342
    %346 = vset.pattern.permute.xlu0 0
    %347 = vperm.xlu0 %346, %v119
    %v348 = vpop.permute.xlu0 %347
    %351 = vset.pattern.permute.xlu0 0
    %352 = vperm.xlu0 %351, %v120
    %v353 = vpop.permute.xlu0 %352
    %356 = vset.pattern.permute.xlu0 0
    %357 = vperm.xlu0 %356, %v121
    %v358 = vpop.permute.xlu0 %357
    %361 = vset.pattern.permute.xlu0 0
    %362 = vperm.xlu0 %361, %v122
    %v363 = vpop.permute.xlu0 %362
    %366 = vset.pattern.permute.xlu0 0
    %367 = vperm.xlu0 %366, %v123
    %v368 = vpop.permute.xlu0 %367
    %371 = vset.pattern.permute.xlu0 0
    %372 = vperm.xlu0 %371, %v124
    %v373 = vpop.permute.xlu0 %372
    %376 = vset.pattern.permute.xlu0 0
    %377 = vperm.xlu0 %376, %v125
    %v378 = vpop.permute.xlu0 %377
    %381 = vset.pattern.permute.xlu0 0
    %382 = vperm.xlu0 %381, %v126
    %v383 = vpop.permute.xlu0 %382
    %386 = vset.pattern.permute.xlu0 0
    %387 = vperm.xlu0 %386, %v127
    %v388 = vpop.permute.xlu0 %387
    %391 = vset.pattern.permute.xlu0 0
    %392 = vperm.xlu0 %391, %v128
    %v393 = vpop.permute.xlu0 %392
    %396 = vset.pattern.permute.xlu0 0
    %397 = vperm.xlu0 %396, %v129
    %v398 = vpop.permute.xlu0 %397
    %401 = vset.pattern.permute.xlu0 0
    %402 = vperm.xlu0 %401, %v130
    %v403 = vpop.permute.xlu0 %402
    %406 = vset.pattern.permute.xlu0 0
    %407 = vperm.xlu0 %406, %v131
    %v408 = vpop.permute.xlu0 %407
    %411 = vset.pattern.permute.xlu0 0
    %412 = vperm.xlu0 %411, %v132
    %v413 = vpop.permute.xlu0 %412
    %416 = vset.pattern.permute.xlu0 0
    %417 = vperm.xlu0 %416, %v133
    %v418 = vpop.permute.xlu0 %417
    %421 = vset.pattern.permute.xlu0 0
    %422 = vperm.xlu0 %421, %v134
    %v423 = vpop.permute.xlu0 %422
    %426 = vset.pattern.permute.xlu0 0
    %427 = vperm.xlu0 %426, %v135
    %v428 = vpop.permute.xlu0 %427
    %431 = vset.pattern.permute.xlu0 0
    %432 = vperm.xlu0 %431, %v136
    %v433 = vpop.permute.xlu0 %432
    %436 = vset.pattern.permute.xlu0 0
    %437 = vperm.xlu0 %436, %v137
    %v438 = vpop.permute.xlu0 %437
    %441 = vset.pattern.permute.xlu0 0
    %442 = vperm.xlu0 %441, %v138
    %v443 = vpop.permute.xlu0 %442
    %446 = vset.pattern.permute.xlu0 0
    %447 = vperm.xlu0 %446, %v139
    %v448 = vpop.permute.xlu0 %447
    %451 = vset.pattern.permute.xlu0 0
    %452 = vperm.xlu0 %451, %v140
    %v453 = vpop.permute.xlu0 %452
    %456 = vset.pattern.permute.xlu0 0
    %457 = vperm.xlu0 %456, %v141
    %v458 = vpop.permute.xlu0 %457
    %461 = vset.pattern.permute.xlu0 0
    %462 = vperm.xlu0 %461, %v142
    %v463 = vpop.permute.xlu0 %462
    %v466 = vlaneseq
    %v467 = vshrl.u32 %v466, 7
    %v468 = vsub.s32 0, %v467
    %v469 = vrot.slane %v144, %v468
    %v471 = vmul.f32 %v148, %v469
    %v472 = vmul.f32 %v153, %v469
    %v473 = vmul.f32 %v158, %v469
    %v474 = vmul.f32 %v163, %v469
    %v475 = vmul.f32 %v168, %v469
    %v476 = vmul.f32 %v173, %v469
    %v477 = vmul.f32 %v178, %v469
    %v478 = vmul.f32 %v183, %v469
    %v479 = vmul.f32 %v188, %v469
    %v480 = vmul.f32 %v193, %v469
    %v481 = vmul.f32 %v198, %v469
    %v482 = vmul.f32 %v203, %v469
    %v483 = vmul.f32 %v208, %v469
    %v484 = vmul.f32 %v213, %v469
    %v485 = vmul.f32 %v218, %v469
    %v486 = vmul.f32 %v223, %v469
    %v487 = vmul.f32 %v228, %v469
    %v488 = vmul.f32 %v233, %v469
    %v489 = vmul.f32 %v238, %v469
    %v490 = vmul.f32 %v243, %v469
    %v491 = vmul.f32 %v248, %v469
    %v492 = vmul.f32 %v253, %v469
    %v493 = vmul.f32 %v258, %v469
    %v494 = vmul.f32 %v263, %v469
    %v495 = vmul.f32 %v268, %v469
    %v496 = vmul.f32 %v273, %v469
    %v497 = vmul.f32 %v278, %v469
    %v498 = vmul.f32 %v283, %v469
    %v499 = vmul.f32 %v288, %v469
    %v500 = vmul.f32 %v293, %v469
    %v501 = vmul.f32 %v298, %v469
    %v502 = vmul.f32 %v303, %v469
    %v503 = vmul.f32 %v308, %v469
    %v504 = vmul.f32 %v313, %v469
    %v505 = vmul.f32 %v318, %v469
    %v506 = vmul.f32 %v323, %v469
    %v507 = vmul.f32 %v328, %v469
    %v508 = vmul.f32 %v333, %v469
    %v509 = vmul.f32 %v338, %v469
    %v510 = vmul.f32 %v343, %v469
    %v511 = vmul.f32 %v348, %v469
    %v512 = vmul.f32 %v353, %v469
    %v513 = vmul.f32 %v358, %v469
    %v514 = vmul.f32 %v363, %v469
    %v515 = vmul.f32 %v368, %v469
    %v516 = vmul.f32 %v373, %v469
    %v517 = vmul.f32 %v378, %v469
    %v518 = vmul.f32 %v383, %v469
    %v519 = vmul.f32 %v388, %v469
    %v520 = vmul.f32 %v393, %v469
    %v521 = vmul.f32 %v398, %v469
    %v522 = vmul.f32 %v403, %v469
    %v523 = vmul.f32 %v408, %v469
    %v524 = vmul.f32 %v413, %v469
    %v525 = vmul.f32 %v418, %v469
    %v526 = vmul.f32 %v423, %v469
    %v527 = vmul.f32 %v428, %v469
    %v528 = vmul.f32 %v433, %v469
    %v529 = vmul.f32 %v438, %v469
    %v530 = vmul.f32 %v443, %v469
    %v531 = vmul.f32 %v448, %v469
    %v532 = vmul.f32 %v453, %v469
    %v533 = vmul.f32 %v458, %v469
    %v534 = vmul.f32 %v463, %v469
    %s535 = scalar_lea.vmem %s1, 1
    %v536 = vld [vmem:[%s535] sm:$0x1]
    %538 = vset.pattern.permute.xlu0 0
    %539 = vperm.xlu0 %538, %v143
    %v540 = vpop.permute.xlu0 %539
    %v543 = vlaneseq
    %v544 = vshrl.u32 %v543, 7
    %v545 = vsub.s32 0, %v544
    %v546 = vrot.slane %v536, %v545
    %v548 = vmul.f32 %v153, %v546
    %v549 = vmul.f32 %v158, %v546
    %v550 = vmul.f32 %v163, %v546
    %v551 = vmul.f32 %v168, %v546
    %v552 = vmul.f32 %v173, %v546
    %v553 = vmul.f32 %v178, %v546
    %v554 = vmul.f32 %v183, %v546
    %v555 = vmul.f32 %v188, %v546
    %v556 = vmul.f32 %v193, %v546
    %v557 = vmul.f32 %v198, %v546
    %v558 = vmul.f32 %v203, %v546
    %v559 = vmul.f32 %v208, %v546
    %v560 = vmul.f32 %v213, %v546
    %v561 = vmul.f32 %v218, %v546
    %v562 = vmul.f32 %v223, %v546
    %v563 = vmul.f32 %v228, %v546
    %v564 = vmul.f32 %v233, %v546
    %v565 = vmul.f32 %v238, %v546
    %v566 = vmul.f32 %v243, %v546
    %v567 = vmul.f32 %v248, %v546
    %v568 = vmul.f32 %v253, %v546
    %v569 = vmul.f32 %v258, %v546
    %v570 = vmul.f32 %v263, %v546
    %v571 = vmul.f32 %v268, %v546
    %v572 = vmul.f32 %v273, %v546
    %v573 = vmul.f32 %v278, %v546
    %v574 = vmul.f32 %v283, %v546
    %v575 = vmul.f32 %v288, %v546
    %v576 = vmul.f32 %v293, %v546
    %v577 = vmul.f32 %v298, %v546
    %v578 = vmul.f32 %v303, %v546
    %v579 = vmul.f32 %v308, %v546
    %v580 = vmul.f32 %v313, %v546
    %v581 = vmul.f32 %v318, %v546
    %v582 = vmul.f32 %v323, %v546
    %v583 = vmul.f32 %v328, %v546
    %v584 = vmul.f32 %v333, %v546
    %v585 = vmul.f32 %v338, %v546
    %v586 = vmul.f32 %v343, %v546
    %v587 = vmul.f32 %v348, %v546
    %v588 = vmul.f32 %v353, %v546
    %v589 = vmul.f32 %v358, %v546
    %v590 = vmul.f32 %v363, %v546
    %v591 = vmul.f32 %v368, %v546
    %v592 = vmul.f32 %v373, %v546
    %v593 = vmul.f32 %v378, %v546
    %v594 = vmul.f32 %v383, %v546
    %v595 = vmul.f32 %v388, %v546
    %v596 = vmul.f32 %v393, %v546
    %v597 = vmul.f32 %v398, %v546
    %v598 = vmul.f32 %v403, %v546
    %v599 = vmul.f32 %v408, %v546
    %v600 = vmul.f32 %v413, %v546
    %v601 = vmul.f32 %v418, %v546
    %v602 = vmul.f32 %v423, %v546
    %v603 = vmul.f32 %v428, %v546
    %v604 = vmul.f32 %v433, %v546
    %v605 = vmul.f32 %v438, %v546
    %v606 = vmul.f32 %v443, %v546
    %v607 = vmul.f32 %v448, %v546
    %v608 = vmul.f32 %v453, %v546
    %v609 = vmul.f32 %v458, %v546
    %v610 = vmul.f32 %v463, %v546
    %v611 = vmul.f32 %v540, %v546
    %v612 = vadd.f32 %v471, %v548
    %v613 = vadd.f32 %v472, %v549
    %v614 = vadd.f32 %v473, %v550
    %v615 = vadd.f32 %v474, %v551
    %v616 = vadd.f32 %v475, %v552
    %v617 = vadd.f32 %v476, %v553
    %v618 = vadd.f32 %v477, %v554
    %v619 = vadd.f32 %v478, %v555
    %v620 = vadd.f32 %v479, %v556
    %v621 = vadd.f32 %v480, %v557
    %v622 = vadd.f32 %v481, %v558
    %v623 = vadd.f32 %v482, %v559
    %v624 = vadd.f32 %v483, %v560
    %v625 = vadd.f32 %v484, %v561
    %v626 = vadd.f32 %v485, %v562
    %v627 = vadd.f32 %v486, %v563
    %v628 = vadd.f32 %v487, %v564
    %v629 = vadd.f32 %v488, %v565
    %v630 = vadd.f32 %v489, %v566
    %v631 = vadd.f32 %v490, %v567
    %v632 = vadd.f32 %v491, %v568
    %v633 = vadd.f32 %v492, %v569
    %v634 = vadd.f32 %v493, %v570
    %v635 = vadd.f32 %v494, %v571
    %v636 = vadd.f32 %v495, %v572
    %v637 = vadd.f32 %v496, %v573
    %v638 = vadd.f32 %v497, %v574
    %v639 = vadd.f32 %v498, %v575
    %v640 = vadd.f32 %v499, %v576
    %v641 = vadd.f32 %v500, %v577
    %v642 = vadd.f32 %v501, %v578
    %v643 = vadd.f32 %v502, %v579
    %v644 = vadd.f32 %v503, %v580
    %v645 = vadd.f32 %v504, %v581
    %v646 = vadd.f32 %v505, %v582
    %v647 = vadd.f32 %v506, %v583
    %v648 = vadd.f32 %v507, %v584
    %v649 = vadd.f32 %v508, %v585
    %v650 = vadd.f32 %v509, %v586
    %v651 = vadd.f32 %v510, %v587
    %v652 = vadd.f32 %v511, %v588
    %v653 = vadd.f32 %v512, %v589
    %v654 = vadd.f32 %v513, %v590
    %v655 = vadd.f32 %v514, %v591
    %v656 = vadd.f32 %v515, %v592
    %v657 = vadd.f32 %v516, %v593
    %v658 = vadd.f32 %v517, %v594
    %v659 = vadd.f32 %v518, %v595
    %v660 = vadd.f32 %v519, %v596
    %v661 = vadd.f32 %v520, %v597
    %v662 = vadd.f32 %v521, %v598
    %v663 = vadd.f32 %v522, %v599
    %v664 = vadd.f32 %v523, %v600
    %v665 = vadd.f32 %v524, %v601
    %v666 = vadd.f32 %v525, %v602
    %v667 = vadd.f32 %v526, %v603
    %v668 = vadd.f32 %v527, %v604
    %v669 = vadd.f32 %v528, %v605
    %v670 = vadd.f32 %v529, %v606
    %v671 = vadd.f32 %v530, %v607
    %v672 = vadd.f32 %v531, %v608
    %v673 = vadd.f32 %v532, %v609
    %v674 = vadd.f32 %v533, %v610
    %v675 = vadd.f32 %v534, %v611
    %s676 = scalar_lea.vmem %s1, 2
    %v677 = vld [vmem:[%s676] sm:$0x1]
    %v679 = vlaneseq
    %v680 = vshrl.u32 %v679, 7
    %v681 = vsub.s32 0, %v680
    %v682 = vrot.slane %v677, %v681
    %v684 = vmul.f32 %v158, %v682
    %v685 = vmul.f32 %v163, %v682
    %v686 = vmul.f32 %v168, %v682
    %v687 = vmul.f32 %v173, %v682
    %v688 = vmul.f32 %v178, %v682
    %v689 = vmul.f32 %v183, %v682
    %v690 = vmul.f32 %v188, %v682
    %v691 = vmul.f32 %v193, %v682
    %v692 = vmul.f32 %v198, %v682
    %v693 = vmul.f32 %v203, %v682
    %v694 = vmul.f32 %v208, %v682
    %v695 = vmul.f32 %v213, %v682
    %v696 = vmul.f32 %v218, %v682
    %v697 = vmul.f32 %v223, %v682
    %v698 = vmul.f32 %v228, %v682
    %v699 = vmul.f32 %v233, %v682
    %v700 = vmul.f32 %v238, %v682
    %v701 = vmul.f32 %v243, %v682
    %v702 = vmul.f32 %v248, %v682
    %v703 = vmul.f32 %v253, %v682
    %v704 = vmul.f32 %v258, %v682
    %v705 = vmul.f32 %v263, %v682
    %v706 = vmul.f32 %v268, %v682
    %v707 = vmul.f32 %v273, %v682
    %v708 = vmul.f32 %v278, %v682
    %v709 = vmul.f32 %v283, %v682
    %v710 = vmul.f32 %v288, %v682
    %v711 = vmul.f32 %v293, %v682
    %v712 = vmul.f32 %v298, %v682
    %v713 = vmul.f32 %v303, %v682
    %v714 = vmul.f32 %v308, %v682
    %v715 = vmul.f32 %v313, %v682
    %v716 = vmul.f32 %v318, %v682
    %v717 = vmul.f32 %v323, %v682
    %v718 = vmul.f32 %v328, %v682
    %v719 = vmul.f32 %v333, %v682
    %v720 = vmul.f32 %v338, %v682
    %v721 = vmul.f32 %v343, %v682
    %v722 = vmul.f32 %v348, %v682
    %v723 = vmul.f32 %v353, %v682
    %v724 = vmul.f32 %v358, %v682
    %v725 = vmul.f32 %v363, %v682
    %v726 = vmul.f32 %v368, %v682
    %v727 = vmul.f32 %v373, %v682
    %v728 = vmul.f32 %v378, %v682
    %v729 = vmul.f32 %v383, %v682
    %v730 = vmul.f32 %v388, %v682
    %v731 = vmul.f32 %v393, %v682
    %v732 = vmul.f32 %v398, %v682
    %v733 = vmul.f32 %v403, %v682
    %v734 = vmul.f32 %v408, %v682
    %v735 = vmul.f32 %v413, %v682
    %v736 = vmul.f32 %v418, %v682
    %v737 = vmul.f32 %v423, %v682
    %v738 = vmul.f32 %v428, %v682
    %v739 = vmul.f32 %v433, %v682
    %v740 = vmul.f32 %v438, %v682
    %v741 = vmul.f32 %v443, %v682
    %v742 = vmul.f32 %v448, %v682
    %v743 = vmul.f32 %v453, %v682
    %v744 = vmul.f32 %v458, %v682
    %v745 = vmul.f32 %v463, %v682
    %v746 = vmul.f32 %v540, %v682
    %v747 = vmul.f32 %v148, %v682
    %v748 = vadd.f32 %v612, %v684
    %v749 = vadd.f32 %v613, %v685
    %v750 = vadd.f32 %v614, %v686
    %v751 = vadd.f32 %v615, %v687
    %v752 = vadd.f32 %v616, %v688
    %v753 = vadd.f32 %v617, %v689
    %v754 = vadd.f32 %v618, %v690
    %v755 = vadd.f32 %v619, %v691
    %v756 = vadd.f32 %v620, %v692
    %v757 = vadd.f32 %v621, %v693
    %v758 = vadd.f32 %v622, %v694
    %v759 = vadd.f32 %v623, %v695
    %v760 = vadd.f32 %v624, %v696
    %v761 = vadd.f32 %v625, %v697
    %v762 = vadd.f32 %v626, %v698
    %v763 = vadd.f32 %v627, %v699
    %v764 = vadd.f32 %v628, %v700
    %v765 = vadd.f32 %v629, %v701
    %v766 = vadd.f32 %v630, %v702
    %v767 = vadd.f32 %v631, %v703
    %v768 = vadd.f32 %v632, %v704
    %v769 = vadd.f32 %v633, %v705
    %v770 = vadd.f32 %v634, %v706
    %v771 = vadd.f32 %v635, %v707
    %v772 = vadd.f32 %v636, %v708
    %v773 = vadd.f32 %v637, %v709
    %v774 = vadd.f32 %v638, %v710
    %v775 = vadd.f32 %v639, %v711
    %v776 = vadd.f32 %v640, %v712
    %v777 = vadd.f32 %v641, %v713
    %v778 = vadd.f32 %v642, %v714
    %v779 = vadd.f32 %v643, %v715
    %v780 = vadd.f32 %v644, %v716
    %v781 = vadd.f32 %v645, %v717
    %v782 = vadd.f32 %v646, %v718
    %v783 = vadd.f32 %v647, %v719
    %v784 = vadd.f32 %v648, %v720
    %v785 = vadd.f32 %v649, %v721
    %v786 = vadd.f32 %v650, %v722
    %v787 = vadd.f32 %v651, %v723
    %v788 = vadd.f32 %v652, %v724
    %v789 = vadd.f32 %v653, %v725
    %v790 = vadd.f32 %v654, %v726
    %v791 = vadd.f32 %v655, %v727
    %v792 = vadd.f32 %v656, %v728
    %v793 = vadd.f32 %v657, %v729
    %v794 = vadd.f32 %v658, %v730
    %v795 = vadd.f32 %v659, %v731
    %v796 = vadd.f32 %v660, %v732
    %v797 = vadd.f32 %v661, %v733
    %v798 = vadd.f32 %v662, %v734
    %v799 = vadd.f32 %v663, %v735
    %v800 = vadd.f32 %v664, %v736
    %v801 = vadd.f32 %v665, %v737
    %v802 = vadd.f32 %v666, %v738
    %v803 = vadd.f32 %v667, %v739
    %v804 = vadd.f32 %v668, %v740
    %v805 = vadd.f32 %v669, %v741
    %v806 = vadd.f32 %v670, %v742
    %v807 = vadd.f32 %v671, %v743
    %v808 = vadd.f32 %v672, %v744
    %v809 = vadd.f32 %v673, %v745
    %v810 = vadd.f32 %v674, %v746
    %v811 = vadd.f32 %v675, %v747
    %v812 = vld [vmem:[%s2] sm:$0x1]
    %v814 = vlaneseq
    %v815 = vshrl.u32 %v814, 7
    %v816 = vsub.s32 0, %v815
    %v817 = vrot.slane %v812, %v816
    %v819 = vadd.f32 %v748, %v817
    %v820 = vadd.f32 %v749, %v817
    %v821 = vadd.f32 %v750, %v817
    %v822 = vadd.f32 %v751, %v817
    %v823 = vadd.f32 %v752, %v817
    %v824 = vadd.f32 %v753, %v817
    %v825 = vadd.f32 %v754, %v817
    %v826 = vadd.f32 %v755, %v817
    %v827 = vadd.f32 %v756, %v817
    %v828 = vadd.f32 %v757, %v817
    %v829 = vadd.f32 %v758, %v817
    %v830 = vadd.f32 %v759, %v817
    %v831 = vadd.f32 %v760, %v817
    %v832 = vadd.f32 %v761, %v817
    %v833 = vadd.f32 %v762, %v817
    %v834 = vadd.f32 %v763, %v817
    %v835 = vadd.f32 %v764, %v817
    %v836 = vadd.f32 %v765, %v817
    %v837 = vadd.f32 %v766, %v817
    %v838 = vadd.f32 %v767, %v817
    %v839 = vadd.f32 %v768, %v817
    %v840 = vadd.f32 %v769, %v817
    %v841 = vadd.f32 %v770, %v817
    %v842 = vadd.f32 %v771, %v817
    %v843 = vadd.f32 %v772, %v817
    %v844 = vadd.f32 %v773, %v817
    %v845 = vadd.f32 %v774, %v817
    %v846 = vadd.f32 %v775, %v817
    %v847 = vadd.f32 %v776, %v817
    %v848 = vadd.f32 %v777, %v817
    %v849 = vadd.f32 %v778, %v817
    %v850 = vadd.f32 %v779, %v817
    %v851 = vadd.f32 %v780, %v817
    %v852 = vadd.f32 %v781, %v817
    %v853 = vadd.f32 %v782, %v817
    %v854 = vadd.f32 %v783, %v817
    %v855 = vadd.f32 %v784, %v817
    %v856 = vadd.f32 %v785, %v817
    %v857 = vadd.f32 %v786, %v817
    %v858 = vadd.f32 %v787, %v817
    %v859 = vadd.f32 %v788, %v817
    %v860 = vadd.f32 %v789, %v817
    %v861 = vadd.f32 %v790, %v817
    %v862 = vadd.f32 %v791, %v817
    %v863 = vadd.f32 %v792, %v817
    %v864 = vadd.f32 %v793, %v817
    %v865 = vadd.f32 %v794, %v817
    %v866 = vadd.f32 %v795, %v817
    %v867 = vadd.f32 %v796, %v817
    %v868 = vadd.f32 %v797, %v817
    %v869 = vadd.f32 %v798, %v817
    %v870 = vadd.f32 %v799, %v817
    %v871 = vadd.f32 %v800, %v817
    %v872 = vadd.f32 %v801, %v817
    %v873 = vadd.f32 %v802, %v817
    %v874 = vadd.f32 %v803, %v817
    %v875 = vadd.f32 %v804, %v817
    %v876 = vadd.f32 %v805, %v817
    %v877 = vadd.f32 %v806, %v817
    %v878 = vadd.f32 %v807, %v817
    %v879 = vadd.f32 %v808, %v817
    %v880 = vadd.f32 %v809, %v817
    %v881 = vadd.f32 %v810, %v817
    %v882 = vadd.f32 %v811, %v817
    %v883 = vmax.f32 %v819, 0.0
    %v884 = vmax.f32 %v820, 0.0
    %v885 = vmax.f32 %v821, 0.0
    %v886 = vmax.f32 %v822, 0.0
    %v887 = vmax.f32 %v823, 0.0
    %v888 = vmax.f32 %v824, 0.0
    %v889 = vmax.f32 %v825, 0.0
    %v890 = vmax.f32 %v826, 0.0
    %v891 = vmax.f32 %v827, 0.0
    %v892 = vmax.f32 %v828, 0.0
    %v893 = vmax.f32 %v829, 0.0
    %v894 = vmax.f32 %v830, 0.0
    %v895 = vmax.f32 %v831, 0.0
    %v896 = vmax.f32 %v832, 0.0
    %v897 = vmax.f32 %v833, 0.0
    %v898 = vmax.f32 %v834, 0.0
    %v899 = vmax.f32 %v835, 0.0
    %v900 = vmax.f32 %v836, 0.0
    %v901 = vmax.f32 %v837, 0.0
    %v902 = vmax.f32 %v838, 0.0
    %v903 = vmax.f32 %v839, 0.0
    %v904 = vmax.f32 %v840, 0.0
    %v905 = vmax.f32 %v841, 0.0
    %v906 = vmax.f32 %v842, 0.0
    %v907 = vmax.f32 %v843, 0.0
    %v908 = vmax.f32 %v844, 0.0
    %v909 = vmax.f32 %v845, 0.0
    %v910 = vmax.f32 %v846, 0.0
    %v911 = vmax.f32 %v847, 0.0
    %v912 = vmax.f32 %v848, 0.0
    %v913 = vmax.f32 %v849, 0.0
    %v914 = vmax.f32 %v850, 0.0
    %v915 = vmax.f32 %v851, 0.0
    %v916 = vmax.f32 %v852, 0.0
    %v917 = vmax.f32 %v853, 0.0
    %v918 = vmax.f32 %v854, 0.0
    %v919 = vmax.f32 %v855, 0.0
    %v920 = vmax.f32 %v856, 0.0
    %v921 = vmax.f32 %v857, 0.0
    %v922 = vmax.f32 %v858, 0.0
    %v923 = vmax.f32 %v859, 0.0
    %v924 = vmax.f32 %v860, 0.0
    %v925 = vmax.f32 %v861, 0.0
    %v926 = vmax.f32 %v862, 0.0
    %v927 = vmax.f32 %v863, 0.0
    %v928 = vmax.f32 %v864, 0.0
    %v929 = vmax.f32 %v865, 0.0
    %v930 = vmax.f32 %v866, 0.0
    %v931 = vmax.f32 %v867, 0.0
    %v932 = vmax.f32 %v868, 0.0
    %v933 = vmax.f32 %v869, 0.0
    %v934 = vmax.f32 %v870, 0.0
    %v935 = vmax.f32 %v871, 0.0
    %v936 = vmax.f32 %v872, 0.0
    %v937 = vmax.f32 %v873, 0.0
    %v938 = vmax.f32 %v874, 0.0
    %v939 = vmax.f32 %v875, 0.0
    %v940 = vmax.f32 %v876, 0.0
    %v941 = vmax.f32 %v877, 0.0
    %v942 = vmax.f32 %v878, 0.0
    %v943 = vmax.f32 %v879, 0.0
    %v944 = vmax.f32 %v880, 0.0
    %v945 = vmax.f32 %v881, 0.0
    %v946 = vmax.f32 %v882, 0.0
    %v947 = vmax.f32 %v883, %v884
    %vm948 = vcmask 130048
    %949 = vst.msk [vmem:[#allocation2] sm:$0xff] %vm948, %v947
    %v950 = vmax.f32 %v885, %v886
    %951 = vst.msk [vmem:[#allocation2 + $0x8] sm:$0xff] %vm948, %v950
    %v952 = vmax.f32 %v887, %v888
    %953 = vst.msk [vmem:[#allocation2 + $0x10] sm:$0xff] %vm948, %v952
    %v954 = vmax.f32 %v889, %v890
    %955 = vst.msk [vmem:[#allocation2 + $0x18] sm:$0xff] %vm948, %v954
    %v956 = vmax.f32 %v891, %v892
    %957 = vst.msk [vmem:[#allocation2 + $0x20] sm:$0xff] %vm948, %v956
    %v958 = vmax.f32 %v893, %v894
    %959 = vst.msk [vmem:[#allocation2 + $0x28] sm:$0xff] %vm948, %v958
    %v960 = vmax.f32 %v895, %v896
    %961 = vst.msk [vmem:[#allocation2 + $0x30] sm:$0xff] %vm948, %v960
    %v962 = vmax.f32 %v897, %v898
    %963 = vst.msk [vmem:[#allocation2 + $0x38] sm:$0xff] %vm948, %v962
    %v964 = vmax.f32 %v899, %v900
    %965 = vst.msk [vmem:[#allocation2 + $0x40] sm:$0xff] %vm948, %v964
    %v966 = vmax.f32 %v901, %v902
    %967 = vst.msk [vmem:[#allocation2 + $0x48] sm:$0xff] %vm948, %v966
    %v968 = vmax.f32 %v903, %v904
    %969 = vst.msk [vmem:[#allocation2 + $0x50] sm:$0xff] %vm948, %v968
    %v970 = vmax.f32 %v905, %v906
    %971 = vst.msk [vmem:[#allocation2 + $0x58] sm:$0xff] %vm948, %v970
    %v972 = vmax.f32 %v907, %v908
    %973 = vst.msk [vmem:[#allocation2 + $0x60] sm:$0xff] %vm948, %v972
    %v974 = vmax.f32 %v909, %v910
    %975 = vst.msk [vmem:[#allocation2 + $0x68] sm:$0xff] %vm948, %v974
    %v976 = vmax.f32 %v911, %v912
    %977 = vst.msk [vmem:[#allocation2 + $0x70] sm:$0xff] %vm948, %v976
    %v978 = vmax.f32 %v913, %v914
    %979 = vst.msk [vmem:[#allocation2 + $0x78] sm:$0xff] %vm948, %v978
    %v980 = vmax.f32 %v915, %v916
    %981 = vst.msk [vmem:[#allocation2 + $0x80] sm:$0xff] %vm948, %v980
    %v982 = vmax.f32 %v917, %v918
    %983 = vst.msk [vmem:[#allocation2 + $0x88] sm:$0xff] %vm948, %v982
    %v984 = vmax.f32 %v919, %v920
    %985 = vst.msk [vmem:[#allocation2 + $0x90] sm:$0xff] %vm948, %v984
    %v986 = vmax.f32 %v921, %v922
    %987 = vst.msk [vmem:[#allocation2 + $0x98] sm:$0xff] %vm948, %v986
    %v988 = vmax.f32 %v923, %v924
    %989 = vst.msk [vmem:[#allocation2 + $0xa0] sm:$0xff] %vm948, %v988
    %v990 = vmax.f32 %v925, %v926
    %991 = vst.msk [vmem:[#allocation2 + $0xa8] sm:$0xff] %vm948, %v990
    %v992 = vmax.f32 %v927, %v928
    %993 = vst.msk [vmem:[#allocation2 + $0xb0] sm:$0xff] %vm948, %v992
    %v994 = vmax.f32 %v929, %v930
    %995 = vst.msk [vmem:[#allocation2 + $0xb8] sm:$0xff] %vm948, %v994
    %v996 = vmax.f32 %v931, %v932
    %997 = vst.msk [vmem:[#allocation2 + $0xc0] sm:$0xff] %vm948, %v996
    %v998 = vmax.f32 %v933, %v934
    %999 = vst.msk [vmem:[#allocation2 + $0xc8] sm:$0xff] %vm948, %v998
    %v1000 = vmax.f32 %v935, %v936
    %1001 = vst.msk [vmem:[#allocation2 + $0xd0] sm:$0xff] %vm948, %v1000
    %v1002 = vmax.f32 %v937, %v938
    %1003 = vst.msk [vmem:[#allocation2 + $0xd8] sm:$0xff] %vm948, %v1002
    %v1004 = vmax.f32 %v939, %v940
    %1005 = vst.msk [vmem:[#allocation2 + $0xe0] sm:$0xff] %vm948, %v1004
    %v1006 = vmax.f32 %v941, %v942
    %1007 = vst.msk [vmem:[#allocation2 + $0xe8] sm:$0xff] %vm948, %v1006
    %v1008 = vmax.f32 %v943, %v944
    %1009 = vst.msk [vmem:[#allocation2 + $0xf0] sm:$0xff] %vm948, %v1008
    %v1010 = vmax.f32 %v945, %v946
    %1011 = vst.msk [vmem:[#allocation2 + $0xf8] sm:$0xff] %vm948, %v1010
    %v1012 = vld [vmem:[#allocation2] sm:$0xff]
    %v1013 = vld [vmem:[#allocation2 + $0x8] sm:$0xff]
    %v1014 = vld [vmem:[#allocation2 + $0x10] sm:$0xff]
    %v1015 = vld [vmem:[#allocation2 + $0x18] sm:$0xff]
    %v1016 = vld [vmem:[#allocation2 + $0x20] sm:$0xff]
    %v1017 = vld [vmem:[#allocation2 + $0x28] sm:$0xff]
    %v1018 = vld [vmem:[#allocation2 + $0x30] sm:$0xff]
    %v1019 = vld [vmem:[#allocation2 + $0x38] sm:$0xff]
    %v1020 = vld [vmem:[#allocation2 + $0x40] sm:$0xff]
    %v1021 = vld [vmem:[#allocation2 + $0x48] sm:$0xff]
    %v1022 = vld [vmem:[#allocation2 + $0x50] sm:$0xff]
    %v1023 = vld [vmem:[#allocation2 + $0x58] sm:$0xff]
    %v1024 = vld [vmem:[#allocation2 + $0x60] sm:$0xff]
    %v1025 = vld [vmem:[#allocation2 + $0x68] sm:$0xff]
    %v1026 = vld [vmem:[#allocation2 + $0x70] sm:$0xff]
    %v1027 = vld [vmem:[#allocation2 + $0x78] sm:$0xff]
    %v1028 = vld [vmem:[#allocation2 + $0x80] sm:$0xff]
    %v1029 = vld [vmem:[#allocation2 + $0x88] sm:$0xff]
    %v1030 = vld [vmem:[#allocation2 + $0x90] sm:$0xff]
    %v1031 = vld [vmem:[#allocation2 + $0x98] sm:$0xff]
    %v1032 = vld [vmem:[#allocation2 + $0xa0] sm:$0xff]
    %v1033 = vld [vmem:[#allocation2 + $0xa8] sm:$0xff]
    %v1034 = vld [vmem:[#allocation2 + $0xb0] sm:$0xff]
    %v1035 = vld [vmem:[#allocation2 + $0xb8] sm:$0xff]
    %v1036 = vld [vmem:[#allocation2 + $0xc0] sm:$0xff]
    %v1037 = vld [vmem:[#allocation2 + $0xc8] sm:$0xff]
    %v1038 = vld [vmem:[#allocation2 + $0xd0] sm:$0xff]
    %v1039 = vld [vmem:[#allocation2 + $0xd8] sm:$0xff]
    %v1040 = vld [vmem:[#allocation2 + $0xe0] sm:$0xff]
    %v1041 = vld [vmem:[#allocation2 + $0xe8] sm:$0xff]
    %v1042 = vld [vmem:[#allocation2 + $0xf0] sm:$0xff]
    %v1043 = vld [vmem:[#allocation2 + $0xf8] sm:$0xff]
    %v1044 = vld [vmem:[#allocation5] sm:$0xff]
    %v1045 = vld [vmem:[#allocation5 + $0x8] sm:$0xff]
    %s1046 = scalar_lea.vmem [#allocation5], 16
    %v1047 = vld [vmem:[%s1046] sm:$0xff]
    %v1048 = vld [vmem:[%s1046 + $0x8] sm:$0xff]
    %v1050 = vsel %vm948, %v1012, 0
    %v1053 = vsel %vm948, %v1013, 0
    %v1056 = vsel %vm948, %v1014, 0
    %v1059 = vsel %vm948, %v1015, 0
    %v1062 = vsel %vm948, %v1016, 0
    %v1065 = vsel %vm948, %v1017, 0
    %v1068 = vsel %vm948, %v1018, 0
    %v1071 = vsel %vm948, %v1019, 0
    %v1074 = vsel %vm948, %v1020, 0
    %v1077 = vsel %vm948, %v1021, 0
    %v1080 = vsel %vm948, %v1022, 0
    %v1083 = vsel %vm948, %v1023, 0
    %v1086 = vsel %vm948, %v1024, 0
    %v1089 = vsel %vm948, %v1025, 0
    %v1092 = vsel %vm948, %v1026, 0
    %v1095 = vsel %vm948, %v1027, 0
    %v1098 = vsel %vm948, %v1028, 0
    %v1101 = vsel %vm948, %v1029, 0
    %v1104 = vsel %vm948, %v1030, 0
    %v1107 = vsel %vm948, %v1031, 0
    %v1110 = vsel %vm948, %v1032, 0
    %v1113 = vsel %vm948, %v1033, 0
    %v1116 = vsel %vm948, %v1034, 0
    %v1119 = vsel %vm948, %v1035, 0
    %v1122 = vsel %vm948, %v1036, 0
    %v1125 = vsel %vm948, %v1037, 0
    %v1128 = vsel %vm948, %v1038, 0
    %v1131 = vsel %vm948, %v1039, 0
    %v1134 = vsel %vm948, %v1040, 0
    %v1137 = vsel %vm948, %v1041, 0
    %v1140 = vsel %vm948, %v1042, 0
    %v1143 = vsel %vm948, %v1043, 0
    %1145 = vmatprep.subr.mxu0 0.0
    %1146 = vmatpush1.msra.mxu0 %v1047
    %1147 = vmatprep.subr.mxu0 0.0
    %1148 = vmatpush1.msra.mxu0 %v1048
    %1149 = vmatprep.subr.mxu0 0.0
    %1150 = vmatpush1.msra.mxu0 0.0
    %1151 = vmatprep.subr.mxu0 0.0
    %1152 = vmatpush1.msra.mxu0 0.0
    %1153 = vmatprep.subr.mxu0 0.0
    %1154 = vmatpush1.msra.mxu0 0.0
    %1155 = vmatprep.subr.mxu0 0.0
    %1156 = vmatpush1.msra.mxu0 0.0
    %1157 = vmatprep.subr.mxu0 0.0
    %1158 = vmatpush1.msra.mxu0 0.0
    %1159 = vmatprep.subr.mxu0 0.0
    %1160 = vmatpush1.msra.mxu0 0.0
    %1161 = vmatprep.subr.mxu0 0.0
    %1162 = vmatpush1.msra.mxu0 0.0
    %1163 = vmatprep.subr.mxu0 0.0
    %1164 = vmatpush1.msra.mxu0 0.0
    %1165 = vmatprep.subr.mxu0 0.0
    %1166 = vmatpush1.msra.mxu0 0.0
    %1167 = vmatprep.subr.mxu0 0.0
    %1168 = vmatpush1.msra.mxu0 0.0
    %1169 = vmatprep.subr.mxu0 0.0
    %1170 = vmatpush1.msra.mxu0 0.0
    %1171 = vmatprep.subr.mxu0 0.0
    %1172 = vmatpush1.msra.mxu0 0.0
    %1173 = vmatprep.subr.mxu0 0.0
    %1174 = vmatpush1.msra.mxu0 0.0
    %1175 = vmatprep.subr.mxu0 0.0
    %1176 = vmatpush1.msra.mxu0 0.0
    %1177 = vmatprep.subr.mxu0 0.0
    %1178 = vmatpush1.msra.mxu0 0.0
    %1179 = vmatprep.subr.mxu0 0.0
    %1180 = vmatpush1.msra.mxu0 0.0
    %1181 = vmatprep.subr.mxu0 0.0
    %1182 = vmatpush1.msra.mxu0 0.0
    %1183 = vmatprep.subr.mxu0 0.0
    %1184 = vmatpush1.msra.mxu0 0.0
    %1185 = vmatprep.subr.mxu0 0.0
    %1186 = vmatpush1.msra.mxu0 0.0
    %1187 = vmatprep.subr.mxu0 0.0
    %1188 = vmatpush1.msra.mxu0 0.0
    %1189 = vmatprep.subr.mxu0 0.0
    %1190 = vmatpush1.msra.mxu0 0.0
    %1191 = vmatprep.subr.mxu0 0.0
    %1192 = vmatpush1.msra.mxu0 0.0
    %1193 = vmatprep.subr.mxu0 0.0
    %1194 = vmatpush1.msra.mxu0 0.0
    %1195 = vmatprep.subr.mxu0 0.0
    %1196 = vmatpush1.msra.mxu0 0.0
    %1197 = vmatprep.subr.mxu0 0.0
    %1198 = vmatpush1.msra.mxu0 0.0
    %1199 = vmatprep.subr.mxu0 0.0
    %1200 = vmatpush1.msra.mxu0 0.0
    %1201 = vmatprep.subr.mxu0 0.0
    %1202 = vmatpush1.msra.mxu0 0.0
    %1203 = vmatprep.subr.mxu0 0.0
    %1204 = vmatpush1.msra.mxu0 0.0
    %1205 = vmatprep.subr.mxu0 0.0
    %1206 = vmatpush1.msra.mxu0 0.0
    %1207 = vmatprep.subr.mxu0 0.0
    %1208 = vmatpush1.msra.mxu0 0.0
    %1209 = vmatprep.mubr.f32.mxu0 0.0
    %1210 = vmatmul.mubr.f32.gmra.mrb[0].mxu0 %v1050
    %v1211 = vpop.f32.mrb[0].mxu0
    %v1212 = vadd.f32 0.0, %v1211
    %v1213 = vpop.f32.mrb[0].mxu0
    %1214 = vmatprep.mubr.f32.mxu0 0.0
    %1215 = vmatmul.mubr.f32.gmra.mrb[0].mxu0 %v1053
    %v1216 = vpop.f32.mrb[0].mxu0
    %v1217 = vadd.f32 0.0, %v1216
    %v1218 = vpop.f32.mrb[0].mxu0
    %1219 = vmatprep.mubr.f32.mxu0 0.0
    %1220 = vmatmul.mubr.f32.gmra.mrb[0].mxu0 %v1056
    %v1221 = vpop.f32.mrb[0].mxu0
    %v1222 = vadd.f32 0.0, %v1221
    %v1223 = vpop.f32.mrb[0].mxu0
    %1224 = vmatprep.mubr.f32.mxu0 0.0
    %1225 = vmatmul.mubr.f32.gmra.mrb[0].mxu0 %v1059
    %v1226 = vpop.f32.mrb[0].mxu0
    %v1227 = vadd.f32 0.0, %v1226
    %v1228 = vpop.f32.mrb[0].mxu0
    %1229 = vmatprep.mubr.f32.mxu0 0.0
    %1230 = vmatmul.mubr.f32.gmra.mrb[0].mxu0 %v1062
    %v1231 = vpop.f32.mrb[0].mxu0
    %v1232 = vadd.f32 0.0, %v1231
    %v1233 = vpop.f32.mrb[0].mxu0
    %1234 = vmatprep.mubr.f32.mxu0 0.0
    %1235 = vmatmul.mubr.f32.gmra.mrb[0].mxu0 %v1065
    %v1236 = vpop.f32.mrb[0].mxu0
    %v1237 = vadd.f32 0.0, %v1236
    %v1238 = vpop.f32.mrb[0].mxu0
    %1239 = vmatprep.mubr.f32.mxu0 0.0
    %1240 = vmatmul.mubr.f32.gmra.mrb[0].mxu0 %v1068
    %v1241 = vpop.f32.mrb[0].mxu0
    %v1242 = vadd.f32 0.0, %v1241
    %v1243 = vpop.f32.mrb[0].mxu0
    %1244 = vmatprep.mubr.f32.mxu0 0.0
    %1245 = vmatmul.mubr.f32.gmra.mrb[0].mxu0 %v1071
    %v1246 = vpop.f32.mrb[0].mxu0
    %v1247 = vadd.f32 0.0, %v1246
    %v1248 = vpop.f32.mrb[0].mxu0
    %1249 = vmatprep.mubr.f32.mxu0 0.0
    %1250 = vmatmul.mubr.f32.gmra.mrb[0].mxu0 %v1074
    %v1251 = vpop.f32.mrb[0].mxu0
    %v1252 = vadd.f32 0.0, %v1251
    %v1253 = vpop.f32.mrb[0].mxu0
    %1254 = vmatprep.mubr.f32.mxu0 0.0
    %1255 = vmatmul.mubr.f32.gmra.mrb[0].mxu0 %v1077
    %v1256 = vpop.f32.mrb[0].mxu0
    %v1257 = vadd.f32 0.0, %v1256
    %v1258 = vpop.f32.mrb[0].mxu0
    %1259 = vmatprep.mubr.f32.mxu0 0.0
    %1260 = vmatmul.mubr.f32.gmra.mrb[0].mxu0 %v1080
    %v1261 = vpop.f32.mrb[0].mxu0
    %v1262 = vadd.f32 0.0, %v1261
    %v1263 = vpop.f32.mrb[0].mxu0
    %1264 = vmatprep.mubr.f32.mxu0 0.0
    %1265 = vmatmul.mubr.f32.gmra.mrb[0].mxu0 %v1083
    %v1266 = vpop.f32.mrb[0].mxu0
    %v1267 = vadd.f32 0.0, %v1266
    %v1268 = vpop.f32.mrb[0].mxu0
    %1269 = vmatprep.mubr.f32.mxu0 0.0
    %1270 = vmatmul.mubr.f32.gmra.mrb[0].mxu0 %v1086
    %v1271 = vpop.f32.mrb[0].mxu0
    %v1272 = vadd.f32 0.0, %v1271
    %v1273 = vpop.f32.mrb[0].mxu0
    %1274 = vmatprep.mubr.f32.mxu0 0.0
    %1275 = vmatmul.mubr.f32.gmra.mrb[0].mxu0 %v1089
    %v1276 = vpop.f32.mrb[0].mxu0
    %v1277 = vadd.f32 0.0, %v1276
    %v1278 = vpop.f32.mrb[0].mxu0
    %1279 = vmatprep.mubr.f32.mxu0 0.0
    %1280 = vmatmul.mubr.f32.gmra.mrb[0].mxu0 %v1092
    %v1281 = vpop.f32.mrb[0].mxu0
    %v1282 = vadd.f32 0.0, %v1281
    %v1283 = vpop.f32.mrb[0].mxu0
    %1284 = vmatprep.mubr.f32.mxu0 0.0
    %1285 = vmatmul.mubr.f32.gmra.mrb[0].mxu0 %v1095
    %v1286 = vpop.f32.mrb[0].mxu0
    %v1287 = vadd.f32 0.0, %v1286
    %v1288 = vpop.f32.mrb[0].mxu0
    %1289 = vmatprep.mubr.f32.mxu0 0.0
    %1290 = vmatmul.mubr.f32.gmra.mrb[0].mxu0 %v1098
    %v1291 = vpop.f32.mrb[0].mxu0
    %v1292 = vadd.f32 0.0, %v1291
    %v1293 = vpop.f32.mrb[0].mxu0
    %1294 = vmatprep.mubr.f32.mxu0 0.0
    %1295 = vmatmul.mubr.f32.gmra.mrb[0].mxu0 %v1101
    %v1296 = vpop.f32.mrb[0].mxu0
    %v1297 = vadd.f32 0.0, %v1296
    %v1298 = vpop.f32.mrb[0].mxu0
    %1299 = vmatprep.mubr.f32.mxu0 0.0
    %1300 = vmatmul.mubr.f32.gmra.mrb[0].mxu0 %v1104
    %v1301 = vpop.f32.mrb[0].mxu0
    %v1302 = vadd.f32 0.0, %v1301
    %v1303 = vpop.f32.mrb[0].mxu0
    %1304 = vmatprep.mubr.f32.mxu0 0.0
    %1305 = vmatmul.mubr.f32.gmra.mrb[0].mxu0 %v1107
    %v1306 = vpop.f32.mrb[0].mxu0
    %v1307 = vadd.f32 0.0, %v1306
    %v1308 = vpop.f32.mrb[0].mxu0
    %1309 = vmatprep.mubr.f32.mxu0 0.0
    %1310 = vmatmul.mubr.f32.gmra.mrb[0].mxu0 %v1110
    %v1311 = vpop.f32.mrb[0].mxu0
    %v1312 = vadd.f32 0.0, %v1311
    %v1313 = vpop.f32.mrb[0].mxu0
    %1314 = vmatprep.mubr.f32.mxu0 0.0
    %1315 = vmatmul.mubr.f32.gmra.mrb[0].mxu0 %v1113
    %v1316 = vpop.f32.mrb[0].mxu0
    %v1317 = vadd.f32 0.0, %v1316
    %v1318 = vpop.f32.mrb[0].mxu0
    %1319 = vmatprep.mubr.f32.mxu0 0.0
    %1320 = vmatmul.mubr.f32.gmra.mrb[0].mxu0 %v1116
    %v1321 = vpop.f32.mrb[0].mxu0
    %v1322 = vadd.f32 0.0, %v1321
    %v1323 = vpop.f32.mrb[0].mxu0
    %1324 = vmatprep.mubr.f32.mxu0 0.0
    %1325 = vmatmul.mubr.f32.gmra.mrb[0].mxu0 %v1119
    %v1326 = vpop.f32.mrb[0].mxu0
    %v1327 = vadd.f32 0.0, %v1326
    %v1328 = vpop.f32.mrb[0].mxu0
    %1329 = vmatprep.mubr.f32.mxu0 0.0
    %1330 = vmatmul.mubr.f32.gmra.mrb[0].mxu0 %v1122
    %v1331 = vpop.f32.mrb[0].mxu0
    %v1332 = vadd.f32 0.0, %v1331
    %v1333 = vpop.f32.mrb[0].mxu0
    %1334 = vmatprep.mubr.f32.mxu0 0.0
    %1335 = vmatmul.mubr.f32.gmra.mrb[0].mxu0 %v1125
    %v1336 = vpop.f32.mrb[0].mxu0
    %v1337 = vadd.f32 0.0, %v1336
    %v1338 = vpop.f32.mrb[0].mxu0
    %1339 = vmatprep.mubr.f32.mxu0 0.0
    %1340 = vmatmul.mubr.f32.gmra.mrb[0].mxu0 %v1128
    %v1341 = vpop.f32.mrb[0].mxu0
    %v1342 = vadd.f32 0.0, %v1341
    %v1343 = vpop.f32.mrb[0].mxu0
    %1344 = vmatprep.mubr.f32.mxu0 0.0
    %1345 = vmatmul.mubr.f32.gmra.mrb[0].mxu0 %v1131
    %v1346 = vpop.f32.mrb[0].mxu0
    %v1347 = vadd.f32 0.0, %v1346
    %v1348 = vpop.f32.mrb[0].mxu0
    %1349 = vmatprep.mubr.f32.mxu0 0.0
    %1350 = vmatmul.mubr.f32.gmra.mrb[0].mxu0 %v1134
    %v1351 = vpop.f32.mrb[0].mxu0
    %v1352 = vadd.f32 0.0, %v1351
    %v1353 = vpop.f32.mrb[0].mxu0
    %1354 = vmatprep.mubr.f32.mxu0 0.0
    %1355 = vmatmul.mubr.f32.gmra.mrb[0].mxu0 %v1137
    %v1356 = vpop.f32.mrb[0].mxu0
    %v1357 = vadd.f32 0.0, %v1356
    %v1358 = vpop.f32.mrb[0].mxu0
    %1359 = vmatprep.mubr.f32.mxu0 0.0
    %1360 = vmatmul.mubr.f32.gmra.mrb[0].mxu0 %v1140
    %v1361 = vpop.f32.mrb[0].mxu0
    %v1362 = vadd.f32 0.0, %v1361
    %v1363 = vpop.f32.mrb[0].mxu0
    %1364 = vmatprep.mubr.f32.mxu0 0.0
    %1365 = vmatmul.mubr.f32.gmra.mrb[0].mxu0 %v1143
    %v1366 = vpop.f32.mrb[0].mxu0
    %v1367 = vadd.f32 0.0, %v1366
    %v1368 = vpop.f32.mrb[0].mxu0
    %1369 = vdwg.mxu0
    %v1370 = vsel %vm948, 0.0, 0
    %1372 = vmatprep.subr.mxu0 0.0
    %1373 = vmatpush1.msra.mxu0 %v1044
    %1374 = vmatprep.subr.mxu0 0.0
    %1375 = vmatpush1.msra.mxu0 %v1045
    %1376 = vmatprep.subr.mxu0 0.0
    %1377 = vmatpush1.msra.mxu0 0.0
    %1378 = vmatprep.subr.mxu0 0.0
    %1379 = vmatpush1.msra.mxu0 0.0
    %1380 = vmatprep.subr.mxu0 0.0
    %1381 = vmatpush1.msra.mxu0 0.0
    %1382 = vmatprep.subr.mxu0 0.0
    %1383 = vmatpush1.msra.mxu0 0.0
    %1384 = vmatprep.subr.mxu0 0.0
    %1385 = vmatpush1.msra.mxu0 0.0
    %1386 = vmatprep.subr.mxu0 0.0
    %1387 = vmatpush1.msra.mxu0 0.0
    %1388 = vmatprep.subr.mxu0 0.0
    %1389 = vmatpush1.msra.mxu0 0.0
    %1390 = vmatprep.subr.mxu0 0.0
    %1391 = vmatpush1.msra.mxu0 0.0
    %1392 = vmatprep.subr.mxu0 0.0
    %1393 = vmatpush1.msra.mxu0 0.0
    %1394 = vmatprep.subr.mxu0 0.0
    %1395 = vmatpush1.msra.mxu0 0.0
    %1396 = vmatprep.subr.mxu0 0.0
    %1397 = vmatpush1.msra.mxu0 0.0
    %1398 = vmatprep.subr.mxu0 0.0
    %1399 = vmatpush1.msra.mxu0 0.0
    %1400 = vmatprep.subr.mxu0 0.0
    %1401 = vmatpush1.msra.mxu0 0.0
    %1402 = vmatprep.subr.mxu0 0.0
    %1403 = vmatpush1.msra.mxu0 0.0
    %1404 = vmatprep.subr.mxu0 0.0
    %1405 = vmatpush1.msra.mxu0 0.0
    %1406 = vmatprep.subr.mxu0 0.0
    %1407 = vmatpush1.msra.mxu0 0.0
    %1408 = vmatprep.subr.mxu0 0.0
    %1409 = vmatpush1.msra.mxu0 0.0
    %1410 = vmatprep.subr.mxu0 0.0
    %1411 = vmatpush1.msra.mxu0 0.0
    %1412 = vmatprep.subr.mxu0 0.0
    %1413 = vmatpush1.msra.mxu0 0.0
    %1414 = vmatprep.subr.mxu0 0.0
    %1415 = vmatpush1.msra.mxu0 0.0
    %1416 = vmatprep.subr.mxu0 0.0
    %1417 = vmatpush1.msra.mxu0 0.0
    %1418 = vmatprep.subr.mxu0 0.0
    %1419 = vmatpush1.msra.mxu0 0.0
    %1420 = vmatprep.subr.mxu0 0.0
    %1421 = vmatpush1.msra.mxu0 0.0
    %1422 = vmatprep.subr.mxu0 0.0
    %1423 = vmatpush1.msra.mxu0 0.0
    %1424 = vmatprep.subr.mxu0 0.0
    %1425 = vmatpush1.msra.mxu0 0.0
    %1426 = vmatprep.subr.mxu0 0.0
    %1427 = vmatpush1.msra.mxu0 0.0
    %1428 = vmatprep.subr.mxu0 0.0
    %1429 = vmatpush1.msra.mxu0 0.0
    %1430 = vmatprep.subr.mxu0 0.0
    %1431 = vmatpush1.msra.mxu0 0.0
    %1432 = vmatprep.subr.mxu0 0.0
    %1433 = vmatpush1.msra.mxu0 0.0
    %1434 = vmatprep.subr.mxu0 0.0
    %1435 = vmatpush1.msra.mxu0 0.0
    %1436 = vmatprep.mubr.f32.mxu0 0.0
    %1437 = vmatmul.mubr.f32.gmra.mrb[0].mxu0 %v1370
    %v1438 = vpop.f32.mrb[0].mxu0
    %v1439 = vadd.f32 %v1212, %v1438
    %v1440 = vpop.f32.mrb[0].mxu0
    %1441 = vmatprep.mubr.f32.mxu0 0.0
    %1442 = vmatmul.mubr.f32.gmra.mrb[0].mxu0 %v1050
    %v1443 = vpop.f32.mrb[0].mxu0
    %v1444 = vadd.f32 %v1217, %v1443
    %v1445 = vpop.f32.mrb[0].mxu0
    %1446 = vmatprep.mubr.f32.mxu0 0.0
    %1447 = vmatmul.mubr.f32.gmra.mrb[0].mxu0 %v1053
    %v1448 = vpop.f32.mrb[0].mxu0
    %v1449 = vadd.f32 %v1222, %v1448
    %v1450 = vpop.f32.mrb[0].mxu0
    %1451 = vmatprep.mubr.f32.mxu0 0.0
    %1452 = vmatmul.mubr.f32.gmra.mrb[0].mxu0 %v1056
    %v1453 = vpop.f32.mrb[0].mxu0
    %v1454 = vadd.f32 %v1227, %v1453
    %v1455 = vpop.f32.mrb[0].mxu0
    %1456 = vmatprep.mubr.f32.mxu0 0.0
    %1457 = vmatmul.mubr.f32.gmra.mrb[0].mxu0 %v1059
    %v1458 = vpop.f32.mrb[0].mxu0
    %v1459 = vadd.f32 %v1232, %v1458
    %v1460 = vpop.f32.mrb[0].mxu0
    %1461 = vmatprep.mubr.f32.mxu0 0.0
    %1462 = vmatmul.mubr.f32.gmra.mrb[0].mxu0 %v1062
    %v1463 = vpop.f32.mrb[0].mxu0
    %v1464 = vadd.f32 %v1237, %v1463
    %v1465 = vpop.f32.mrb[0].mxu0
    %1466 = vmatprep.mubr.f32.mxu0 0.0
    %1467 = vmatmul.mubr.f32.gmra.mrb[0].mxu0 %v1065
    %v1468 = vpop.f32.mrb[0].mxu0
    %v1469 = vadd.f32 %v1242, %v1468
    %v1470 = vpop.f32.mrb[0].mxu0
    %1471 = vmatprep.mubr.f32.mxu0 0.0
    %1472 = vmatmul.mubr.f32.gmra.mrb[0].mxu0 %v1068
    %v1473 = vpop.f32.mrb[0].mxu0
    %v1474 = vadd.f32 %v1247, %v1473
    %v1475 = vpop.f32.mrb[0].mxu0
    %1476 = vmatprep.mubr.f32.mxu0 0.0
    %1477 = vmatmul.mubr.f32.gmra.mrb[0].mxu0 %v1071
    %v1478 = vpop.f32.mrb[0].mxu0
    %v1479 = vadd.f32 %v1252, %v1478
    %v1480 = vpop.f32.mrb[0].mxu0
    %1481 = vmatprep.mubr.f32.mxu0 0.0
    %1482 = vmatmul.mubr.f32.gmra.mrb[0].mxu0 %v1074
    %v1483 = vpop.f32.mrb[0].mxu0
    %v1484 = vadd.f32 %v1257, %v1483
    %v1485 = vpop.f32.mrb[0].mxu0
    %1486 = vmatprep.mubr.f32.mxu0 0.0
    %1487 = vmatmul.mubr.f32.gmra.mrb[0].mxu0 %v1077
    %v1488 = vpop.f32.mrb[0].mxu0
    %v1489 = vadd.f32 %v1262, %v1488
    %v1490 = vpop.f32.mrb[0].mxu0
    %1491 = vmatprep.mubr.f32.mxu0 0.0
    %1492 = vmatmul.mubr.f32.gmra.mrb[0].mxu0 %v1080
    %v1493 = vpop.f32.mrb[0].mxu0
    %v1494 = vadd.f32 %v1267, %v1493
    %v1495 = vpop.f32.mrb[0].mxu0
    %1496 = vmatprep.mubr.f32.mxu0 0.0
    %1497 = vmatmul.mubr.f32.gmra.mrb[0].mxu0 %v1083
    %v1498 = vpop.f32.mrb[0].mxu0
    %v1499 = vadd.f32 %v1272, %v1498
    %v1500 = vpop.f32.mrb[0].mxu0
    %1501 = vmatprep.mubr.f32.mxu0 0.0
    %1502 = vmatmul.mubr.f32.gmra.mrb[0].mxu0 %v1086
    %v1503 = vpop.f32.mrb[0].mxu0
    %v1504 = vadd.f32 %v1277, %v1503
    %v1505 = vpop.f32.mrb[0].mxu0
    %1506 = vmatprep.mubr.f32.mxu0 0.0
    %1507 = vmatmul.mubr.f32.gmra.mrb[0].mxu0 %v1089
    %v1508 = vpop.f32.mrb[0].mxu0
    %v1509 = vadd.f32 %v1282, %v1508
    %v1510 = vpop.f32.mrb[0].mxu0
    %1511 = vmatprep.mubr.f32.mxu0 0.0
    %1512 = vmatmul.mubr.f32.gmra.mrb[0].mxu0 %v1092
    %v1513 = vpop.f32.mrb[0].mxu0
    %v1514 = vadd.f32 %v1287, %v1513
    %v1515 = vpop.f32.mrb[0].mxu0
    %1516 = vmatprep.mubr.f32.mxu0 0.0
    %1517 = vmatmul.mubr.f32.gmra.mrb[0].mxu0 %v1095
    %v1518 = vpop.f32.mrb[0].mxu0
    %v1519 = vadd.f32 %v1292, %v1518
    %v1520 = vpop.f32.mrb[0].mxu0
    %1521 = vmatprep.mubr.f32.mxu0 0.0
    %1522 = vmatmul.mubr.f32.gmra.mrb[0].mxu0 %v1098
    %v1523 = vpop.f32.mrb[0].mxu0
    %v1524 = vadd.f32 %v1297, %v1523
    %v1525 = vpop.f32.mrb[0].mxu0
    %1526 = vmatprep.mubr.f32.mxu0 0.0
    %1527 = vmatmul.mubr.f32.gmra.mrb[0].mxu0 %v1101
    %v1528 = vpop.f32.mrb[0].mxu0
    %v1529 = vadd.f32 %v1302, %v1528
    %v1530 = vpop.f32.mrb[0].mxu0
    %1531 = vmatprep.mubr.f32.mxu0 0.0
    %1532 = vmatmul.mubr.f32.gmra.mrb[0].mxu0 %v1104
    %v1533 = vpop.f32.mrb[0].mxu0
    %v1534 = vadd.f32 %v1307, %v1533
    %v1535 = vpop.f32.mrb[0].mxu0
    %1536 = vmatprep.mubr.f32.mxu0 0.0
    %1537 = vmatmul.mubr.f32.gmra.mrb[0].mxu0 %v1107
    %v1538 = vpop.f32.mrb[0].mxu0
    %v1539 = vadd.f32 %v1312, %v1538
    %v1540 = vpop.f32.mrb[0].mxu0
    %1541 = vmatprep.mubr.f32.mxu0 0.0
    %1542 = vmatmul.mubr.f32.gmra.mrb[0].mxu0 %v1110
    %v1543 = vpop.f32.mrb[0].mxu0
    %v1544 = vadd.f32 %v1317, %v1543
    %v1545 = vpop.f32.mrb[0].mxu0
    %1546 = vmatprep.mubr.f32.mxu0 0.0
    %1547 = vmatmul.mubr.f32.gmra.mrb[0].mxu0 %v1113
    %v1548 = vpop.f32.mrb[0].mxu0
    %v1549 = vadd.f32 %v1322, %v1548
    %v1550 = vpop.f32.mrb[0].mxu0
    %1551 = vmatprep.mubr.f32.mxu0 0.0
    %1552 = vmatmul.mubr.f32.gmra.mrb[0].mxu0 %v1116
    %v1553 = vpop.f32.mrb[0].mxu0
    %v1554 = vadd.f32 %v1327, %v1553
    %v1555 = vpop.f32.mrb[0].mxu0
    %1556 = vmatprep.mubr.f32.mxu0 0.0
    %1557 = vmatmul.mubr.f32.gmra.mrb[0].mxu0 %v1119
    %v1558 = vpop.f32.mrb[0].mxu0
    %v1559 = vadd.f32 %v1332, %v1558
    %v1560 = vpop.f32.mrb[0].mxu0
    %1561 = vmatprep.mubr.f32.mxu0 0.0
    %1562 = vmatmul.mubr.f32.gmra.mrb[0].mxu0 %v1122
    %v1563 = vpop.f32.mrb[0].mxu0
    %v1564 = vadd.f32 %v1337, %v1563
    %v1565 = vpop.f32.mrb[0].mxu0
    %1566 = vmatprep.mubr.f32.mxu0 0.0
    %1567 = vmatmul.mubr.f32.gmra.mrb[0].mxu0 %v1125
    %v1568 = vpop.f32.mrb[0].mxu0
    %v1569 = vadd.f32 %v1342, %v1568
    %v1570 = vpop.f32.mrb[0].mxu0
    %1571 = vmatprep.mubr.f32.mxu0 0.0
    %1572 = vmatmul.mubr.f32.gmra.mrb[0].mxu0 %v1128
    %v1573 = vpop.f32.mrb[0].mxu0
    %v1574 = vadd.f32 %v1347, %v1573
    %v1575 = vpop.f32.mrb[0].mxu0
    %1576 = vmatprep.mubr.f32.mxu0 0.0
    %1577 = vmatmul.mubr.f32.gmra.mrb[0].mxu0 %v1131
    %v1578 = vpop.f32.mrb[0].mxu0
    %v1579 = vadd.f32 %v1352, %v1578
    %v1580 = vpop.f32.mrb[0].mxu0
    %1581 = vmatprep.mubr.f32.mxu0 0.0
    %1582 = vmatmul.mubr.f32.gmra.mrb[0].mxu0 %v1134
    %v1583 = vpop.f32.mrb[0].mxu0
    %v1584 = vadd.f32 %v1357, %v1583
    %v1585 = vpop.f32.mrb[0].mxu0
    %1586 = vmatprep.mubr.f32.mxu0 0.0
    %1587 = vmatmul.mubr.f32.gmra.mrb[0].mxu0 %v1137
    %v1588 = vpop.f32.mrb[0].mxu0
    %v1589 = vadd.f32 %v1362, %v1588
    %v1590 = vpop.f32.mrb[0].mxu0
    %1591 = vmatprep.mubr.f32.mxu0 0.0
    %1592 = vmatmul.mubr.f32.gmra.mrb[0].mxu0 %v1140
    %v1593 = vpop.f32.mrb[0].mxu0
    %v1594 = vadd.f32 %v1367, %v1593
    %v1595 = vpop.f32.mrb[0].mxu0
    %1596 = vdwg.mxu0
    %s1597 = scalar_lea.vmem [#allocation5], 32
    %v1598 = vld [vmem:[%s1597] sm:$0xff]
    %v1599 = vld [vmem:[%s1597 + $0x8] sm:$0xff]
    %1600 = vmatprep.subr.mxu0 0.0
    %1601 = vmatpush1.msra.mxu0 %v1598
    %1602 = vmatprep.subr.mxu0 0.0
    %1603 = vmatpush1.msra.mxu0 %v1599
    %1604 = vmatprep.subr.mxu0 0.0
    %1605 = vmatpush1.msra.mxu0 0.0
    %1606 = vmatprep.subr.mxu0 0.0
    %1607 = vmatpush1.msra.mxu0 0.0
    %1608 = vmatprep.subr.mxu0 0.0
    %1609 = vmatpush1.msra.mxu0 0.0
    %1610 = vmatprep.subr.mxu0 0.0
    %1611 = vmatpush1.msra.mxu0 0.0
    %1612 = vmatprep.subr.mxu0 0.0
    %1613 = vmatpush1.msra.mxu0 0.0
    %1614 = vmatprep.subr.mxu0 0.0
    %1615 = vmatpush1.msra.mxu0 0.0
    %1616 = vmatprep.subr.mxu0 0.0
    %1617 = vmatpush1.msra.mxu0 0.0
    %1618 = vmatprep.subr.mxu0 0.0
    %1619 = vmatpush1.msra.mxu0 0.0
    %1620 = vmatprep.subr.mxu0 0.0
    %1621 = vmatpush1.msra.mxu0 0.0
    %1622 = vmatprep.subr.mxu0 0.0
    %1623 = vmatpush1.msra.mxu0 0.0
    %1624 = vmatprep.subr.mxu0 0.0
    %1625 = vmatpush1.msra.mxu0 0.0
    %1626 = vmatprep.subr.mxu0 0.0
    %1627 = vmatpush1.msra.mxu0 0.0
    %1628 = vmatprep.subr.mxu0 0.0
    %1629 = vmatpush1.msra.mxu0 0.0
    %1630 = vmatprep.subr.mxu0 0.0
    %1631 = vmatpush1.msra.mxu0 0.0
    %1632 = vmatprep.subr.mxu0 0.0
    %1633 = vmatpush1.msra.mxu0 0.0
    %1634 = vmatprep.subr.mxu0 0.0
    %1635 = vmatpush1.msra.mxu0 0.0
    %1636 = vmatprep.subr.mxu0 0.0
    %1637 = vmatpush1.msra.mxu0 0.0
    %1638 = vmatprep.subr.mxu0 0.0
    %1639 = vmatpush1.msra.mxu0 0.0
    %1640 = vmatprep.subr.mxu0 0.0
    %1641 = vmatpush1.msra.mxu0 0.0
    %1642 = vmatprep.subr.mxu0 0.0
    %1643 = vmatpush1.msra.mxu0 0.0
    %1644 = vmatprep.subr.mxu0 0.0
    %1645 = vmatpush1.msra.mxu0 0.0
    %1646 = vmatprep.subr.mxu0 0.0
    %1647 = vmatpush1.msra.mxu0 0.0
    %1648 = vmatprep.subr.mxu0 0.0
    %1649 = vmatpush1.msra.mxu0 0.0
    %1650 = vmatprep.subr.mxu0 0.0
    %1651 = vmatpush1.msra.mxu0 0.0
    %1652 = vmatprep.subr.mxu0 0.0
    %1653 = vmatpush1.msra.mxu0 0.0
    %1654 = vmatprep.subr.mxu0 0.0
    %1655 = vmatpush1.msra.mxu0 0.0
    %1656 = vmatprep.subr.mxu0 0.0
    %1657 = vmatpush1.msra.mxu0 0.0
    %1658 = vmatprep.subr.mxu0 0.0
    %1659 = vmatpush1.msra.mxu0 0.0
    %1660 = vmatprep.subr.mxu0 0.0
    %1661 = vmatpush1.msra.mxu0 0.0
    %1662 = vmatprep.subr.mxu0 0.0
    %1663 = vmatpush1.msra.mxu0 0.0
    %1664 = vmatprep.mubr.f32.mxu0 0.0
    %1665 = vmatmul.mubr.f32.gmra.mrb[0].mxu0 %v1053
    %v1666 = vpop.f32.mrb[0].mxu0
    %v1667 = vadd.f32 0.0, %v1666
    %v1668 = vpop.f32.mrb[0].mxu0
    %1669 = vmatprep.mubr.f32.mxu0 0.0
    %1670 = vmatmul.mubr.f32.gmra.mrb[0].mxu0 %v1056
    %v1671 = vpop.f32.mrb[0].mxu0
    %v1672 = vadd.f32 0.0, %v1671
    %v1673 = vpop.f32.mrb[0].mxu0
    %1674 = vmatprep.mubr.f32.mxu0 0.0
    %1675 = vmatmul.mubr.f32.gmra.mrb[0].mxu0 %v1059
    %v1676 = vpop.f32.mrb[0].mxu0
    %v1677 = vadd.f32 0.0, %v1676
    %v1678 = vpop.f32.mrb[0].mxu0
    %1679 = vmatprep.mubr.f32.mxu0 0.0
    %1680 = vmatmul.mubr.f32.gmra.mrb[0].mxu0 %v1062
    %v1681 = vpop.f32.mrb[0].mxu0
    %v1682 = vadd.f32 0.0, %v1681
    %v1683 = vpop.f32.mrb[0].mxu0
    %1684 = vmatprep.mubr.f32.mxu0 0.0
    %1685 = vmatmul.mubr.f32.gmra.mrb[0].mxu0 %v1065
    %v1686 = vpop.f32.mrb[0].mxu0
    %v1687 = vadd.f32 0.0, %v1686
    %v1688 = vpop.f32.mrb[0].mxu0
    %1689 = vmatprep.mubr.f32.mxu0 0.0
    %1690 = vmatmul.mubr.f32.gmra.mrb[0].mxu0 %v1068
    %v1691 = vpop.f32.mrb[0].mxu0
    %v1692 = vadd.f32 0.0, %v1691
    %v1693 = vpop.f32.mrb[0].mxu0
    %1694 = vmatprep.mubr.f32.mxu0 0.0
    %1695 = vmatmul.mubr.f32.gmra.mrb[0].mxu0 %v1071
    %v1696 = vpop.f32.mrb[0].mxu0
    %v1697 = vadd.f32 0.0, %v1696
    %v1698 = vpop.f32.mrb[0].mxu0
    %1699 = vmatprep.mubr.f32.mxu0 0.0
    %1700 = vmatmul.mubr.f32.gmra.mrb[0].mxu0 %v1074
    %v1701 = vpop.f32.mrb[0].mxu0
    %v1702 = vadd.f32 0.0, %v1701
    %v1703 = vpop.f32.mrb[0].mxu0
    %1704 = vmatprep.mubr.f32.mxu0 0.0
    %1705 = vmatmul.mubr.f32.gmra.mrb[0].mxu0 %v1077
    %v1706 = vpop.f32.mrb[0].mxu0
    %v1707 = vadd.f32 0.0, %v1706
    %v1708 = vpop.f32.mrb[0].mxu0
    %1709 = vmatprep.mubr.f32.mxu0 0.0
    %1710 = vmatmul.mubr.f32.gmra.mrb[0].mxu0 %v1080
    %v1711 = vpop.f32.mrb[0].mxu0
    %v1712 = vadd.f32 0.0, %v1711
    %v1713 = vpop.f32.mrb[0].mxu0
    %1714 = vmatprep.mubr.f32.mxu0 0.0
    %1715 = vmatmul.mubr.f32.gmra.mrb[0].mxu0 %v1083
    %v1716 = vpop.f32.mrb[0].mxu0
    %v1717 = vadd.f32 0.0, %v1716
    %v1718 = vpop.f32.mrb[0].mxu0
    %1719 = vmatprep.mubr.f32.mxu0 0.0
    %1720 = vmatmul.mubr.f32.gmra.mrb[0].mxu0 %v1086
    %v1721 = vpop.f32.mrb[0].mxu0
    %v1722 = vadd.f32 0.0, %v1721
    %v1723 = vpop.f32.mrb[0].mxu0
    %1724 = vmatprep.mubr.f32.mxu0 0.0
    %1725 = vmatmul.mubr.f32.gmra.mrb[0].mxu0 %v1089
    %v1726 = vpop.f32.mrb[0].mxu0
    %v1727 = vadd.f32 0.0, %v1726
    %v1728 = vpop.f32.mrb[0].mxu0
    %1729 = vmatprep.mubr.f32.mxu0 0.0
    %1730 = vmatmul.mubr.f32.gmra.mrb[0].mxu0 %v1092
    %v1731 = vpop.f32.mrb[0].mxu0
    %v1732 = vadd.f32 0.0, %v1731
    %v1733 = vpop.f32.mrb[0].mxu0
    %1734 = vmatprep.mubr.f32.mxu0 0.0
    %1735 = vmatmul.mubr.f32.gmra.mrb[0].mxu0 %v1095
    %v1736 = vpop.f32.mrb[0].mxu0
    %v1737 = vadd.f32 0.0, %v1736
    %v1738 = vpop.f32.mrb[0].mxu0
    %1739 = vmatprep.mubr.f32.mxu0 0.0
    %1740 = vmatmul.mubr.f32.gmra.mrb[0].mxu0 %v1098
    %v1741 = vpop.f32.mrb[0].mxu0
    %v1742 = vadd.f32 0.0, %v1741
    %v1743 = vpop.f32.mrb[0].mxu0
    %1744 = vmatprep.mubr.f32.mxu0 0.0
    %1745 = vmatmul.mubr.f32.gmra.mrb[0].mxu0 %v1101
    %v1746 = vpop.f32.mrb[0].mxu0
    %v1747 = vadd.f32 0.0, %v1746
    %v1748 = vpop.f32.mrb[0].mxu0
    %1749 = vmatprep.mubr.f32.mxu0 0.0
    %1750 = vmatmul.mubr.f32.gmra.mrb[0].mxu0 %v1104
    %v1751 = vpop.f32.mrb[0].mxu0
    %v1752 = vadd.f32 0.0, %v1751
    %v1753 = vpop.f32.mrb[0].mxu0
    %1754 = vmatprep.mubr.f32.mxu0 0.0
    %1755 = vmatmul.mubr.f32.gmra.mrb[0].mxu0 %v1107
    %v1756 = vpop.f32.mrb[0].mxu0
    %v1757 = vadd.f32 0.0, %v1756
    %v1758 = vpop.f32.mrb[0].mxu0
    %1759 = vmatprep.mubr.f32.mxu0 0.0
    %1760 = vmatmul.mubr.f32.gmra.mrb[0].mxu0 %v1110
    %v1761 = vpop.f32.mrb[0].mxu0
    %v1762 = vadd.f32 0.0, %v1761
    %v1763 = vpop.f32.mrb[0].mxu0
    %1764 = vmatprep.mubr.f32.mxu0 0.0
    %1765 = vmatmul.mubr.f32.gmra.mrb[0].mxu0 %v1113
    %v1766 = vpop.f32.mrb[0].mxu0
    %v1767 = vadd.f32 0.0, %v1766
    %v1768 = vpop.f32.mrb[0].mxu0
    %1769 = vmatprep.mubr.f32.mxu0 0.0
    %1770 = vmatmul.mubr.f32.gmra.mrb[0].mxu0 %v1116
    %v1771 = vpop.f32.mrb[0].mxu0
    %v1772 = vadd.f32 0.0, %v1771
    %v1773 = vpop.f32.mrb[0].mxu0
    %1774 = vmatprep.mubr.f32.mxu0 0.0
    %1775 = vmatmul.mubr.f32.gmra.mrb[0].mxu0 %v1119
    %v1776 = vpop.f32.mrb[0].mxu0
    %v1777 = vadd.f32 0.0, %v1776
    %v1778 = vpop.f32.mrb[0].mxu0
    %1779 = vmatprep.mubr.f32.mxu0 0.0
    %1780 = vmatmul.mubr.f32.gmra.mrb[0].mxu0 %v1122
    %v1781 = vpop.f32.mrb[0].mxu0
    %v1782 = vadd.f32 0.0, %v1781
    %v1783 = vpop.f32.mrb[0].mxu0
    %1784 = vmatprep.mubr.f32.mxu0 0.0
    %1785 = vmatmul.mubr.f32.gmra.mrb[0].mxu0 %v1125
    %v1786 = vpop.f32.mrb[0].mxu0
    %v1787 = vadd.f32 0.0, %v1786
    %v1788 = vpop.f32.mrb[0].mxu0
    %1789 = vmatprep.mubr.f32.mxu0 0.0
    %1790 = vmatmul.mubr.f32.gmra.mrb[0].mxu0 %v1128
    %v1791 = vpop.f32.mrb[0].mxu0
    %v1792 = vadd.f32 0.0, %v1791
    %v1793 = vpop.f32.mrb[0].mxu0
    %1794 = vmatprep.mubr.f32.mxu0 0.0
    %1795 = vmatmul.mubr.f32.gmra.mrb[0].mxu0 %v1131
    %v1796 = vpop.f32.mrb[0].mxu0
    %v1797 = vadd.f32 0.0, %v1796
    %v1798 = vpop.f32.mrb[0].mxu0
    %1799 = vmatprep.mubr.f32.mxu0 0.0
    %1800 = vmatmul.mubr.f32.gmra.mrb[0].mxu0 %v1134
    %v1801 = vpop.f32.mrb[0].mxu0
    %v1802 = vadd.f32 0.0, %v1801
    %v1803 = vpop.f32.mrb[0].mxu0
    %1804 = vmatprep.mubr.f32.mxu0 0.0
    %1805 = vmatmul.mubr.f32.gmra.mrb[0].mxu0 %v1137
    %v1806 = vpop.f32.mrb[0].mxu0
    %v1807 = vadd.f32 0.0, %v1806
    %v1808 = vpop.f32.mrb[0].mxu0
    %1809 = vmatprep.mubr.f32.mxu0 0.0
    %1810 = vmatmul.mubr.f32.gmra.mrb[0].mxu0 %v1140
    %v1811 = vpop.f32.mrb[0].mxu0
    %v1812 = vadd.f32 0.0, %v1811
    %v1813 = vpop.f32.mrb[0].mxu0
    %1814 = vmatprep.mubr.f32.mxu0 0.0
    %1815 = vmatmul.mubr.f32.gmra.mrb[0].mxu0 %v1143
    %v1816 = vpop.f32.mrb[0].mxu0
    %v1817 = vadd.f32 0.0, %v1816
    %v1818 = vpop.f32.mrb[0].mxu0
    %1819 = vmatprep.mubr.f32.mxu0 0.0
    %1820 = vmatmul.mubr.f32.gmra.mrb[0].mxu0 %v1370
    %v1821 = vpop.f32.mrb[0].mxu0
    %v1822 = vadd.f32 0.0, %v1821
    %v1823 = vpop.f32.mrb[0].mxu0
    %1824 = vdwg.mxu0
    %v1825 = vadd.f32 %v1439, %v1667
    %v1826 = vadd.f32 %v1444, %v1672
    %v1827 = vadd.f32 %v1449, %v1677
    %v1828 = vadd.f32 %v1454, %v1682
    %v1829 = vadd.f32 %v1459, %v1687
    %v1830 = vadd.f32 %v1464, %v1692
    %v1831 = vadd.f32 %v1469, %v1697
    %v1832 = vadd.f32 %v1474, %v1702
    %v1833 = vadd.f32 %v1479, %v1707
    %v1834 = vadd.f32 %v1484, %v1712
    %v1835 = vadd.f32 %v1489, %v1717
    %v1836 = vadd.f32 %v1494, %v1722
    %v1837 = vadd.f32 %v1499, %v1727
    %v1838 = vadd.f32 %v1504, %v1732
    %v1839 = vadd.f32 %v1509, %v1737
    %v1840 = vadd.f32 %v1514, %v1742
    %v1841 = vadd.f32 %v1519, %v1747
    %v1842 = vadd.f32 %v1524, %v1752
    %v1843 = vadd.f32 %v1529, %v1757
    %v1844 = vadd.f32 %v1534, %v1762
    %v1845 = vadd.f32 %v1539, %v1767
    %v1846 = vadd.f32 %v1544, %v1772
    %v1847 = vadd.f32 %v1549, %v1777
    %v1848 = vadd.f32 %v1554, %v1782
    %v1849 = vadd.f32 %v1559, %v1787
    %v1850 = vadd.f32 %v1564, %v1792
    %v1851 = vadd.f32 %v1569, %v1797
    %v1852 = vadd.f32 %v1574, %v1802
    %v1853 = vadd.f32 %v1579, %v1807
    %v1854 = vadd.f32 %v1584, %v1812
    %v1855 = vadd.f32 %v1589, %v1817
    %v1856 = vadd.f32 %v1594, %v1822
    %v1857 = vld [vmem:[%s4] sm:$0x1]
    %v1859 = vlaneseq
    %v1860 = vshrl.u32 %v1859, 7
    %v1861 = vsub.s32 0, %v1860
    %v1862 = vrot.slane %v1857, %v1861
    %v1864 = vadd.f32 %v1825, %v1862
    %v1865 = vadd.f32 %v1826, %v1862
    %v1866 = vadd.f32 %v1827, %v1862
    %v1867 = vadd.f32 %v1828, %v1862
    %v1868 = vadd.f32 %v1829, %v1862
    %v1869 = vadd.f32 %v1830, %v1862
    %v1870 = vadd.f32 %v1831, %v1862
    %v1871 = vadd.f32 %v1832, %v1862
    %v1872 = vadd.f32 %v1833, %v1862
    %v1873 = vadd.f32 %v1834, %v1862
    %v1874 = vadd.f32 %v1835, %v1862
    %v1875 = vadd.f32 %v1836, %v1862
    %v1876 = vadd.f32 %v1837, %v1862
    %v1877 = vadd.f32 %v1838, %v1862
    %v1878 = vadd.f32 %v1839, %v1862
    %v1879 = vadd.f32 %v1840, %v1862
    %v1880 = vadd.f32 %v1841, %v1862
    %v1881 = vadd.f32 %v1842, %v1862
    %v1882 = vadd.f32 %v1843, %v1862
    %v1883 = vadd.f32 %v1844, %v1862
    %v1884 = vadd.f32 %v1845, %v1862
    %v1885 = vadd.f32 %v1846, %v1862
    %v1886 = vadd.f32 %v1847, %v1862
    %v1887 = vadd.f32 %v1848, %v1862
    %v1888 = vadd.f32 %v1849, %v1862
    %v1889 = vadd.f32 %v1850, %v1862
    %v1890 = vadd.f32 %v1851, %v1862
    %v1891 = vadd.f32 %v1852, %v1862
    %v1892 = vadd.f32 %v1853, %v1862
    %v1893 = vadd.f32 %v1854, %v1862
    %v1894 = vadd.f32 %v1855, %v1862
    %v1895 = vadd.f32 %v1856, %v1862
    %v1896 = vmax.f32 %v1864, 0.0
    %v1897 = vmax.f32 %v1865, 0.0
    %v1898 = vmax.f32 %v1866, 0.0
    %v1899 = vmax.f32 %v1867, 0.0
    %v1900 = vmax.f32 %v1868, 0.0
    %v1901 = vmax.f32 %v1869, 0.0
    %v1902 = vmax.f32 %v1870, 0.0
    %v1903 = vmax.f32 %v1871, 0.0
    %v1904 = vmax.f32 %v1872, 0.0
    %v1905 = vmax.f32 %v1873, 0.0
    %v1906 = vmax.f32 %v1874, 0.0
    %v1907 = vmax.f32 %v1875, 0.0
    %v1908 = vmax.f32 %v1876, 0.0
    %v1909 = vmax.f32 %v1877, 0.0
    %v1910 = vmax.f32 %v1878, 0.0
    %v1911 = vmax.f32 %v1879, 0.0
    %v1912 = vmax.f32 %v1880, 0.0
    %v1913 = vmax.f32 %v1881, 0.0
    %v1914 = vmax.f32 %v1882, 0.0
    %v1915 = vmax.f32 %v1883, 0.0
    %v1916 = vmax.f32 %v1884, 0.0
    %v1917 = vmax.f32 %v1885, 0.0
    %v1918 = vmax.f32 %v1886, 0.0
    %v1919 = vmax.f32 %v1887, 0.0
    %v1920 = vmax.f32 %v1888, 0.0
    %v1921 = vmax.f32 %v1889, 0.0
    %v1922 = vmax.f32 %v1890, 0.0
    %v1923 = vmax.f32 %v1891, 0.0
    %v1924 = vmax.f32 %v1892, 0.0
    %v1925 = vmax.f32 %v1893, 0.0
    %v1926 = vmax.f32 %v1894, 0.0
    %v1927 = vmax.f32 %v1895, 0.0
    %v1928 = vmax.f32 %v1896, %v1897
    %vm1929 = vcmask 261120
    %1930 = vst.msk [vmem:[#allocation3] sm:$0xff] %vm1929, %v1928
    %v1931 = vmax.f32 %v1898, %v1899
    %1932 = vst.msk [vmem:[#allocation3 + $0x8] sm:$0xff] %vm1929, %v1931
    %v1933 = vmax.f32 %v1900, %v1901
    %1934 = vst.msk [vmem:[#allocation3 + $0x10] sm:$0xff] %vm1929, %v1933
    %v1935 = vmax.f32 %v1902, %v1903
    %1936 = vst.msk [vmem:[#allocation3 + $0x18] sm:$0xff] %vm1929, %v1935
    %v1937 = vmax.f32 %v1904, %v1905
    %1938 = vst.msk [vmem:[#allocation3 + $0x20] sm:$0xff] %vm1929, %v1937
    %v1939 = vmax.f32 %v1906, %v1907
    %1940 = vst.msk [vmem:[#allocation3 + $0x28] sm:$0xff] %vm1929, %v1939
    %v1941 = vmax.f32 %v1908, %v1909
    %1942 = vst.msk [vmem:[#allocation3 + $0x30] sm:$0xff] %vm1929, %v1941
    %v1943 = vmax.f32 %v1910, %v1911
    %1944 = vst.msk [vmem:[#allocation3 + $0x38] sm:$0xff] %vm1929, %v1943
    %v1945 = vmax.f32 %v1912, %v1913
    %1946 = vst.msk [vmem:[#allocation3 + $0x40] sm:$0xff] %vm1929, %v1945
    %v1947 = vmax.f32 %v1914, %v1915
    %1948 = vst.msk [vmem:[#allocation3 + $0x48] sm:$0xff] %vm1929, %v1947
    %v1949 = vmax.f32 %v1916, %v1917
    %1950 = vst.msk [vmem:[#allocation3 + $0x50] sm:$0xff] %vm1929, %v1949
    %v1951 = vmax.f32 %v1918, %v1919
    %1952 = vst.msk [vmem:[#allocation3 + $0x58] sm:$0xff] %vm1929, %v1951
    %v1953 = vmax.f32 %v1920, %v1921
    %1954 = vst.msk [vmem:[#allocation3 + $0x60] sm:$0xff] %vm1929, %v1953
    %v1955 = vmax.f32 %v1922, %v1923
    %1956 = vst.msk [vmem:[#allocation3 + $0x68] sm:$0xff] %vm1929, %v1955
    %v1957 = vmax.f32 %v1924, %v1925
    %1958 = vst.msk [vmem:[#allocation3 + $0x70] sm:$0xff] %vm1929, %v1957
    %v1959 = vmax.f32 %v1926, %v1927
    %1960 = vst.msk [vmem:[#allocation3 + $0x78] sm:$0xff] %vm1929, %v1959
    %v1961 = vld [vmem:[#allocation3] sm:$0xff]
    %v1962 = vld [vmem:[#allocation3 + $0x8] sm:$0xff]
    %v1963 = vld [vmem:[#allocation3 + $0x10] sm:$0xff]
    %v1964 = vld [vmem:[#allocation3 + $0x18] sm:$0xff]
    %v1965 = vld [vmem:[#allocation3 + $0x20] sm:$0xff]
    %v1966 = vld [vmem:[#allocation3 + $0x28] sm:$0xff]
    %v1967 = vld [vmem:[#allocation3 + $0x30] sm:$0xff]
    %v1968 = vld [vmem:[#allocation3 + $0x38] sm:$0xff]
    %v1969 = vld [vmem:[#allocation3 + $0x40] sm:$0xff]
    %v1970 = vld [vmem:[#allocation3 + $0x48] sm:$0xff]
    %v1971 = vld [vmem:[#allocation3 + $0x50] sm:$0xff]
    %v1972 = vld [vmem:[#allocation3 + $0x58] sm:$0xff]
    %v1973 = vld [vmem:[#allocation3 + $0x60] sm:$0xff]
    %v1974 = vld [vmem:[#allocation3 + $0x68] sm:$0xff]
    %v1975 = vld [vmem:[#allocation3 + $0x70] sm:$0xff]
    %v1976 = vld [vmem:[#allocation3 + $0x78] sm:$0xff]
    %v1977 = vld [vmem:[#allocation8] sm:$0xff]
    %v1978 = vld [vmem:[#allocation8 + $0x8] sm:$0xff]
    %v1979 = vld [vmem:[#allocation8 + $0x10] sm:$0xff]
    %v1980 = vld [vmem:[#allocation8 + $0x18] sm:$0xff]
    %s1981 = scalar_lea.vmem [#allocation8], 32
    %v1982 = vld [vmem:[%s1981] sm:$0xff]
    %v1983 = vld [vmem:[%s1981 + $0x8] sm:$0xff]
    %v1984 = vld [vmem:[%s1981 + $0x10] sm:$0xff]
    %v1985 = vld [vmem:[%s1981 + $0x18] sm:$0xff]
    %v1987 = vsel %vm1929, %v1961, 0
    %v1990 = vsel %vm1929, %v1962, 0
    %v1993 = vsel %vm1929, %v1963, 0
    %v1996 = vsel %vm1929, %v1964, 0
    %v1999 = vsel %vm1929, %v1965, 0
    %v2002 = vsel %vm1929, %v1966, 0
    %v2005 = vsel %vm1929, %v1967, 0
    %v2008 = vsel %vm1929, %v1968, 0
    %v2011 = vsel %vm1929, %v1969, 0
    %v2014 = vsel %vm1929, %v1970, 0
    %v2017 = vsel %vm1929, %v1971, 0
    %v2020 = vsel %vm1929, %v1972, 0
    %v2023 = vsel %vm1929, %v1973, 0
    %v2026 = vsel %vm1929, %v1974, 0
    %v2029 = vsel %vm1929, %v1975, 0
    %v2032 = vsel %vm1929, %v1976, 0
    %2034 = vmatprep.subr.mxu0 0.0
    %2035 = vmatpush1.msra.mxu0 %v1982
    %2036 = vmatprep.subr.mxu0 0.0
    %2037 = vmatpush1.msra.mxu0 %v1983
    %2038 = vmatprep.subr.mxu0 0.0
    %2039 = vmatpush1.msra.mxu0 %v1984
    %2040 = vmatprep.subr.mxu0 0.0
    %2041 = vmatpush1.msra.mxu0 %v1985
    %2042 = vmatprep.subr.mxu0 0.0
    %2043 = vmatpush1.msra.mxu0 0.0
    %2044 = vmatprep.subr.mxu0 0.0
    %2045 = vmatpush1.msra.mxu0 0.0
    %2046 = vmatprep.subr.mxu0 0.0
    %2047 = vmatpush1.msra.mxu0 0.0
    %2048 = vmatprep.subr.mxu0 0.0
    %2049 = vmatpush1.msra.mxu0 0.0
    %2050 = vmatprep.subr.mxu0 0.0
    %2051 = vmatpush1.msra.mxu0 0.0
    %2052 = vmatprep.subr.mxu0 0.0
    %2053 = vmatpush1.msra.mxu0 0.0
    %2054 = vmatprep.subr.mxu0 0.0
    %2055 = vmatpush1.msra.mxu0 0.0
    %2056 = vmatprep.subr.mxu0 0.0
    %2057 = vmatpush1.msra.mxu0 0.0
    %2058 = vmatprep.subr.mxu0 0.0
    %2059 = vmatpush1.msra.mxu0 0.0
    %2060 = vmatprep.subr.mxu0 0.0
    %2061 = vmatpush1.msra.mxu0 0.0
    %2062 = vmatprep.subr.mxu0 0.0
    %2063 = vmatpush1.msra.mxu0 0.0
    %2064 = vmatprep.subr.mxu0 0.0
    %2065 = vmatpush1.msra.mxu0 0.0
    %2066 = vmatprep.subr.mxu0 0.0
    %2067 = vmatpush1.msra.mxu0 0.0
    %2068 = vmatprep.subr.mxu0 0.0
    %2069 = vmatpush1.msra.mxu0 0.0
    %2070 = vmatprep.subr.mxu0 0.0
    %2071 = vmatpush1.msra.mxu0 0.0
    %2072 = vmatprep.subr.mxu0 0.0
    %2073 = vmatpush1.msra.mxu0 0.0
    %2074 = vmatprep.subr.mxu0 0.0
    %2075 = vmatpush1.msra.mxu0 0.0
    %2076 = vmatprep.subr.mxu0 0.0
    %2077 = vmatpush1.msra.mxu0 0.0
    %2078 = vmatprep.subr.mxu0 0.0
    %2079 = vmatpush1.msra.mxu0 0.0
    %2080 = vmatprep.subr.mxu0 0.0
    %2081 = vmatpush1.msra.mxu0 0.0
    %2082 = vmatprep.subr.mxu0 0.0
    %2083 = vmatpush1.msra.mxu0 0.0
    %2084 = vmatprep.subr.mxu0 0.0
    %2085 = vmatpush1.msra.mxu0 0.0
    %2086 = vmatprep.subr.mxu0 0.0
    %2087 = vmatpush1.msra.mxu0 0.0
    %2088 = vmatprep.subr.mxu0 0.0
    %2089 = vmatpush1.msra.mxu0 0.0
    %2090 = vmatprep.subr.mxu0 0.0
    %2091 = vmatpush1.msra.mxu0 0.0
    %2092 = vmatprep.subr.mxu0 0.0
    %2093 = vmatpush1.msra.mxu0 0.0
    %2094 = vmatprep.subr.mxu0 0.0
    %2095 = vmatpush1.msra.mxu0 0.0
    %2096 = vmatprep.subr.mxu0 0.0
    %2097 = vmatpush1.msra.mxu0 0.0
    %2098 = vmatprep.mubr.f32.mxu0 0.0
    %2099 = vmatmul.mubr.f32.gmra.mrb[0].mxu0 %v1987
    %v2100 = vpop.f32.mrb[0].mxu0
    %v2101 = vadd.f32 0.0, %v2100
    %v2102 = vpop.f32.mrb[0].mxu0
    %2103 = vmatprep.mubr.f32.mxu0 0.0
    %2104 = vmatmul.mubr.f32.gmra.mrb[0].mxu0 %v1990
    %v2105 = vpop.f32.mrb[0].mxu0
    %v2106 = vadd.f32 0.0, %v2105
    %v2107 = vpop.f32.mrb[0].mxu0
    %2108 = vmatprep.mubr.f32.mxu0 0.0
    %2109 = vmatmul.mubr.f32.gmra.mrb[0].mxu0 %v1993
    %v2110 = vpop.f32.mrb[0].mxu0
    %v2111 = vadd.f32 0.0, %v2110
    %v2112 = vpop.f32.mrb[0].mxu0
    %2113 = vmatprep.mubr.f32.mxu0 0.0
    %2114 = vmatmul.mubr.f32.gmra.mrb[0].mxu0 %v1996
    %v2115 = vpop.f32.mrb[0].mxu0
    %v2116 = vadd.f32 0.0, %v2115
    %v2117 = vpop.f32.mrb[0].mxu0
    %2118 = vmatprep.mubr.f32.mxu0 0.0
    %2119 = vmatmul.mubr.f32.gmra.mrb[0].mxu0 %v1999
    %v2120 = vpop.f32.mrb[0].mxu0
    %v2121 = vadd.f32 0.0, %v2120
    %v2122 = vpop.f32.mrb[0].mxu0
    %2123 = vmatprep.mubr.f32.mxu0 0.0
    %2124 = vmatmul.mubr.f32.gmra.mrb[0].mxu0 %v2002
    %v2125 = vpop.f32.mrb[0].mxu0
    %v2126 = vadd.f32 0.0, %v2125
    %v2127 = vpop.f32.mrb[0].mxu0
    %2128 = vmatprep.mubr.f32.mxu0 0.0
    %2129 = vmatmul.mubr.f32.gmra.mrb[0].mxu0 %v2005
    %v2130 = vpop.f32.mrb[0].mxu0
    %v2131 = vadd.f32 0.0, %v2130
    %v2132 = vpop.f32.mrb[0].mxu0
    %2133 = vmatprep.mubr.f32.mxu0 0.0
    %2134 = vmatmul.mubr.f32.gmra.mrb[0].mxu0 %v2008
    %v2135 = vpop.f32.mrb[0].mxu0
    %v2136 = vadd.f32 0.0, %v2135
    %v2137 = vpop.f32.mrb[0].mxu0
    %2138 = vmatprep.mubr.f32.mxu0 0.0
    %2139 = vmatmul.mubr.f32.gmra.mrb[0].mxu0 %v2011
    %v2140 = vpop.f32.mrb[0].mxu0
    %v2141 = vadd.f32 0.0, %v2140
    %v2142 = vpop.f32.mrb[0].mxu0
    %2143 = vmatprep.mubr.f32.mxu0 0.0
    %2144 = vmatmul.mubr.f32.gmra.mrb[0].mxu0 %v2014
    %v2145 = vpop.f32.mrb[0].mxu0
    %v2146 = vadd.f32 0.0, %v2145
    %v2147 = vpop.f32.mrb[0].mxu0
    %2148 = vmatprep.mubr.f32.mxu0 0.0
    %2149 = vmatmul.mubr.f32.gmra.mrb[0].mxu0 %v2017
    %v2150 = vpop.f32.mrb[0].mxu0
    %v2151 = vadd.f32 0.0, %v2150
    %v2152 = vpop.f32.mrb[0].mxu0
    %2153 = vmatprep.mubr.f32.mxu0 0.0
    %2154 = vmatmul.mubr.f32.gmra.mrb[0].mxu0 %v2020
    %v2155 = vpop.f32.mrb[0].mxu0
    %v2156 = vadd.f32 0.0, %v2155
    %v2157 = vpop.f32.mrb[0].mxu0
    %2158 = vmatprep.mubr.f32.mxu0 0.0
    %2159 = vmatmul.mubr.f32.gmra.mrb[0].mxu0 %v2023
    %v2160 = vpop.f32.mrb[0].mxu0
    %v2161 = vadd.f32 0.0, %v2160
    %v2162 = vpop.f32.mrb[0].mxu0
    %2163 = vmatprep.mubr.f32.mxu0 0.0
    %2164 = vmatmul.mubr.f32.gmra.mrb[0].mxu0 %v2026
    %v2165 = vpop.f32.mrb[0].mxu0
    %v2166 = vadd.f32 0.0, %v2165
    %v2167 = vpop.f32.mrb[0].mxu0
    %2168 = vmatprep.mubr.f32.mxu0 0.0
    %2169 = vmatmul.mubr.f32.gmra.mrb[0].mxu0 %v2029
    %v2170 = vpop.f32.mrb[0].mxu0
    %v2171 = vadd.f32 0.0, %v2170
    %v2172 = vpop.f32.mrb[0].mxu0
    %2173 = vmatprep.mubr.f32.mxu0 0.0
    %2174 = vmatmul.mubr.f32.gmra.mrb[0].mxu0 %v2032
    %v2175 = vpop.f32.mrb[0].mxu0
    %v2176 = vadd.f32 0.0, %v2175
    %v2177 = vpop.f32.mrb[0].mxu0
    %2178 = vdwg.mxu0
    %v2179 = vsel %vm1929, 0.0, 0
    %2181 = vmatprep.subr.mxu0 0.0
    %2182 = vmatpush1.msra.mxu0 %v1977
    %2183 = vmatprep.subr.mxu0 0.0
    %2184 = vmatpush1.msra.mxu0 %v1978
    %2185 = vmatprep.subr.mxu0 0.0
    %2186 = vmatpush1.msra.mxu0 %v1979
    %2187 = vmatprep.subr.mxu0 0.0
    %2188 = vmatpush1.msra.mxu0 %v1980
    %2189 = vmatprep.subr.mxu0 0.0
    %2190 = vmatpush1.msra.mxu0 0.0
    %2191 = vmatprep.subr.mxu0 0.0
    %2192 = vmatpush1.msra.mxu0 0.0
    %2193 = vmatprep.subr.mxu0 0.0
    %2194 = vmatpush1.msra.mxu0 0.0
    %2195 = vmatprep.subr.mxu0 0.0
    %2196 = vmatpush1.msra.mxu0 0.0
    %2197 = vmatprep.subr.mxu0 0.0
    %2198 = vmatpush1.msra.mxu0 0.0
    %2199 = vmatprep.subr.mxu0 0.0
    %2200 = vmatpush1.msra.mxu0 0.0
    %2201 = vmatprep.subr.mxu0 0.0
    %2202 = vmatpush1.msra.mxu0 0.0
    %2203 = vmatprep.subr.mxu0 0.0
    %2204 = vmatpush1.msra.mxu0 0.0
    %2205 = vmatprep.subr.mxu0 0.0
    %2206 = vmatpush1.msra.mxu0 0.0
    %2207 = vmatprep.subr.mxu0 0.0
    %2208 = vmatpush1.msra.mxu0 0.0
    %2209 = vmatprep.subr.mxu0 0.0
    %2210 = vmatpush1.msra.mxu0 0.0
    %2211 = vmatprep.subr.mxu0 0.0
    %2212 = vmatpush1.msra.mxu0 0.0
    %2213 = vmatprep.subr.mxu0 0.0
    %2214 = vmatpush1.msra.mxu0 0.0
    %2215 = vmatprep.subr.mxu0 0.0
    %2216 = vmatpush1.msra.mxu0 0.0
    %2217 = vmatprep.subr.mxu0 0.0
    %2218 = vmatpush1.msra.mxu0 0.0
    %2219 = vmatprep.subr.mxu0 0.0
    %2220 = vmatpush1.msra.mxu0 0.0
    %2221 = vmatprep.subr.mxu0 0.0
    %2222 = vmatpush1.msra.mxu0 0.0
    %2223 = vmatprep.subr.mxu0 0.0
    %2224 = vmatpush1.msra.mxu0 0.0
    %2225 = vmatprep.subr.mxu0 0.0
    %2226 = vmatpush1.msra.mxu0 0.0
    %2227 = vmatprep.subr.mxu0 0.0
    %2228 = vmatpush1.msra.mxu0 0.0
    %2229 = vmatprep.subr.mxu0 0.0
    %2230 = vmatpush1.msra.mxu0 0.0
    %2231 = vmatprep.subr.mxu0 0.0
    %2232 = vmatpush1.msra.mxu0 0.0
    %2233 = vmatprep.subr.mxu0 0.0
    %2234 = vmatpush1.msra.mxu0 0.0
    %2235 = vmatprep.subr.mxu0 0.0
    %2236 = vmatpush1.msra.mxu0 0.0
    %2237 = vmatprep.subr.mxu0 0.0
    %2238 = vmatpush1.msra.mxu0 0.0
    %2239 = vmatprep.subr.mxu0 0.0
    %2240 = vmatpush1.msra.mxu0 0.0
    %2241 = vmatprep.subr.mxu0 0.0
    %2242 = vmatpush1.msra.mxu0 0.0
    %2243 = vmatprep.subr.mxu0 0.0
    %2244 = vmatpush1.msra.mxu0 0.0
    %2245 = vmatprep.mubr.f32.mxu0 0.0
    %2246 = vmatmul.mubr.f32.gmra.mrb[0].mxu0 %v2179
    %v2247 = vpop.f32.mrb[0].mxu0
    %v2248 = vadd.f32 %v2101, %v2247
    %v2249 = vpop.f32.mrb[0].mxu0
    %2250 = vmatprep.mubr.f32.mxu0 0.0
    %2251 = vmatmul.mubr.f32.gmra.mrb[0].mxu0 %v1987
    %v2252 = vpop.f32.mrb[0].mxu0
    %v2253 = vadd.f32 %v2106, %v2252
    %v2254 = vpop.f32.mrb[0].mxu0
    %2255 = vmatprep.mubr.f32.mxu0 0.0
    %2256 = vmatmul.mubr.f32.gmra.mrb[0].mxu0 %v1990
    %v2257 = vpop.f32.mrb[0].mxu0
    %v2258 = vadd.f32 %v2111, %v2257
    %v2259 = vpop.f32.mrb[0].mxu0
    %2260 = vmatprep.mubr.f32.mxu0 0.0
    %2261 = vmatmul.mubr.f32.gmra.mrb[0].mxu0 %v1993
    %v2262 = vpop.f32.mrb[0].mxu0
    %v2263 = vadd.f32 %v2116, %v2262
    %v2264 = vpop.f32.mrb[0].mxu0
    %2265 = vmatprep.mubr.f32.mxu0 0.0
    %2266 = vmatmul.mubr.f32.gmra.mrb[0].mxu0 %v1996
    %v2267 = vpop.f32.mrb[0].mxu0
    %v2268 = vadd.f32 %v2121, %v2267
    %v2269 = vpop.f32.mrb[0].mxu0
    %2270 = vmatprep.mubr.f32.mxu0 0.0
    %2271 = vmatmul.mubr.f32.gmra.mrb[0].mxu0 %v1999
    %v2272 = vpop.f32.mrb[0].mxu0
    %v2273 = vadd.f32 %v2126, %v2272
    %v2274 = vpop.f32.mrb[0].mxu0
    %2275 = vmatprep.mubr.f32.mxu0 0.0
    %2276 = vmatmul.mubr.f32.gmra.mrb[0].mxu0 %v2002
    %v2277 = vpop.f32.mrb[0].mxu0
    %v2278 = vadd.f32 %v2131, %v2277
    %v2279 = vpop.f32.mrb[0].mxu0
    %2280 = vmatprep.mubr.f32.mxu0 0.0
    %2281 = vmatmul.mubr.f32.gmra.mrb[0].mxu0 %v2005
    %v2282 = vpop.f32.mrb[0].mxu0
    %v2283 = vadd.f32 %v2136, %v2282
    %v2284 = vpop.f32.mrb[0].mxu0
    %2285 = vmatprep.mubr.f32.mxu0 0.0
    %2286 = vmatmul.mubr.f32.gmra.mrb[0].mxu0 %v2008
    %v2287 = vpop.f32.mrb[0].mxu0
    %v2288 = vadd.f32 %v2141, %v2287
    %v2289 = vpop.f32.mrb[0].mxu0
    %2290 = vmatprep.mubr.f32.mxu0 0.0
    %2291 = vmatmul.mubr.f32.gmra.mrb[0].mxu0 %v2011
    %v2292 = vpop.f32.mrb[0].mxu0
    %v2293 = vadd.f32 %v2146, %v2292
    %v2294 = vpop.f32.mrb[0].mxu0
    %2295 = vmatprep.mubr.f32.mxu0 0.0
    %2296 = vmatmul.mubr.f32.gmra.mrb[0].mxu0 %v2014
    %v2297 = vpop.f32.mrb[0].mxu0
    %v2298 = vadd.f32 %v2151, %v2297
    %v2299 = vpop.f32.mrb[0].mxu0
    %2300 = vmatprep.mubr.f32.mxu0 0.0
    %2301 = vmatmul.mubr.f32.gmra.mrb[0].mxu0 %v2017
    %v2302 = vpop.f32.mrb[0].mxu0
    %v2303 = vadd.f32 %v2156, %v2302
    %v2304 = vpop.f32.mrb[0].mxu0
    %2305 = vmatprep.mubr.f32.mxu0 0.0
    %2306 = vmatmul.mubr.f32.gmra.mrb[0].mxu0 %v2020
    %v2307 = vpop.f32.mrb[0].mxu0
    %v2308 = vadd.f32 %v2161, %v2307
    %v2309 = vpop.f32.mrb[0].mxu0
    %2310 = vmatprep.mubr.f32.mxu0 0.0
    %2311 = vmatmul.mubr.f32.gmra.mrb[0].mxu0 %v2023
    %v2312 = vpop.f32.mrb[0].mxu0
    %v2313 = vadd.f32 %v2166, %v2312
    %v2314 = vpop.f32.mrb[0].mxu0
    %2315 = vmatprep.mubr.f32.mxu0 0.0
    %2316 = vmatmul.mubr.f32.gmra.mrb[0].mxu0 %v2026
    %v2317 = vpop.f32.mrb[0].mxu0
    %v2318 = vadd.f32 %v2171, %v2317
    %v2319 = vpop.f32.mrb[0].mxu0
    %2320 = vmatprep.mubr.f32.mxu0 0.0
    %2321 = vmatmul.mubr.f32.gmra.mrb[0].mxu0 %v2029
    %v2322 = vpop.f32.mrb[0].mxu0
    %v2323 = vadd.f32 %v2176, %v2322
    %v2324 = vpop.f32.mrb[0].mxu0
    %2325 = vdwg.mxu0
    %s2326 = scalar_lea.vmem [#allocation8], 64
    %v2327 = vld [vmem:[%s2326] sm:$0xff]
    %v2328 = vld [vmem:[%s2326 + $0x8] sm:$0xff]
    %v2329 = vld [vmem:[%s2326 + $0x10] sm:$0xff]
    %v2330 = vld [vmem:[%s2326 + $0x18] sm:$0xff]
    %2331 = vmatprep.subr.mxu0 0.0
    %2332 = vmatpush1.msra.mxu0 %v2327
    %2333 = vmatprep.subr.mxu0 0.0
    %2334 = vmatpush1.msra.mxu0 %v2328
    %2335 = vmatprep.subr.mxu0 0.0
    %2336 = vmatpush1.msra.mxu0 %v2329
    %2337 = vmatprep.subr.mxu0 0.0
    %2338 = vmatpush1.msra.mxu0 %v2330
    %2339 = vmatprep.subr.mxu0 0.0
    %2340 = vmatpush1.msra.mxu0 0.0
    %2341 = vmatprep.subr.mxu0 0.0
    %2342 = vmatpush1.msra.mxu0 0.0
    %2343 = vmatprep.subr.mxu0 0.0
    %2344 = vmatpush1.msra.mxu0 0.0
    %2345 = vmatprep.subr.mxu0 0.0
    %2346 = vmatpush1.msra.mxu0 0.0
    %2347 = vmatprep.subr.mxu0 0.0
    %2348 = vmatpush1.msra.mxu0 0.0
    %2349 = vmatprep.subr.mxu0 0.0
    %2350 = vmatpush1.msra.mxu0 0.0
    %2351 = vmatprep.subr.mxu0 0.0
    %2352 = vmatpush1.msra.mxu0 0.0
    %2353 = vmatprep.subr.mxu0 0.0
    %2354 = vmatpush1.msra.mxu0 0.0
    %2355 = vmatprep.subr.mxu0 0.0
    %2356 = vmatpush1.msra.mxu0 0.0
    %2357 = vmatprep.subr.mxu0 0.0
    %2358 = vmatpush1.msra.mxu0 0.0
    %2359 = vmatprep.subr.mxu0 0.0
    %2360 = vmatpush1.msra.mxu0 0.0
    %2361 = vmatprep.subr.mxu0 0.0
    %2362 = vmatpush1.msra.mxu0 0.0
    %2363 = vmatprep.subr.mxu0 0.0
    %2364 = vmatpush1.msra.mxu0 0.0
    %2365 = vmatprep.subr.mxu0 0.0
    %2366 = vmatpush1.msra.mxu0 0.0
    %2367 = vmatprep.subr.mxu0 0.0
    %2368 = vmatpush1.msra.mxu0 0.0
    %2369 = vmatprep.subr.mxu0 0.0
    %2370 = vmatpush1.msra.mxu0 0.0
    %2371 = vmatprep.subr.mxu0 0.0
    %2372 = vmatpush1.msra.mxu0 0.0
    %2373 = vmatprep.subr.mxu0 0.0
    %2374 = vmatpush1.msra.mxu0 0.0
    %2375 = vmatprep.subr.mxu0 0.0
    %2376 = vmatpush1.msra.mxu0 0.0
    %2377 = vmatprep.subr.mxu0 0.0
    %2378 = vmatpush1.msra.mxu0 0.0
    %2379 = vmatprep.subr.mxu0 0.0
    %2380 = vmatpush1.msra.mxu0 0.0
    %2381 = vmatprep.subr.mxu0 0.0
    %2382 = vmatpush1.msra.mxu0 0.0
    %2383 = vmatprep.subr.mxu0 0.0
    %2384 = vmatpush1.msra.mxu0 0.0
    %2385 = vmatprep.subr.mxu0 0.0
    %2386 = vmatpush1.msra.mxu0 0.0
    %2387 = vmatprep.subr.mxu0 0.0
    %2388 = vmatpush1.msra.mxu0 0.0
    %2389 = vmatprep.subr.mxu0 0.0
    %2390 = vmatpush1.msra.mxu0 0.0
    %2391 = vmatprep.subr.mxu0 0.0
    %2392 = vmatpush1.msra.mxu0 0.0
    %2393 = vmatprep.subr.mxu0 0.0
    %2394 = vmatpush1.msra.mxu0 0.0
    %2395 = vmatprep.mubr.f32.mxu0 0.0
    %2396 = vmatmul.mubr.f32.gmra.mrb[0].mxu0 %v1990
    %v2397 = vpop.f32.mrb[0].mxu0
    %v2398 = vadd.f32 0.0, %v2397
    %v2399 = vpop.f32.mrb[0].mxu0
    %2400 = vmatprep.mubr.f32.mxu0 0.0
    %2401 = vmatmul.mubr.f32.gmra.mrb[0].mxu0 %v1993
    %v2402 = vpop.f32.mrb[0].mxu0
    %v2403 = vadd.f32 0.0, %v2402
    %v2404 = vpop.f32.mrb[0].mxu0
    %2405 = vmatprep.mubr.f32.mxu0 0.0
    %2406 = vmatmul.mubr.f32.gmra.mrb[0].mxu0 %v1996
    %v2407 = vpop.f32.mrb[0].mxu0
    %v2408 = vadd.f32 0.0, %v2407
    %v2409 = vpop.f32.mrb[0].mxu0
    %2410 = vmatprep.mubr.f32.mxu0 0.0
    %2411 = vmatmul.mubr.f32.gmra.mrb[0].mxu0 %v1999
    %v2412 = vpop.f32.mrb[0].mxu0
    %v2413 = vadd.f32 0.0, %v2412
    %v2414 = vpop.f32.mrb[0].mxu0
    %2415 = vmatprep.mubr.f32.mxu0 0.0
    %2416 = vmatmul.mubr.f32.gmra.mrb[0].mxu0 %v2002
    %v2417 = vpop.f32.mrb[0].mxu0
    %v2418 = vadd.f32 0.0, %v2417
    %v2419 = vpop.f32.mrb[0].mxu0
    %2420 = vmatprep.mubr.f32.mxu0 0.0
    %2421 = vmatmul.mubr.f32.gmra.mrb[0].mxu0 %v2005
    %v2422 = vpop.f32.mrb[0].mxu0
    %v2423 = vadd.f32 0.0, %v2422
    %v2424 = vpop.f32.mrb[0].mxu0
    %2425 = vmatprep.mubr.f32.mxu0 0.0
    %2426 = vmatmul.mubr.f32.gmra.mrb[0].mxu0 %v2008
    %v2427 = vpop.f32.mrb[0].mxu0
    %v2428 = vadd.f32 0.0, %v2427
    %v2429 = vpop.f32.mrb[0].mxu0
    %2430 = vmatprep.mubr.f32.mxu0 0.0
    %2431 = vmatmul.mubr.f32.gmra.mrb[0].mxu0 %v2011
    %v2432 = vpop.f32.mrb[0].mxu0
    %v2433 = vadd.f32 0.0, %v2432
    %v2434 = vpop.f32.mrb[0].mxu0
    %2435 = vmatprep.mubr.f32.mxu0 0.0
    %2436 = vmatmul.mubr.f32.gmra.mrb[0].mxu0 %v2014
    %v2437 = vpop.f32.mrb[0].mxu0
    %v2438 = vadd.f32 0.0, %v2437
    %v2439 = vpop.f32.mrb[0].mxu0
    %2440 = vmatprep.mubr.f32.mxu0 0.0
    %2441 = vmatmul.mubr.f32.gmra.mrb[0].mxu0 %v2017
    %v2442 = vpop.f32.mrb[0].mxu0
    %v2443 = vadd.f32 0.0, %v2442
    %v2444 = vpop.f32.mrb[0].mxu0
    %2445 = vmatprep.mubr.f32.mxu0 0.0
    %2446 = vmatmul.mubr.f32.gmra.mrb[0].mxu0 %v2020
    %v2447 = vpop.f32.mrb[0].mxu0
    %v2448 = vadd.f32 0.0, %v2447
    %v2449 = vpop.f32.mrb[0].mxu0
    %2450 = vmatprep.mubr.f32.mxu0 0.0
    %2451 = vmatmul.mubr.f32.gmra.mrb[0].mxu0 %v2023
    %v2452 = vpop.f32.mrb[0].mxu0
    %v2453 = vadd.f32 0.0, %v2452
    %v2454 = vpop.f32.mrb[0].mxu0
    %2455 = vmatprep.mubr.f32.mxu0 0.0
    %2456 = vmatmul.mubr.f32.gmra.mrb[0].mxu0 %v2026
    %v2457 = vpop.f32.mrb[0].mxu0
    %v2458 = vadd.f32 0.0, %v2457
    %v2459 = vpop.f32.mrb[0].mxu0
    %2460 = vmatprep.mubr.f32.mxu0 0.0
    %2461 = vmatmul.mubr.f32.gmra.mrb[0].mxu0 %v2029
    %v2462 = vpop.f32.mrb[0].mxu0
    %v2463 = vadd.f32 0.0, %v2462
    %v2464 = vpop.f32.mrb[0].mxu0
    %2465 = vmatprep.mubr.f32.mxu0 0.0
    %2466 = vmatmul.mubr.f32.gmra.mrb[0].mxu0 %v2032
    %v2467 = vpop.f32.mrb[0].mxu0
    %v2468 = vadd.f32 0.0, %v2467
    %v2469 = vpop.f32.mrb[0].mxu0
    %2470 = vmatprep.mubr.f32.mxu0 0.0
    %2471 = vmatmul.mubr.f32.gmra.mrb[0].mxu0 %v2179
    %v2472 = vpop.f32.mrb[0].mxu0
    %v2473 = vadd.f32 0.0, %v2472
    %v2474 = vpop.f32.mrb[0].mxu0
    %2475 = vdwg.mxu0
    %v2476 = vadd.f32 %v2248, %v2398
    %v2477 = vadd.f32 %v2253, %v2403
    %v2478 = vadd.f32 %v2258, %v2408
    %v2479 = vadd.f32 %v2263, %v2413
    %v2480 = vadd.f32 %v2268, %v2418
    %v2481 = vadd.f32 %v2273, %v2423
    %v2482 = vadd.f32 %v2278, %v2428
    %v2483 = vadd.f32 %v2283, %v2433
    %v2484 = vadd.f32 %v2288, %v2438
    %v2485 = vadd.f32 %v2293, %v2443
    %v2486 = vadd.f32 %v2298, %v2448
    %v2487 = vadd.f32 %v2303, %v2453
    %v2488 = vadd.f32 %v2308, %v2458
    %v2489 = vadd.f32 %v2313, %v2463
    %v2490 = vadd.f32 %v2318, %v2468
    %v2491 = vadd.f32 %v2323, %v2473
    %v2492 = vld [vmem:[%s6] sm:$0x1]
    %v2494 = vlaneseq
    %v2495 = vshrl.u32 %v2494, 7
    %v2496 = vsub.s32 0, %v2495
    %v2497 = vrot.slane %v2492, %v2496
    %v2499 = vadd.f32 %v2476, %v2497
    %v2500 = vadd.f32 %v2477, %v2497
    %v2501 = vadd.f32 %v2478, %v2497
    %v2502 = vadd.f32 %v2479, %v2497
    %v2503 = vadd.f32 %v2480, %v2497
    %v2504 = vadd.f32 %v2481, %v2497
    %v2505 = vadd.f32 %v2482, %v2497
    %v2506 = vadd.f32 %v2483, %v2497
    %v2507 = vadd.f32 %v2484, %v2497
    %v2508 = vadd.f32 %v2485, %v2497
    %v2509 = vadd.f32 %v2486, %v2497
    %v2510 = vadd.f32 %v2487, %v2497
    %v2511 = vadd.f32 %v2488, %v2497
    %v2512 = vadd.f32 %v2489, %v2497
    %v2513 = vadd.f32 %v2490, %v2497
    %v2514 = vadd.f32 %v2491, %v2497
    %v2515 = vmax.f32 %v2499, 0.0
    %v2516 = vmax.f32 %v2500, 0.0
    %v2517 = vmax.f32 %v2501, 0.0
    %v2518 = vmax.f32 %v2502, 0.0
    %v2519 = vmax.f32 %v2503, 0.0
    %v2520 = vmax.f32 %v2504, 0.0
    %v2521 = vmax.f32 %v2505, 0.0
    %v2522 = vmax.f32 %v2506, 0.0
    %v2523 = vmax.f32 %v2507, 0.0
    %v2524 = vmax.f32 %v2508, 0.0
    %v2525 = vmax.f32 %v2509, 0.0
    %v2526 = vmax.f32 %v2510, 0.0
    %v2527 = vmax.f32 %v2511, 0.0
    %v2528 = vmax.f32 %v2512, 0.0
    %v2529 = vmax.f32 %v2513, 0.0
    %v2530 = vmax.f32 %v2514, 0.0
    %v2531 = vmax.f32 %v2515, %v2516
    %vm2532 = vcmask 523264
    %2533 = vst.msk [vmem:[#allocation4] sm:$0xff] %vm2532, %v2531
    %v2534 = vmax.f32 %v2517, %v2518
    %2536 = vrot.lane.b32.xlu0 %v2534, 64
    %v2537 = vpop.permute.xlu0 %2536
    %vm2539 = vcmask 1048064
    %2540 = vst.msk [vmem:[#allocation4] sm:$0xff] %vm2539, %v2537
    %v2541 = vmax.f32 %v2519, %v2520
    %2542 = vst.msk [vmem:[#allocation4 + $0x8] sm:$0xff] %vm2532, %v2541
    %v2543 = vmax.f32 %v2521, %v2522
    %2545 = vrot.lane.b32.xlu0 %v2543, 64
    %v2546 = vpop.permute.xlu0 %2545
    %2548 = vst.msk [vmem:[#allocation4 + $0x8] sm:$0xff] %vm2539, %v2546
    %v2549 = vmax.f32 %v2523, %v2524
    %2550 = vst.msk [vmem:[#allocation4 + $0x10] sm:$0xff] %vm2532, %v2549
    %v2551 = vmax.f32 %v2525, %v2526
    %2553 = vrot.lane.b32.xlu0 %v2551, 64
    %v2554 = vpop.permute.xlu0 %2553
    %2556 = vst.msk [vmem:[#allocation4 + $0x10] sm:$0xff] %vm2539, %v2554
    %v2557 = vmax.f32 %v2527, %v2528
    %2558 = vst.msk [vmem:[#allocation4 + $0x18] sm:$0xff] %vm2532, %v2557
    %v2559 = vmax.f32 %v2529, %v2530
    %2561 = vrot.lane.b32.xlu0 %v2559, 64
    %v2562 = vpop.permute.xlu0 %2561
    %2564 = vst.msk [vmem:[#allocation4 + $0x18] sm:$0xff] %vm2539, %v2562
    %v2565 = vld [vmem:[#allocation4] sm:$0xff]
    %v2566 = vld [vmem:[#allocation4 + $0x8] sm:$0xff]
    %v2567 = vld [vmem:[#allocation4 + $0x10] sm:$0xff]
    %v2568 = vld [vmem:[#allocation4 + $0x18] sm:$0xff]
    %v2569 = vld [vmem:[%s7] sm:$0xff]
    %v2570 = vld [vmem:[%s7 + $0x8] sm:$0xff]
    %v2571 = vld [vmem:[%s7 + $0x10] sm:$0xff]
    %v2572 = vld [vmem:[%s7 + $0x18] sm:$0xff]
    %v2573 = vld [vmem:[%s7 + $0x20] sm:$0xff]
    %v2574 = vld [vmem:[%s7 + $0x28] sm:$0xff]
    %v2575 = vld [vmem:[%s7 + $0x30] sm:$0xff]
    %v2576 = vld [vmem:[%s7 + $0x38] sm:$0xff]
    %v2577 = vld [vmem:[%s7 + $0x40] sm:$0xff]
    %v2578 = vld [vmem:[%s7 + $0x48] sm:$0xff]
    %v2579 = vld [vmem:[%s7 + $0x50] sm:$0xff]
    %v2580 = vld [vmem:[%s7 + $0x58] sm:$0xff]
    %v2581 = vld [vmem:[%s7 + $0x60] sm:$0xff]
    %v2582 = vld [vmem:[%s7 + $0x68] sm:$0xff]
    %v2583 = vld [vmem:[%s7 + $0x70] sm:$0xff]
    %v2584 = vld [vmem:[%s7 + $0x78] sm:$0xff]
    %v2585 = vld [vmem:[%s7 + $0x80] sm:$0xff]
    %v2586 = vld [vmem:[%s7 + $0x88] sm:$0xff]
    %v2587 = vld [vmem:[%s7 + $0x90] sm:$0xff]
    %v2588 = vld [vmem:[%s7 + $0x98] sm:$0xff]
    %v2589 = vld [vmem:[%s7 + $0xa0] sm:$0xff]
    %v2590 = vld [vmem:[%s7 + $0xa8] sm:$0xff]
    %v2591 = vld [vmem:[%s7 + $0xb0] sm:$0xff]
    %v2592 = vld [vmem:[%s7 + $0xb8] sm:$0xff]
    %v2593 = vld [vmem:[%s7 + $0xc0] sm:$0xff]
    %v2594 = vld [vmem:[%s7 + $0xc8] sm:$0xff]
    %v2595 = vld [vmem:[%s7 + $0xd0] sm:$0xff]
    %v2596 = vld [vmem:[%s7 + $0xd8] sm:$0xff]
    %v2597 = vld [vmem:[%s7 + $0xe0] sm:$0xff]
    %v2598 = vld [vmem:[%s7 + $0xe8] sm:$0xff]
    %v2599 = vld [vmem:[%s7 + $0xf0] sm:$0xff]
    %v2600 = vld [vmem:[%s7 + $0xf8] sm:$0xff]
    %v2601 = vld [vmem:[%s7 + $0x100] sm:$0xff]
    %v2602 = vld [vmem:[%s7 + $0x108] sm:$0xff]
    %v2603 = vld [vmem:[%s7 + $0x110] sm:$0xff]
    %v2604 = vld [vmem:[%s7 + $0x118] sm:$0xff]
    %v2605 = vld [vmem:[%s7 + $0x120] sm:$0xff]
    %v2606 = vld [vmem:[%s7 + $0x128] sm:$0xff]
    %v2607 = vld [vmem:[%s7 + $0x130] sm:$0xff]
    %v2608 = vld [vmem:[%s7 + $0x138] sm:$0xff]
    %v2609 = vld [vmem:[%s7 + $0x140] sm:$0xff]
    %v2610 = vld [vmem:[%s7 + $0x148] sm:$0xff]
    %v2611 = vld [vmem:[%s7 + $0x150] sm:$0xff]
    %v2612 = vld [vmem:[%s7 + $0x158] sm:$0xff]
    %v2613 = vld [vmem:[%s7 + $0x160] sm:$0xff]
    %v2614 = vld [vmem:[%s7 + $0x168] sm:$0xff]
    %v2615 = vld [vmem:[%s7 + $0x170] sm:$0xff]
    %v2616 = vld [vmem:[%s7 + $0x178] sm:$0xff]
    %v2617 = vld [vmem:[%s7 + $0x180] sm:$0xff]
    %v2618 = vld [vmem:[%s7 + $0x188] sm:$0xff]
    %v2619 = vld [vmem:[%s7 + $0x190] sm:$0xff]
    %v2620 = vld [vmem:[%s7 + $0x198] sm:$0xff]
    %v2621 = vld [vmem:[%s7 + $0x1a0] sm:$0xff]
    %v2622 = vld [vmem:[%s7 + $0x1a8] sm:$0xff]
    %v2623 = vld [vmem:[%s7 + $0x1b0] sm:$0xff]
    %v2624 = vld [vmem:[%s7 + $0x1b8] sm:$0xff]
    %v2625 = vld [vmem:[%s7 + $0x1c0] sm:$0xff]
    %v2626 = vld [vmem:[%s7 + $0x1c8] sm:$0xff]
    %v2627 = vld [vmem:[%s7 + $0x1d0] sm:$0xff]
    %v2628 = vld [vmem:[%s7 + $0x1d8] sm:$0xff]
    %v2629 = vld [vmem:[%s7 + $0x1e0] sm:$0xff]
    %v2630 = vld [vmem:[%s7 + $0x1e8] sm:$0xff]
    %v2631 = vld [vmem:[%s7 + $0x1f0] sm:$0xff]
    %v2632 = vld [vmem:[%s7 + $0x1f8] sm:$0xff]
    %v2633 = vld [vmem:[%s8] sm:$0x1]
    %v2635 = vlaneseq
    %v2636 = vshrl.u32 %v2635, 7
    %v2637 = vsub.s32 0, %v2636
    %v2638 = vrot.slane %v2633, %v2637
    %2640 = vmatprep.subr.mxu0 0.0
    %2641 = vmatpush1.msra.mxu0 %v2569
    %2642 = vmatprep.subr.mxu0 0.0
    %2643 = vmatpush1.msra.mxu0 %v2570
    %2644 = vmatprep.subr.mxu0 0.0
    %2645 = vmatpush1.msra.mxu0 %v2571
    %2646 = vmatprep.subr.mxu0 0.0
    %2647 = vmatpush1.msra.mxu0 %v2572
    %2648 = vmatprep.subr.mxu0 0.0
    %2649 = vmatpush1.msra.mxu0 %v2573
    %2650 = vmatprep.subr.mxu0 0.0
    %2651 = vmatpush1.msra.mxu0 %v2574
    %2652 = vmatprep.subr.mxu0 0.0
    %2653 = vmatpush1.msra.mxu0 %v2575
    %2654 = vmatprep.subr.mxu0 0.0
    %2655 = vmatpush1.msra.mxu0 %v2576
    %2656 = vmatprep.subr.mxu0 0.0
    %2657 = vmatpush1.msra.mxu0 %v2577
    %2658 = vmatprep.subr.mxu0 0.0
    %2659 = vmatpush1.msra.mxu0 %v2578
    %2660 = vmatprep.subr.mxu0 0.0
    %2661 = vmatpush1.msra.mxu0 %v2579
    %2662 = vmatprep.subr.mxu0 0.0
    %2663 = vmatpush1.msra.mxu0 %v2580
    %2664 = vmatprep.subr.mxu0 0.0
    %2665 = vmatpush1.msra.mxu0 %v2581
    %2666 = vmatprep.subr.mxu0 0.0
    %2667 = vmatpush1.msra.mxu0 %v2582
    %2668 = vmatprep.subr.mxu0 0.0
    %2669 = vmatpush1.msra.mxu0 %v2583
    %2670 = vmatprep.subr.mxu0 0.0
    %2671 = vmatpush1.msra.mxu0 %v2584
    %2672 = vmatprep.subr.mxu0 0.0
    %2673 = vmatpush1.msra.mxu0 %v2585
    %2674 = vmatprep.subr.mxu0 0.0
    %2675 = vmatpush1.msra.mxu0 %v2586
    %2676 = vmatprep.subr.mxu0 0.0
    %2677 = vmatpush1.msra.mxu0 %v2587
    %2678 = vmatprep.subr.mxu0 0.0
    %2679 = vmatpush1.msra.mxu0 %v2588
    %2680 = vmatprep.subr.mxu0 0.0
    %2681 = vmatpush1.msra.mxu0 %v2589
    %2682 = vmatprep.subr.mxu0 0.0
    %2683 = vmatpush1.msra.mxu0 %v2590
    %2684 = vmatprep.subr.mxu0 0.0
    %2685 = vmatpush1.msra.mxu0 %v2591
    %2686 = vmatprep.subr.mxu0 0.0
    %2687 = vmatpush1.msra.mxu0 %v2592
    %2688 = vmatprep.subr.mxu0 0.0
    %2689 = vmatpush1.msra.mxu0 %v2593
    %2690 = vmatprep.subr.mxu0 0.0
    %2691 = vmatpush1.msra.mxu0 %v2594
    %2692 = vmatprep.subr.mxu0 0.0
    %2693 = vmatpush1.msra.mxu0 %v2595
    %2694 = vmatprep.subr.mxu0 0.0
    %2695 = vmatpush1.msra.mxu0 %v2596
    %2696 = vmatprep.subr.mxu0 0.0
    %2697 = vmatpush1.msra.mxu0 %v2597
    %2698 = vmatprep.subr.mxu0 0.0
    %2699 = vmatpush1.msra.mxu0 %v2598
    %2700 = vmatprep.subr.mxu0 0.0
    %2701 = vmatpush1.msra.mxu0 %v2599
    %2702 = vmatprep.subr.mxu0 0.0
    %2703 = vmatpush1.msra.mxu0 %v2600
    %2704 = vmatprep.mubr.f32.mxu0 %v2566
    %2705 = vmatmul.mubr.f32.gmra.mrb[0].mxu0 %v2565
    %v2706 = vpop.f32.mrb[0].mxu0
    %v2707 = vadd.f32 %v2638, %v2706
    %v2708 = vpop.f32.mrb[0].mxu0
    %2709 = vdwg.mxu0
    %2710 = vmatprep.subr.mxu0 0.0
    %2711 = vmatpush1.msra.mxu0 %v2601
    %2712 = vmatprep.subr.mxu0 0.0
    %2713 = vmatpush1.msra.mxu0 %v2602
    %2714 = vmatprep.subr.mxu0 0.0
    %2715 = vmatpush1.msra.mxu0 %v2603
    %2716 = vmatprep.subr.mxu0 0.0
    %2717 = vmatpush1.msra.mxu0 %v2604
    %2718 = vmatprep.subr.mxu0 0.0
    %2719 = vmatpush1.msra.mxu0 %v2605
    %2720 = vmatprep.subr.mxu0 0.0
    %2721 = vmatpush1.msra.mxu0 %v2606
    %2722 = vmatprep.subr.mxu0 0.0
    %2723 = vmatpush1.msra.mxu0 %v2607
    %2724 = vmatprep.subr.mxu0 0.0
    %2725 = vmatpush1.msra.mxu0 %v2608
    %2726 = vmatprep.subr.mxu0 0.0
    %2727 = vmatpush1.msra.mxu0 %v2609
    %2728 = vmatprep.subr.mxu0 0.0
    %2729 = vmatpush1.msra.mxu0 %v2610
    %2730 = vmatprep.subr.mxu0 0.0
    %2731 = vmatpush1.msra.mxu0 %v2611
    %2732 = vmatprep.subr.mxu0 0.0
    %2733 = vmatpush1.msra.mxu0 %v2612
    %2734 = vmatprep.subr.mxu0 0.0
    %2735 = vmatpush1.msra.mxu0 %v2613
    %2736 = vmatprep.subr.mxu0 0.0
    %2737 = vmatpush1.msra.mxu0 %v2614
    %2738 = vmatprep.subr.mxu0 0.0
    %2739 = vmatpush1.msra.mxu0 %v2615
    %2740 = vmatprep.subr.mxu0 0.0
    %2741 = vmatpush1.msra.mxu0 %v2616
    %2742 = vmatprep.subr.mxu0 0.0
    %2743 = vmatpush1.msra.mxu0 %v2617
    %2744 = vmatprep.subr.mxu0 0.0
    %2745 = vmatpush1.msra.mxu0 %v2618
    %2746 = vmatprep.subr.mxu0 0.0
    %2747 = vmatpush1.msra.mxu0 %v2619
    %2748 = vmatprep.subr.mxu0 0.0
    %2749 = vmatpush1.msra.mxu0 %v2620
    %2750 = vmatprep.subr.mxu0 0.0
    %2751 = vmatpush1.msra.mxu0 %v2621
    %2752 = vmatprep.subr.mxu0 0.0
    %2753 = vmatpush1.msra.mxu0 %v2622
    %2754 = vmatprep.subr.mxu0 0.0
    %2755 = vmatpush1.msra.mxu0 %v2623
    %2756 = vmatprep.subr.mxu0 0.0
    %2757 = vmatpush1.msra.mxu0 %v2624
    %2758 = vmatprep.subr.mxu0 0.0
    %2759 = vmatpush1.msra.mxu0 %v2625
    %2760 = vmatprep.subr.mxu0 0.0
    %2761 = vmatpush1.msra.mxu0 %v2626
    %2762 = vmatprep.subr.mxu0 0.0
    %2763 = vmatpush1.msra.mxu0 %v2627
    %2764 = vmatprep.subr.mxu0 0.0
    %2765 = vmatpush1.msra.mxu0 %v2628
    %2766 = vmatprep.subr.mxu0 0.0
    %2767 = vmatpush1.msra.mxu0 %v2629
    %2768 = vmatprep.subr.mxu0 0.0
    %2769 = vmatpush1.msra.mxu0 %v2630
    %2770 = vmatprep.subr.mxu0 0.0
    %2771 = vmatpush1.msra.mxu0 %v2631
    %2772 = vmatprep.subr.mxu0 0.0
    %2773 = vmatpush1.msra.mxu0 %v2632
    %2774 = vmatprep.mubr.f32.mxu0 %v2568
    %2775 = vmatmul.mubr.f32.gmra.mrb[0].mxu0 %v2567
    %v2776 = vpop.f32.mrb[0].mxu0
    %v2777 = vadd.f32 %v2707, %v2776
    %v2778 = vpop.f32.mrb[0].mxu0
    %2779 = vdwg.mxu0
    %v2780 = vmax.f32 %v2777, 0.0
    %v2781 = vld [vmem:[#allocation10] sm:$0xff]
    %v2782 = vld [vmem:[#allocation10 + $0x8] sm:$0xff]
    %v2783 = vld [vmem:[#allocation10 + $0x10] sm:$0xff]
    %v2784 = vld [vmem:[#allocation10 + $0x18] sm:$0xff]
    %v2785 = vld [vmem:[#allocation10 + $0x20] sm:$0xff]
    %v2786 = vld [vmem:[#allocation10 + $0x28] sm:$0xff]
    %v2787 = vld [vmem:[#allocation10 + $0x30] sm:$0xff]
    %v2788 = vld [vmem:[#allocation10 + $0x38] sm:$0xff]
    %v2789 = vld [vmem:[#allocation10 + $0x40] sm:$0xff]
    %v2790 = vld [vmem:[#allocation10 + $0x48] sm:$0xff]
    %v2791 = vld [vmem:[#allocation10 + $0x50] sm:$0xff]
    %v2792 = vld [vmem:[#allocation10 + $0x58] sm:$0xff]
    %v2793 = vld [vmem:[#allocation10 + $0x60] sm:$0xff]
    %v2794 = vld [vmem:[#allocation10 + $0x68] sm:$0xff]
    %v2795 = vld [vmem:[#allocation10 + $0x70] sm:$0xff]
    %v2796 = vld [vmem:[#allocation10 + $0x78] sm:$0xff]
    %v2797 = vld [vmem:[%s10] sm:$0x1]
    %v2799 = vlaneseq
    %v2800 = vshrl.u32 %v2799, 7
    %v2801 = vsub.s32 0, %v2800
    %v2802 = vrot.slane %v2797, %v2801
    %2804 = vmatprep.subr.mxu0 0.0
    %2805 = vmatpush1.msra.mxu0 %v2781
    %2806 = vmatprep.subr.mxu0 0.0
    %2807 = vmatpush1.msra.mxu0 %v2782
    %2808 = vmatprep.subr.mxu0 0.0
    %2809 = vmatpush1.msra.mxu0 %v2783
    %2810 = vmatprep.subr.mxu0 0.0
    %2811 = vmatpush1.msra.mxu0 %v2784
    %2812 = vmatprep.subr.mxu0 0.0
    %2813 = vmatpush1.msra.mxu0 %v2785
    %2814 = vmatprep.subr.mxu0 0.0
    %2815 = vmatpush1.msra.mxu0 %v2786
    %2816 = vmatprep.subr.mxu0 0.0
    %2817 = vmatpush1.msra.mxu0 %v2787
    %2818 = vmatprep.subr.mxu0 0.0
    %2819 = vmatpush1.msra.mxu0 %v2788
    %2820 = vmatprep.subr.mxu0 0.0
    %2821 = vmatpush1.msra.mxu0 %v2789
    %2822 = vmatprep.subr.mxu0 0.0
    %2823 = vmatpush1.msra.mxu0 %v2790
    %2824 = vmatprep.subr.mxu0 0.0
    %2825 = vmatpush1.msra.mxu0 %v2791
    %2826 = vmatprep.subr.mxu0 0.0
    %2827 = vmatpush1.msra.mxu0 %v2792
    %2828 = vmatprep.subr.mxu0 0.0
    %2829 = vmatpush1.msra.mxu0 %v2793
    %2830 = vmatprep.subr.mxu0 0.0
    %2831 = vmatpush1.msra.mxu0 %v2794
    %2832 = vmatprep.subr.mxu0 0.0
    %2833 = vmatpush1.msra.mxu0 %v2795
    %2834 = vmatprep.subr.mxu0 0.0
    %2835 = vmatpush1.msra.mxu0 %v2796
    %2836 = vmatprep.subr.mxu0 0.0
    %2837 = vmatpush1.msra.mxu0 0.0
    %2838 = vmatprep.subr.mxu0 0.0
    %2839 = vmatpush1.msra.mxu0 0.0
    %2840 = vmatprep.subr.mxu0 0.0
    %2841 = vmatpush1.msra.mxu0 0.0
    %2842 = vmatprep.subr.mxu0 0.0
    %2843 = vmatpush1.msra.mxu0 0.0
    %2844 = vmatprep.subr.mxu0 0.0
    %2845 = vmatpush1.msra.mxu0 0.0
    %2846 = vmatprep.subr.mxu0 0.0
    %2847 = vmatpush1.msra.mxu0 0.0
    %2848 = vmatprep.subr.mxu0 0.0
    %2849 = vmatpush1.msra.mxu0 0.0
    %2850 = vmatprep.subr.mxu0 0.0
    %2851 = vmatpush1.msra.mxu0 0.0
    %2852 = vmatprep.subr.mxu0 0.0
    %2853 = vmatpush1.msra.mxu0 0.0
    %2854 = vmatprep.subr.mxu0 0.0
    %2855 = vmatpush1.msra.mxu0 0.0
    %2856 = vmatprep.subr.mxu0 0.0
    %2857 = vmatpush1.msra.mxu0 0.0
    %2858 = vmatprep.subr.mxu0 0.0
    %2859 = vmatpush1.msra.mxu0 0.0
    %2860 = vmatprep.subr.mxu0 0.0
    %2861 = vmatpush1.msra.mxu0 0.0
    %2862 = vmatprep.subr.mxu0 0.0
    %2863 = vmatpush1.msra.mxu0 0.0
    %2864 = vmatprep.subr.mxu0 0.0
    %2865 = vmatpush1.msra.mxu0 0.0
    %2866 = vmatprep.subr.mxu0 0.0
    %2867 = vmatpush1.msra.mxu0 0.0
    %2868 = vmatprep.mubr.f32.mxu0 0.0
    %2869 = vmatmul.mubr.f32.gmra.mrb[0].mxu0 %v2780
    %v2870 = vpop.f32.mrb[0].mxu0
    %v2871 = vadd.f32 %v2802, %v2870
    %v2872 = vpop.f32.mrb[0].mxu0
    %2873 = vdwg.mxu0
    %2874 = vst [vmem:[#allocation11] sm:$0xff] %v2871
    // Predicated region
    $region58: #{tpu_custom_call.1} parent=1 // pred_check
      _
    $region59: #{tpu_custom_call.1} parent=1 // pred_check_branch
      %2876 = sbr.rel (0) target = $region61
    $region60: #{tpu_custom_call.1} parent=1 // pred_region
      %s2878 = ssub.s32 128, 128
      %2879 = vsyncadd [#allocation7], %s2878
      %s2881 = sshll.u32 [#allocation11], 4
      %s2882 = int_to_ptr.vmem [resolvable:$true] %s2881
      %2884 = dma.vmem_to_hbm [thread:$0]  %s2882, 128, %s11, [#allocation7]
    $region61: #{tpu_custom_call.1} parent=1 // pred_fallthru
      _
    // Predicated region
    $region62: #{tpu_custom_call.1} parent=1 // pred_check
      _
    $region63: #{tpu_custom_call.1} parent=1 // pred_check_branch
      %2886 = sbr.rel (0) target = $region65
    $region64: #{tpu_custom_call.1} parent=1 // pred_region
      %2887 = dma.done [#allocation7], 128
    $region65: #{tpu_custom_call.1} parent=1 // pred_fallthru
      _
    %2888 = vsyncpa [#allocation6], 1
    %2889 = vsyncpa [#allocation9], 1
    %2890 = vsyncpa [#allocation7], 1

</llo_original>
